<compile_context>
chip_gen: v7x
topology: tpu7x:2x2x1
jax: 0.10.0
libtpu: 0.0.40
codegen_flags: <defaults>
</compile_context>

<pallas_src>
import functools
import jax
import jax.numpy as jnp
from jax.experimental import pallas as pl
from jax.experimental.pallas import tpu as pltpu

# ---------------- small BERT config (shape-scaled bert-base-uncased) ----------------
VOCAB = 100
HIDDEN = 32
LAYERS = 2
HEADS = 2
HEAD_DIM = HIDDEN // HEADS
INTERMEDIATE = 64
MAX_POS = 16
TYPE_VOCAB = 2
NUM_LABELS = 2
LN_EPS = 1e-12

_VMEM = pl.BlockSpec(memory_space=pltpu.MemorySpace.VMEM)


def _ln(x, gamma, beta):
    """f32 LayerNorm over the last axis (VPU/XLU)."""
    mu = jnp.mean(x, axis=-1, keepdims=True)
    var = jnp.mean((x - mu) ** 2, axis=-1, keepdims=True)
    return (x - mu) * jax.lax.rsqrt(var + LN_EPS) * gamma + beta


def _gelu(x):
    # TODO(synk): HF BERT uses exact erf-GELU; tanh approximation for robust TPU lowering.
    # TODO(synk): on v6e/v7x this could run in bf16 (bf16 VPU/EUP); kept f32 so v5e stays exact.
    return 0.5 * x * (1.0 + jnp.tanh(0.7978845608028654 * (x + 0.044715 * x * x * x)))


# ---------------------------------- Pallas kernels ----------------------------------
def _layer_kernel(x_ref, bias_ref, inln_g_ref, inln_b_ref,
                  wqkv_ref, bqkv_ref, wo_ref, bo_ref,
                  ln1_g_ref, ln1_b_ref, w1_ref, b1_ref, w2_ref, b2_ref,
                  ln2_g_ref, ln2_b_ref, o_ref,
                  *, heads, head_dim, apply_input_ln):
    hidden = heads * head_dim

    x = x_ref[0].astype(jnp.float32)                       # (S, H), bf16 -> f32
    if apply_input_ln:                                     # embedding LN fused into layer 0
        x = _ln(x, inln_g_ref[...], inln_b_ref[...])
    x_bf = x.astype(jnp.bfloat16)

    # --- fused QKV projection (softmax scale already folded into the Q columns of wqkv) ---
    qkv = jnp.dot(x_bf, wqkv_ref[...],
                  preferred_element_type=jnp.float32) + bqkv_ref[...]   # (S, 3H) f32
    qkv_bf = qkv.astype(jnp.bfloat16)                      # single bf16 cast for all q/k/v

    bias = bias_ref[0]                                     # (1, S) additive mask bias

    # --- self-attention: all heads for this batch element; context built by lane-wise concat ---
    # TODO(synk): at real head counts replace the static unroll with one head-batched
    #             dot_general on a (heads, S, Dh)-shaped qkv.
    ctx_parts = []
    for h in range(heads):
        c0 = h * head_dim
        q = qkv_bf[:, c0:c0 + head_dim]                                  # (S, Dh)
        k = qkv_bf[:, hidden + c0:hidden + c0 + head_dim]                # (S, Dh)
        v = qkv_bf[:, 2 * hidden + c0:2 * hidden + c0 + head_dim]        # (S, Dh)
        s = jax.lax.dot_general(q, k, (((1,), (1,)), ((), ())),
                                preferred_element_type=jnp.float32)      # (S, S) f32
        s = s + bias
        s = s - jnp.max(s, axis=-1, keepdims=True)
        p = jnp.exp(s)
        p = p * pl.reciprocal(jnp.sum(p, axis=-1, keepdims=True), approx=True)
        ctx_parts.append(jnp.dot(p.astype(jnp.bfloat16), v,
                                 preferred_element_type=jnp.float32))    # (S, Dh) f32
    ctx = jnp.concatenate(ctx_parts, axis=-1)              # (S, H): one lane-dense value

    # --- attention output projection + residual + LN1 (f32) ---
    attn_out = jnp.dot(ctx.astype(jnp.bfloat16), wo_ref[...],
                       preferred_element_type=jnp.float32) + bo_ref[...]
    x1 = _ln(attn_out + x, ln1_g_ref[...], ln1_b_ref[...])

    # --- FFN (GELU) + residual + LN2 (f32) ---
    hmid = jnp.dot(x1.astype(jnp.bfloat16), w1_ref[...],
                   preferred_element_type=jnp.float32) + b1_ref[...]
    hmid = _gelu(hmid)
    ffn = jnp.dot(hmid.astype(jnp.bfloat16), w2_ref[...],
                  preferred_element_type=jnp.float32) + b2_ref[...]
    o_ref[0] = _ln(ffn + x1, ln2_g_ref[...], ln2_b_ref[...]).astype(o_ref.dtype)


def _head_kernel(cls_ref, pw_ref, pb_ref, cw_ref, cb_ref, onehot_ref,
                 logits_ref, loss_ref):
    # pooler (tanh) -> classifier -> cross-entropy, all fused (tiny logits never round-trip alone)
    pooled = jnp.tanh(jnp.dot(cls_ref[...], pw_ref[...],
                              preferred_element_type=jnp.float32) + pb_ref[...])
    logits = jnp.dot(pooled.astype(jnp.bfloat16), cw_ref[...],
                     preferred_element_type=jnp.float32) + cb_ref[...]      # (B, L) f32
    logits_ref[...] = logits.astype(logits_ref.dtype)

    m = jnp.max(logits, axis=-1, keepdims=True)
    lse = jnp.log(jnp.sum(jnp.exp(logits - m), axis=-1, keepdims=True)) + m  # (B, 1)
    picked = jnp.sum(logits * onehot_ref[...], axis=-1, keepdims=True)       # (B, 1)
    loss_ref[...] = jnp.sum(lse - picked, axis=0, keepdims=True) / logits.shape[0]


# ---------------------------------- Pallas wrappers ----------------------------------
def fused_layer(x, mask_bias, lp, in_ln_g, in_ln_b, *, apply_input_ln):
    B, S, H = x.shape
    kern = functools.partial(_layer_kernel, heads=HEADS, head_dim=HEAD_DIM,
                             apply_input_ln=apply_input_ln)

    def const(shape):
        nd = len(shape)
        # full-array block, constant along the batch grid axis -> weights DMA'd once
        return pl.BlockSpec(shape, lambda b: (0,) * nd)

    in_specs = [
        pl.BlockSpec((1, S, H), lambda b: (b, 0, 0)),         # x: streams per batch element
        pl.BlockSpec((1, 1, S), lambda b: (b, 0, 0)),         # additive mask bias per batch
        const((1, H)), const((1, H)),                         # (embedding) input-LN gamma/beta
        const((H, 3 * H)), const((1, 3 * H)),                 # fused QKV
        const((H, H)), const((1, H)),                         # attention out-proj
        const((1, H)), const((1, H)),                         # LN1
        const((H, INTERMEDIATE)), const((1, INTERMEDIATE)),   # FFN up
        const((INTERMEDIATE, H)), const((1, H)),              # FFN down
        const((1, H)), const((1, H)),                         # LN2
    ]
    return pl.pallas_call(
        kern,
        grid=(B,),
        out_shape=jax.ShapeDtypeStruct((B, S, H), jnp.bfloat16),
        in_specs=in_specs,
        out_specs=pl.BlockSpec((1, S, H), lambda b: (b, 0, 0)),
        compiler_params=pltpu.CompilerParams(
            dimension_semantics=("parallel",),     # v7x megacore: shard batch across TCs
            vmem_limit_bytes=32 << 20),
    )(x, mask_bias, in_ln_g, in_ln_b,
      lp["wqkv"], lp["bqkv"], lp["wo"], lp["bo"],
      lp["ln1_g"], lp["ln1_b"], lp["w1"], lp["b1"], lp["w2"], lp["b2"],
      lp["ln2_g"], lp["ln2_b"])


def head(cls_tok, pool_w, pool_b, cls_w, cls_b, onehot):
    B = cls_tok.shape[0]
    return pl.pallas_call(
        _head_kernel,
        out_shape=(jax.ShapeDtypeStruct((B, NUM_LABELS), jnp.float32),
                   jax.ShapeDtypeStruct((1, 1), jnp.float32)),
        in_specs=[_VMEM] * 6,
        out_specs=(_VMEM, _VMEM),
    )(cls_tok, pool_w, pool_b, cls_w, cls_b, onehot)


# ------------------------------------- model -----------------------------------------
def init_params(key):
    keys = iter(jax.random.split(key, 256))

    def nrm(shape):
        return jax.random.normal(next(keys), shape, jnp.float32) * 0.02

    def zeros(n):
        return jnp.zeros((1, n), jnp.float32)

    def ones(n):
        return jnp.ones((1, n), jnp.float32)

    scale = 1.0 / float(HEAD_DIM) ** 0.5
    # matmul weights stored bf16 (f32 accumulation in-kernel); biases / LN params in f32
    params = {
        "word_emb": nrm((VOCAB, HIDDEN)),
        "pos_emb": nrm((MAX_POS, HIDDEN)),
        "type_emb": nrm((TYPE_VOCAB, HIDDEN)),
        "emb_ln_g": ones(HIDDEN),
        "emb_ln_b": zeros(HIDDEN),
        "layers": [],
        "pool_w": nrm((HIDDEN, HIDDEN)).astype(jnp.bfloat16),
        "pool_b": zeros(HIDDEN),
        "cls_w": nrm((HIDDEN, NUM_LABELS)).astype(jnp.bfloat16),
        "cls_b": zeros(NUM_LABELS),
    }
    for _ in range(LAYERS):
        wqkv = nrm((HIDDEN, 3 * HIDDEN))
        # fold the 1/sqrt(head_dim) softmax scale into the Q columns (free at init;
        # removes the per-head (S,S) f32 scale multiply inside the kernel)
        wqkv = wqkv.at[:, :HIDDEN].multiply(scale)
        bqkv = jnp.zeros((1, 3 * HIDDEN), jnp.float32)   # Q bias is zero -> scale fold is a no-op
        params["layers"].append({
            "wqkv": wqkv.astype(jnp.bfloat16), "bqkv": bqkv,
            "wo": nrm((HIDDEN, HIDDEN)).astype(jnp.bfloat16), "bo": zeros(HIDDEN),
            "ln1_g": ones(HIDDEN), "ln1_b": zeros(HIDDEN),
            "w1": nrm((HIDDEN, INTERMEDIATE)).astype(jnp.bfloat16), "b1": zeros(INTERMEDIATE),
            "w2": nrm((INTERMEDIATE, HIDDEN)).astype(jnp.bfloat16), "b2": zeros(HIDDEN),
            "ln2_g": ones(HIDDEN), "ln2_b": zeros(HIDDEN),
        })
    return params


def bert_forward(params, text, pad_mask, label):
    B, S = text.shape

    # ----- embeddings (gather is XLA glue); embedding LayerNorm is fused into layer 0 -----
    tok = jnp.take(params["word_emb"], text, axis=0)                  # (B, S, H)
    pos = params["pos_emb"][:S][None, :, :]                           # (1, S, H)
    typ = params["type_emb"][0][None, None, :]                        # token_type_ids == 0
    x = (tok + pos + typ).astype(jnp.bfloat16)                        # bf16 activations in HBM
    # hidden_dropout_prob=0.1 / attention_probs_dropout_prob=0.1 -> identity in eval mode

    # ----- additive attention-mask bias: (B, 1, S), broadcast per-head inside the kernel -----
    mask_bias = ((1.0 - pad_mask.astype(jnp.float32)) * -1e9).reshape(B, 1, S)

    # ----- transformer layers: one fused, batch-gridded Pallas kernel per layer -----
    for i, lp in enumerate(params["layers"]):
        x = fused_layer(x, mask_bias, lp,
                        params["emb_ln_g"], params["emb_ln_b"],
                        apply_input_ln=(i == 0))

    # ----- pooler (first token) + classifier + cross-entropy, fused -----
    cls_tok = x[:, 0, :]                                              # (B, H) bf16
    onehot = jax.nn.one_hot(label, NUM_LABELS, dtype=jnp.float32)
    logits, loss = head(cls_tok, params["pool_w"], params["pool_b"],
                        params["cls_w"], params["cls_b"], onehot)
    return loss[0, 0], logits


if __name__ == "__main__":
    key = jax.random.PRNGKey(0)
    pkey, tkey, lkey = jax.random.split(key, 3)

    B, S = 2, 8
    params = init_params(pkey)
    text = jax.random.randint(tkey, (B, S), 0, VOCAB, dtype=jnp.int32)
    pad_mask = jnp.ones((B, S), dtype=jnp.int32)
    label = jax.random.randint(lkey, (B,), 0, NUM_LABELS, dtype=jnp.int32)

    fwd = jax.jit(bert_forward)
    loss, logits = fwd(params, text, pad_mask, label)
    jax.block_until_ready((loss, logits))
    assert logits.shape == (B, NUM_LABELS)
    assert loss.shape == ()
    print("KERNEL_OK")
</pallas_src>

<mosaic_0001>
module attributes {stable_mosaic.version = 11 : i64} {
  func.func @_layer_kernel(%arg0: i32, %arg1: memref<1x8x32xbf16, #tpu.memory_space<vmem>>, %arg2: memref<1x1x8xf32, #tpu.memory_space<vmem>>, %arg3: memref<1x32xf32, #tpu.memory_space<vmem>>, %arg4: memref<1x32xf32, #tpu.memory_space<vmem>>, %arg5: memref<32x96xbf16, #tpu.memory_space<vmem>>, %arg6: memref<1x96xf32, #tpu.memory_space<vmem>>, %arg7: memref<32x32xbf16, #tpu.memory_space<vmem>>, %arg8: memref<1x32xf32, #tpu.memory_space<vmem>>, %arg9: memref<1x32xf32, #tpu.memory_space<vmem>>, %arg10: memref<1x32xf32, #tpu.memory_space<vmem>>, %arg11: memref<32x64xbf16, #tpu.memory_space<vmem>>, %arg12: memref<1x64xf32, #tpu.memory_space<vmem>>, %arg13: memref<64x32xbf16, #tpu.memory_space<vmem>>, %arg14: memref<1x32xf32, #tpu.memory_space<vmem>>, %arg15: memref<1x32xf32, #tpu.memory_space<vmem>>, %arg16: memref<1x32xf32, #tpu.memory_space<vmem>>, %arg17: memref<1x8x32xbf16, #tpu.memory_space<vmem>>) attributes {dimension_semantics = [#tpu.dimension_semantics<parallel>], iteration_bounds = array<i64: 2>, scalar_prefetch = 0 : i64, scratch_operands = 0 : i64, tpu.core_type = #tpu.core_type<tc>, window_params = [{transform_indices = @transform_0, window_bounds = array<i64: 1, 8, 32>}, {transform_indices = @transform_1, window_bounds = array<i64: 1, 1, 8>}, {pipeline_mode = #tpu.pipeline_mode<synchronous>, transform_indices = @transform_2, window_bounds = array<i64: 1, 32>}, {pipeline_mode = #tpu.pipeline_mode<synchronous>, transform_indices = @transform_3, window_bounds = array<i64: 1, 32>}, {pipeline_mode = #tpu.pipeline_mode<synchronous>, transform_indices = @transform_4, window_bounds = array<i64: 32, 96>}, {pipeline_mode = #tpu.pipeline_mode<synchronous>, transform_indices = @transform_5, window_bounds = array<i64: 1, 96>}, {pipeline_mode = #tpu.pipeline_mode<synchronous>, transform_indices = @transform_6, window_bounds = array<i64: 32, 32>}, {pipeline_mode = #tpu.pipeline_mode<synchronous>, transform_indices = @transform_7, window_bounds = array<i64: 1, 32>}, {pipeline_mode = #tpu.pipeline_mode<synchronous>, transform_indices = @transform_8, window_bounds = array<i64: 1, 32>}, {pipeline_mode = #tpu.pipeline_mode<synchronous>, transform_indices = @transform_9, window_bounds = array<i64: 1, 32>}, {pipeline_mode = #tpu.pipeline_mode<synchronous>, transform_indices = @transform_10, window_bounds = array<i64: 32, 64>}, {pipeline_mode = #tpu.pipeline_mode<synchronous>, transform_indices = @transform_11, window_bounds = array<i64: 1, 64>}, {pipeline_mode = #tpu.pipeline_mode<synchronous>, transform_indices = @transform_12, window_bounds = array<i64: 64, 32>}, {pipeline_mode = #tpu.pipeline_mode<synchronous>, transform_indices = @transform_13, window_bounds = array<i64: 1, 32>}, {pipeline_mode = #tpu.pipeline_mode<synchronous>, transform_indices = @transform_14, window_bounds = array<i64: 1, 32>}, {pipeline_mode = #tpu.pipeline_mode<synchronous>, transform_indices = @transform_15, window_bounds = array<i64: 1, 32>}, {transform_indices = @transform_16, window_bounds = array<i64: 1, 8, 32>}]} {
    %c0 = arith.constant 0 : index
    %c0_0 = arith.constant 0 : index
    %c0_1 = arith.constant 0 : index
    %0 = vector.load %arg1[%c0, %c0_0, %c0_1] : memref<1x8x32xbf16, #tpu.memory_space<vmem>>, vector<1x8x32xbf16>
    %1 = vector.shape_cast %0 : vector<1x8x32xbf16> to vector<8x32xbf16>
    %2 = arith.extf %1 : vector<8x32xbf16> to vector<8x32xf32>
    %3 = arith.truncf %2 : vector<8x32xf32> to vector<8x32xbf16>
    %c0_2 = arith.constant 0 : index
    %c0_3 = arith.constant 0 : index
    %4 = vector.load %arg5[%c0_2, %c0_3] : memref<32x96xbf16, #tpu.memory_space<vmem>>, vector<32x96xbf16>
    %cst = arith.constant dense<0.000000e+00> : vector<8x96xf32>
    %5 = tpu.matmul %3, %4, %cst {dimension_numbers = #tpu.dot_dimension_numbers<[1], [0], [0], [1], [0, 0, 1, 1], [], []>} : vector<8x32xbf16>, vector<32x96xbf16>, vector<8x96xf32> -> vector<8x96xf32>
    %c0_4 = arith.constant 0 : index
    %c0_5 = arith.constant 0 : index
    %6 = vector.load %arg6[%c0_4, %c0_5] : memref<1x96xf32, #tpu.memory_space<vmem>>, vector<1x96xf32>
    %7 = vector.broadcast %6 : vector<1x96xf32> to vector<8x96xf32>
    %8 = arith.addf %5, %7 : vector<8x96xf32>
    %9 = arith.truncf %8 : vector<8x96xf32> to vector<8x96xbf16>
    %c0_6 = arith.constant 0 : index
    %c0_7 = arith.constant 0 : index
    %c0_8 = arith.constant 0 : index
    %10 = vector.load %arg2[%c0_6, %c0_7, %c0_8] : memref<1x1x8xf32, #tpu.memory_space<vmem>>, vector<1x1x8xf32>
    %11 = vector.shape_cast %10 : vector<1x1x8xf32> to vector<1x8xf32>
    %12 = vector.extract_strided_slice %9 {offsets = [0, 0], sizes = [8, 16], strides = [1, 1]} : vector<8x96xbf16> to vector<8x16xbf16>
    %13 = vector.extract_strided_slice %9 {offsets = [0, 32], sizes = [8, 16], strides = [1, 1]} : vector<8x96xbf16> to vector<8x16xbf16>
    %14 = vector.extract_strided_slice %9 {offsets = [0, 64], sizes = [8, 16], strides = [1, 1]} : vector<8x96xbf16> to vector<8x16xbf16>
    %cst_9 = arith.constant dense<0.000000e+00> : vector<8x8xf32>
    %15 = tpu.matmul %12, %13, %cst_9 {dimension_numbers = #tpu.dot_dimension_numbers<[1], [1], [0], [0], [0, 0, 1, 0], [], []>} : vector<8x16xbf16>, vector<8x16xbf16>, vector<8x8xf32> -> vector<8x8xf32>
    %16 = vector.broadcast %11 : vector<1x8xf32> to vector<8x8xf32>
    %17 = arith.addf %15, %16 : vector<8x8xf32>
    %cst_10 = arith.constant dense<0xFF800000> : vector<8xf32>
    %18 = vector.multi_reduction <maximumf>, %17, %cst_10 [1] : vector<8x8xf32> to vector<8xf32>
    %19 = vector.shape_cast %18 : vector<8xf32> to vector<8x1xf32>
    %20 = vector.broadcast %19 : vector<8x1xf32> to vector<8x8xf32>
    %21 = arith.subf %17, %20 : vector<8x8xf32>
    %22 = math.exp %21 : vector<8x8xf32>
    %cst_11 = arith.constant dense<0.000000e+00> : vector<8xf32>
    %23 = vector.multi_reduction <add>, %22, %cst_11 [1] : vector<8x8xf32> to vector<8xf32>
    %24 = vector.shape_cast %23 : vector<8xf32> to vector<8x1xf32>
    %25 = tpu.reciprocal %24 {approx = true} : vector<8x1xf32> -> vector<8x1xf32>
    %26 = vector.broadcast %25 : vector<8x1xf32> to vector<8x8xf32>
    %27 = arith.mulf %22, %26 : vector<8x8xf32>
    %28 = arith.truncf %27 : vector<8x8xf32> to vector<8x8xbf16>
    %cst_12 = arith.constant dense<0.000000e+00> : vector<8x16xf32>
    %29 = tpu.matmul %28, %14, %cst_12 {dimension_numbers = #tpu.dot_dimension_numbers<[1], [0], [0], [1], [0, 0, 1, 1], [], []>} : vector<8x8xbf16>, vector<8x16xbf16>, vector<8x16xf32> -> vector<8x16xf32>
    %30 = vector.extract_strided_slice %9 {offsets = [0, 16], sizes = [8, 16], strides = [1, 1]} : vector<8x96xbf16> to vector<8x16xbf16>
    %31 = vector.extract_strided_slice %9 {offsets = [0, 48], sizes = [8, 16], strides = [1, 1]} : vector<8x96xbf16> to vector<8x16xbf16>
    %32 = vector.extract_strided_slice %9 {offsets = [0, 80], sizes = [8, 16], strides = [1, 1]} : vector<8x96xbf16> to vector<8x16xbf16>
    %cst_13 = arith.constant dense<0.000000e+00> : vector<8x8xf32>
    %33 = tpu.matmul %30, %31, %cst_13 {dimension_numbers = #tpu.dot_dimension_numbers<[1], [1], [0], [0], [0, 0, 1, 0], [], []>} : vector<8x16xbf16>, vector<8x16xbf16>, vector<8x8xf32> -> vector<8x8xf32>
    %34 = vector.broadcast %11 : vector<1x8xf32> to vector<8x8xf32>
    %35 = arith.addf %33, %34 : vector<8x8xf32>
    %cst_14 = arith.constant dense<0xFF800000> : vector<8xf32>
    %36 = vector.multi_reduction <maximumf>, %35, %cst_14 [1] : vector<8x8xf32> to vector<8xf32>
    %37 = vector.shape_cast %36 : vector<8xf32> to vector<8x1xf32>
    %38 = vector.broadcast %37 : vector<8x1xf32> to vector<8x8xf32>
    %39 = arith.subf %35, %38 : vector<8x8xf32>
    %40 = math.exp %39 : vector<8x8xf32>
    %cst_15 = arith.constant dense<0.000000e+00> : vector<8xf32>
    %41 = vector.multi_reduction <add>, %40, %cst_15 [1] : vector<8x8xf32> to vector<8xf32>
    %42 = vector.shape_cast %41 : vector<8xf32> to vector<8x1xf32>
    %43 = tpu.reciprocal %42 {approx = true} : vector<8x1xf32> -> vector<8x1xf32>
    %44 = vector.broadcast %43 : vector<8x1xf32> to vector<8x8xf32>
    %45 = arith.mulf %40, %44 : vector<8x8xf32>
    %46 = arith.truncf %45 : vector<8x8xf32> to vector<8x8xbf16>
    %cst_16 = arith.constant dense<0.000000e+00> : vector<8x16xf32>
    %47 = tpu.matmul %46, %32, %cst_16 {dimension_numbers = #tpu.dot_dimension_numbers<[1], [0], [0], [1], [0, 0, 1, 1], [], []>} : vector<8x8xbf16>, vector<8x16xbf16>, vector<8x16xf32> -> vector<8x16xf32>
    %48 = tpu.concatenate %29, %47 in 1 : vector<8x16xf32>, vector<8x16xf32> -> vector<8x32xf32>
    %49 = arith.truncf %48 : vector<8x32xf32> to vector<8x32xbf16>
    %c0_17 = arith.constant 0 : index
    %c0_18 = arith.constant 0 : index
    %50 = vector.load %arg7[%c0_17, %c0_18] : memref<32x32xbf16, #tpu.memory_space<vmem>>, vector<32x32xbf16>
    %cst_19 = arith.constant dense<0.000000e+00> : vector<8x32xf32>
    %51 = tpu.matmul %49, %50, %cst_19 {dimension_numbers = #tpu.dot_dimension_numbers<[1], [0], [0], [1], [0, 0, 1, 1], [], []>} : vector<8x32xbf16>, vector<32x32xbf16>, vector<8x32xf32> -> vector<8x32xf32>
    %c0_20 = arith.constant 0 : index
    %c0_21 = arith.constant 0 : index
    %52 = vector.load %arg8[%c0_20, %c0_21] : memref<1x32xf32, #tpu.memory_space<vmem>>, vector<1x32xf32>
    %53 = vector.broadcast %52 : vector<1x32xf32> to vector<8x32xf32>
    %54 = arith.addf %51, %53 : vector<8x32xf32>
    %55 = arith.addf %54, %2 : vector<8x32xf32>
    %c0_22 = arith.constant 0 : index
    %c0_23 = arith.constant 0 : index
    %56 = vector.load %arg9[%c0_22, %c0_23] : memref<1x32xf32, #tpu.memory_space<vmem>>, vector<1x32xf32>
    %c0_24 = arith.constant 0 : index
    %c0_25 = arith.constant 0 : index
    %57 = vector.load %arg10[%c0_24, %c0_25] : memref<1x32xf32, #tpu.memory_space<vmem>>, vector<1x32xf32>
    %cst_26 = arith.constant dense<0.000000e+00> : vector<8xf32>
    %58 = vector.multi_reduction <add>, %55, %cst_26 [1] : vector<8x32xf32> to vector<8xf32>
    %59 = vector.shape_cast %58 : vector<8xf32> to vector<8x1xf32>
    %cst_27 = arith.constant 3.200000e+01 : f32
    %60 = vector.broadcast %cst_27 : f32 to vector<8x1xf32>
    %61 = arith.divf %59, %60 : vector<8x1xf32>
    %62 = vector.broadcast %61 : vector<8x1xf32> to vector<8x32xf32>
    %63 = arith.subf %55, %62 : vector<8x32xf32>
    %64 = arith.mulf %63, %63 : vector<8x32xf32>
    %cst_28 = arith.constant dense<0.000000e+00> : vector<8xf32>
    %65 = vector.multi_reduction <add>, %64, %cst_28 [1] : vector<8x32xf32> to vector<8xf32>
    %66 = vector.shape_cast %65 : vector<8xf32> to vector<8x1xf32>
    %cst_29 = arith.constant 3.200000e+01 : f32
    %67 = vector.broadcast %cst_29 : f32 to vector<8x1xf32>
    %68 = arith.divf %66, %67 : vector<8x1xf32>
    %69 = vector.broadcast %61 : vector<8x1xf32> to vector<8x32xf32>
    %70 = arith.subf %55, %69 : vector<8x32xf32>
    %cst_30 = arith.constant 9.99999996E-13 : f32
    %71 = vector.broadcast %cst_30 : f32 to vector<8x1xf32>
    %72 = arith.addf %68, %71 : vector<8x1xf32>
    %73 = math.rsqrt %72 : vector<8x1xf32>
    %74 = vector.broadcast %73 : vector<8x1xf32> to vector<8x32xf32>
    %75 = arith.mulf %70, %74 : vector<8x32xf32>
    %76 = vector.broadcast %56 : vector<1x32xf32> to vector<8x32xf32>
    %77 = arith.mulf %75, %76 : vector<8x32xf32>
    %78 = vector.broadcast %57 : vector<1x32xf32> to vector<8x32xf32>
    %79 = arith.addf %77, %78 : vector<8x32xf32>
    %80 = arith.truncf %79 : vector<8x32xf32> to vector<8x32xbf16>
    %c0_31 = arith.constant 0 : index
    %c0_32 = arith.constant 0 : index
    %81 = vector.load %arg11[%c0_31, %c0_32] : memref<32x64xbf16, #tpu.memory_space<vmem>>, vector<32x64xbf16>
    %cst_33 = arith.constant dense<0.000000e+00> : vector<8x64xf32>
    %82 = tpu.matmul %80, %81, %cst_33 {dimension_numbers = #tpu.dot_dimension_numbers<[1], [0], [0], [1], [0, 0, 1, 1], [], []>} : vector<8x32xbf16>, vector<32x64xbf16>, vector<8x64xf32> -> vector<8x64xf32>
    %c0_34 = arith.constant 0 : index
    %c0_35 = arith.constant 0 : index
    %83 = vector.load %arg12[%c0_34, %c0_35] : memref<1x64xf32, #tpu.memory_space<vmem>>, vector<1x64xf32>
    %84 = vector.broadcast %83 : vector<1x64xf32> to vector<8x64xf32>
    %85 = arith.addf %82, %84 : vector<8x64xf32>
    %cst_36 = arith.constant 5.000000e-01 : f32
    %86 = vector.broadcast %cst_36 : f32 to vector<8x64xf32>
    %87 = arith.mulf %86, %85 : vector<8x64xf32>
    %cst_37 = arith.constant 4.471500e-02 : f32
    %88 = vector.broadcast %cst_37 : f32 to vector<8x64xf32>
    %89 = arith.mulf %88, %85 : vector<8x64xf32>
    %90 = arith.mulf %89, %85 : vector<8x64xf32>
    %91 = arith.mulf %90, %85 : vector<8x64xf32>
    %92 = arith.addf %85, %91 : vector<8x64xf32>
    %cst_38 = arith.constant 0.797884583 : f32
    %93 = vector.broadcast %cst_38 : f32 to vector<8x64xf32>
    %94 = arith.mulf %93, %92 : vector<8x64xf32>
    %95 = math.tanh %94 : vector<8x64xf32>
    %cst_39 = arith.constant 1.000000e+00 : f32
    %96 = vector.broadcast %cst_39 : f32 to vector<8x64xf32>
    %97 = arith.addf %96, %95 : vector<8x64xf32>
    %98 = arith.mulf %87, %97 : vector<8x64xf32>
    %99 = arith.truncf %98 : vector<8x64xf32> to vector<8x64xbf16>
    %c0_40 = arith.constant 0 : index
    %c0_41 = arith.constant 0 : index
    %100 = vector.load %arg13[%c0_40, %c0_41] : memref<64x32xbf16, #tpu.memory_space<vmem>>, vector<64x32xbf16>
    %cst_42 = arith.constant dense<0.000000e+00> : vector<8x32xf32>
    %101 = tpu.matmul %99, %100, %cst_42 {dimension_numbers = #tpu.dot_dimension_numbers<[1], [0], [0], [1], [0, 0, 1, 1], [], []>} : vector<8x64xbf16>, vector<64x32xbf16>, vector<8x32xf32> -> vector<8x32xf32>
    %c0_43 = arith.constant 0 : index
    %c0_44 = arith.constant 0 : index
    %102 = vector.load %arg14[%c0_43, %c0_44] : memref<1x32xf32, #tpu.memory_space<vmem>>, vector<1x32xf32>
    %103 = vector.broadcast %102 : vector<1x32xf32> to vector<8x32xf32>
    %104 = arith.addf %101, %103 : vector<8x32xf32>
    %105 = arith.addf %104, %79 : vector<8x32xf32>
    %c0_45 = arith.constant 0 : index
    %c0_46 = arith.constant 0 : index
    %106 = vector.load %arg15[%c0_45, %c0_46] : memref<1x32xf32, #tpu.memory_space<vmem>>, vector<1x32xf32>
    %c0_47 = arith.constant 0 : index
    %c0_48 = arith.constant 0 : index
    %107 = vector.load %arg16[%c0_47, %c0_48] : memref<1x32xf32, #tpu.memory_space<vmem>>, vector<1x32xf32>
    %cst_49 = arith.constant dense<0.000000e+00> : vector<8xf32>
    %108 = vector.multi_reduction <add>, %105, %cst_49 [1] : vector<8x32xf32> to vector<8xf32>
    %109 = vector.shape_cast %108 : vector<8xf32> to vector<8x1xf32>
    %cst_50 = arith.constant 3.200000e+01 : f32
    %110 = vector.broadcast %cst_50 : f32 to vector<8x1xf32>
    %111 = arith.divf %109, %110 : vector<8x1xf32>
    %112 = vector.broadcast %111 : vector<8x1xf32> to vector<8x32xf32>
    %113 = arith.subf %105, %112 : vector<8x32xf32>
    %114 = arith.mulf %113, %113 : vector<8x32xf32>
    %cst_51 = arith.constant dense<0.000000e+00> : vector<8xf32>
    %115 = vector.multi_reduction <add>, %114, %cst_51 [1] : vector<8x32xf32> to vector<8xf32>
    %116 = vector.shape_cast %115 : vector<8xf32> to vector<8x1xf32>
    %cst_52 = arith.constant 3.200000e+01 : f32
    %117 = vector.broadcast %cst_52 : f32 to vector<8x1xf32>
    %118 = arith.divf %116, %117 : vector<8x1xf32>
    %119 = vector.broadcast %111 : vector<8x1xf32> to vector<8x32xf32>
    %120 = arith.subf %105, %119 : vector<8x32xf32>
    %cst_53 = arith.constant 9.99999996E-13 : f32
    %121 = vector.broadcast %cst_53 : f32 to vector<8x1xf32>
    %122 = arith.addf %118, %121 : vector<8x1xf32>
    %123 = math.rsqrt %122 : vector<8x1xf32>
    %124 = vector.broadcast %123 : vector<8x1xf32> to vector<8x32xf32>
    %125 = arith.mulf %120, %124 : vector<8x32xf32>
    %126 = vector.broadcast %106 : vector<1x32xf32> to vector<8x32xf32>
    %127 = arith.mulf %125, %126 : vector<8x32xf32>
    %128 = vector.broadcast %107 : vector<1x32xf32> to vector<8x32xf32>
    %129 = arith.addf %127, %128 : vector<8x32xf32>
    %130 = arith.truncf %129 : vector<8x32xf32> to vector<8x32xbf16>
    %c0_54 = arith.constant 0 : index
    %c0_55 = arith.constant 0 : index
    %c0_56 = arith.constant 0 : index
    %131 = vector.load %arg17[%c0_54, %c0_55, %c0_56] : memref<1x8x32xbf16, #tpu.memory_space<vmem>>, vector<1x8x32xbf16>
    %132 = vector.shape_cast %131 : vector<1x8x32xbf16> to vector<8x32xbf16>
    %133 = vector.shape_cast %130 : vector<8x32xbf16> to vector<1x8x32xbf16>
    tpu.vector_store %arg17[%c0_54, %c0_55, %c0_56], %133 {strides = array<i32>} : memref<1x8x32xbf16, #tpu.memory_space<vmem>>, vector<1x8x32xbf16>,
    return
  }
  func.func @transform_0(%arg0: i32) -> (i32, i32, i32) {
    %c0_i32 = arith.constant 0 : i32
    %c0_i32_0 = arith.constant 0 : i32
    %c0_i32_1 = arith.constant 0 : i32
    return %arg0, %c0_i32, %c0_i32_0 : i32, i32, i32
  }
  func.func @transform_1(%arg0: i32) -> (i32, i32, i32) {
    %c0_i32 = arith.constant 0 : i32
    %c0_i32_0 = arith.constant 0 : i32
    %c0_i32_1 = arith.constant 0 : i32
    return %arg0, %c0_i32, %c0_i32_0 : i32, i32, i32
  }
  func.func @transform_2(%arg0: i32) -> (i32, i32) {
    %c0_i32 = arith.constant 0 : i32
    %c0_i32_0 = arith.constant 0 : i32
    %c0_i32_1 = arith.constant 0 : i32
    return %c0_i32, %c0_i32_0 : i32, i32
  }
  func.func @transform_3(%arg0: i32) -> (i32, i32) {
    %c0_i32 = arith.constant 0 : i32
    %c0_i32_0 = arith.constant 0 : i32
    %c0_i32_1 = arith.constant 0 : i32
    return %c0_i32, %c0_i32_0 : i32, i32
  }
  func.func @transform_4(%arg0: i32) -> (i32, i32) {
    %c0_i32 = arith.constant 0 : i32
    %c0_i32_0 = arith.constant 0 : i32
    %c0_i32_1 = arith.constant 0 : i32
    return %c0_i32, %c0_i32_0 : i32, i32
  }
  func.func @transform_5(%arg0: i32) -> (i32, i32) {
    %c0_i32 = arith.constant 0 : i32
    %c0_i32_0 = arith.constant 0 : i32
    %c0_i32_1 = arith.constant 0 : i32
    return %c0_i32, %c0_i32_0 : i32, i32
  }
  func.func @transform_6(%arg0: i32) -> (i32, i32) {
    %c0_i32 = arith.constant 0 : i32
    %c0_i32_0 = arith.constant 0 : i32
    %c0_i32_1 = arith.constant 0 : i32
    return %c0_i32, %c0_i32_0 : i32, i32
  }
  func.func @transform_7(%arg0: i32) -> (i32, i32) {
    %c0_i32 = arith.constant 0 : i32
    %c0_i32_0 = arith.constant 0 : i32
    %c0_i32_1 = arith.constant 0 : i32
    return %c0_i32, %c0_i32_0 : i32, i32
  }
  func.func @transform_8(%arg0: i32) -> (i32, i32) {
    %c0_i32 = arith.constant 0 : i32
    %c0_i32_0 = arith.constant 0 : i32
    %c0_i32_1 = arith.constant 0 : i32
    return %c0_i32, %c0_i32_0 : i32, i32
  }
  func.func @transform_9(%arg0: i32) -> (i32, i32) {
    %c0_i32 = arith.constant 0 : i32
    %c0_i32_0 = arith.constant 0 : i32
    %c0_i32_1 = arith.constant 0 : i32
    return %c0_i32, %c0_i32_0 : i32, i32
  }
  func.func @transform_10(%arg0: i32) -> (i32, i32) {
    %c0_i32 = arith.constant 0 : i32
    %c0_i32_0 = arith.constant 0 : i32
    %c0_i32_1 = arith.constant 0 : i32
    return %c0_i32, %c0_i32_0 : i32, i32
  }
  func.func @transform_11(%arg0: i32) -> (i32, i32) {
    %c0_i32 = arith.constant 0 : i32
    %c0_i32_0 = arith.constant 0 : i32
    %c0_i32_1 = arith.constant 0 : i32
    return %c0_i32, %c0_i32_0 : i32, i32
  }
  func.func @transform_12(%arg0: i32) -> (i32, i32) {
    %c0_i32 = arith.constant 0 : i32
    %c0_i32_0 = arith.constant 0 : i32
    %c0_i32_1 = arith.constant 0 : i32
    return %c0_i32, %c0_i32_0 : i32, i32
  }
  func.func @transform_13(%arg0: i32) -> (i32, i32) {
    %c0_i32 = arith.constant 0 : i32
    %c0_i32_0 = arith.constant 0 : i32
    %c0_i32_1 = arith.constant 0 : i32
    return %c0_i32, %c0_i32_0 : i32, i32
  }
  func.func @transform_14(%arg0: i32) -> (i32, i32) {
    %c0_i32 = arith.constant 0 : i32
    %c0_i32_0 = arith.constant 0 : i32
    %c0_i32_1 = arith.constant 0 : i32
    return %c0_i32, %c0_i32_0 : i32, i32
  }
  func.func @transform_15(%arg0: i32) -> (i32, i32) {
    %c0_i32 = arith.constant 0 : i32
    %c0_i32_0 = arith.constant 0 : i32
    %c0_i32_1 = arith.constant 0 : i32
    return %c0_i32, %c0_i32_0 : i32, i32
  }
  func.func @transform_16(%arg0: i32) -> (i32, i32, i32) {
    %c0_i32 = arith.constant 0 : i32
    %c0_i32_0 = arith.constant 0 : i32
    %c0_i32_1 = arith.constant 0 : i32
    return %arg0, %c0_i32, %c0_i32_0 : i32, i32, i32
  }
}

module attributes {stable_mosaic.version = 11 : i64} {
  func.func @_layer_kernel(%arg0: i32, %arg1: memref<1x8x32xbf16, #tpu.memory_space<vmem>>, %arg2: memref<1x1x8xf32, #tpu.memory_space<vmem>>, %arg3: memref<1x32xf32, #tpu.memory_space<vmem>>, %arg4: memref<1x32xf32, #tpu.memory_space<vmem>>, %arg5: memref<32x96xbf16, #tpu.memory_space<vmem>>, %arg6: memref<1x96xf32, #tpu.memory_space<vmem>>, %arg7: memref<32x32xbf16, #tpu.memory_space<vmem>>, %arg8: memref<1x32xf32, #tpu.memory_space<vmem>>, %arg9: memref<1x32xf32, #tpu.memory_space<vmem>>, %arg10: memref<1x32xf32, #tpu.memory_space<vmem>>, %arg11: memref<32x64xbf16, #tpu.memory_space<vmem>>, %arg12: memref<1x64xf32, #tpu.memory_space<vmem>>, %arg13: memref<64x32xbf16, #tpu.memory_space<vmem>>, %arg14: memref<1x32xf32, #tpu.memory_space<vmem>>, %arg15: memref<1x32xf32, #tpu.memory_space<vmem>>, %arg16: memref<1x32xf32, #tpu.memory_space<vmem>>, %arg17: memref<1x8x32xbf16, #tpu.memory_space<vmem>>) attributes {dimension_semantics = [#tpu.dimension_semantics<parallel>], iteration_bounds = array<i64: 2>, scalar_prefetch = 0 : i64, scratch_operands = 0 : i64, tpu.core_type = #tpu.core_type<tc>, window_params = [{transform_indices = @transform_0, window_bounds = array<i64: 1, 8, 32>}, {transform_indices = @transform_1, window_bounds = array<i64: 1, 1, 8>}, {pipeline_mode = #tpu.pipeline_mode<synchronous>, transform_indices = @transform_2, window_bounds = array<i64: 1, 32>}, {pipeline_mode = #tpu.pipeline_mode<synchronous>, transform_indices = @transform_3, window_bounds = array<i64: 1, 32>}, {pipeline_mode = #tpu.pipeline_mode<synchronous>, transform_indices = @transform_4, window_bounds = array<i64: 32, 96>}, {pipeline_mode = #tpu.pipeline_mode<synchronous>, transform_indices = @transform_5, window_bounds = array<i64: 1, 96>}, {pipeline_mode = #tpu.pipeline_mode<synchronous>, transform_indices = @transform_6, window_bounds = array<i64: 32, 32>}, {pipeline_mode = #tpu.pipeline_mode<synchronous>, transform_indices = @transform_7, window_bounds = array<i64: 1, 32>}, {pipeline_mode = #tpu.pipeline_mode<synchronous>, transform_indices = @transform_8, window_bounds = array<i64: 1, 32>}, {pipeline_mode = #tpu.pipeline_mode<synchronous>, transform_indices = @transform_9, window_bounds = array<i64: 1, 32>}, {pipeline_mode = #tpu.pipeline_mode<synchronous>, transform_indices = @transform_10, window_bounds = array<i64: 32, 64>}, {pipeline_mode = #tpu.pipeline_mode<synchronous>, transform_indices = @transform_11, window_bounds = array<i64: 1, 64>}, {pipeline_mode = #tpu.pipeline_mode<synchronous>, transform_indices = @transform_12, window_bounds = array<i64: 64, 32>}, {pipeline_mode = #tpu.pipeline_mode<synchronous>, transform_indices = @transform_13, window_bounds = array<i64: 1, 32>}, {pipeline_mode = #tpu.pipeline_mode<synchronous>, transform_indices = @transform_14, window_bounds = array<i64: 1, 32>}, {pipeline_mode = #tpu.pipeline_mode<synchronous>, transform_indices = @transform_15, window_bounds = array<i64: 1, 32>}, {transform_indices = @transform_16, window_bounds = array<i64: 1, 8, 32>}]} {
    %c0 = arith.constant 0 : index
    %c0_0 = arith.constant 0 : index
    %c0_1 = arith.constant 0 : index
    %0 = vector.load %arg1[%c0, %c0_0, %c0_1] : memref<1x8x32xbf16, #tpu.memory_space<vmem>>, vector<1x8x32xbf16>
    %1 = vector.shape_cast %0 : vector<1x8x32xbf16> to vector<8x32xbf16>
    %2 = arith.extf %1 : vector<8x32xbf16> to vector<8x32xf32>
    %c0_2 = arith.constant 0 : index
    %c0_3 = arith.constant 0 : index
    %3 = vector.load %arg3[%c0_2, %c0_3] : memref<1x32xf32, #tpu.memory_space<vmem>>, vector<1x32xf32>
    %c0_4 = arith.constant 0 : index
    %c0_5 = arith.constant 0 : index
    %4 = vector.load %arg4[%c0_4, %c0_5] : memref<1x32xf32, #tpu.memory_space<vmem>>, vector<1x32xf32>
    %cst = arith.constant dense<0.000000e+00> : vector<8xf32>
    %5 = vector.multi_reduction <add>, %2, %cst [1] : vector<8x32xf32> to vector<8xf32>
    %6 = vector.shape_cast %5 : vector<8xf32> to vector<8x1xf32>
    %cst_6 = arith.constant 3.200000e+01 : f32
    %7 = vector.broadcast %cst_6 : f32 to vector<8x1xf32>
    %8 = arith.divf %6, %7 : vector<8x1xf32>
    %9 = vector.broadcast %8 : vector<8x1xf32> to vector<8x32xf32>
    %10 = arith.subf %2, %9 : vector<8x32xf32>
    %11 = arith.mulf %10, %10 : vector<8x32xf32>
    %cst_7 = arith.constant dense<0.000000e+00> : vector<8xf32>
    %12 = vector.multi_reduction <add>, %11, %cst_7 [1] : vector<8x32xf32> to vector<8xf32>
    %13 = vector.shape_cast %12 : vector<8xf32> to vector<8x1xf32>
    %cst_8 = arith.constant 3.200000e+01 : f32
    %14 = vector.broadcast %cst_8 : f32 to vector<8x1xf32>
    %15 = arith.divf %13, %14 : vector<8x1xf32>
    %16 = vector.broadcast %8 : vector<8x1xf32> to vector<8x32xf32>
    %17 = arith.subf %2, %16 : vector<8x32xf32>
    %cst_9 = arith.constant 9.99999996E-13 : f32
    %18 = vector.broadcast %cst_9 : f32 to vector<8x1xf32>
    %19 = arith.addf %15, %18 : vector<8x1xf32>
    %20 = math.rsqrt %19 : vector<8x1xf32>
    %21 = vector.broadcast %20 : vector<8x1xf32> to vector<8x32xf32>
    %22 = arith.mulf %17, %21 : vector<8x32xf32>
    %23 = vector.broadcast %3 : vector<1x32xf32> to vector<8x32xf32>
    %24 = arith.mulf %22, %23 : vector<8x32xf32>
    %25 = vector.broadcast %4 : vector<1x32xf32> to vector<8x32xf32>
    %26 = arith.addf %24, %25 : vector<8x32xf32>
    %27 = arith.truncf %26 : vector<8x32xf32> to vector<8x32xbf16>
    %c0_10 = arith.constant 0 : index
    %c0_11 = arith.constant 0 : index
    %28 = vector.load %arg5[%c0_10, %c0_11] : memref<32x96xbf16, #tpu.memory_space<vmem>>, vector<32x96xbf16>
    %cst_12 = arith.constant dense<0.000000e+00> : vector<8x96xf32>
    %29 = tpu.matmul %27, %28, %cst_12 {dimension_numbers = #tpu.dot_dimension_numbers<[1], [0], [0], [1], [0, 0, 1, 1], [], []>} : vector<8x32xbf16>, vector<32x96xbf16>, vector<8x96xf32> -> vector<8x96xf32>
    %c0_13 = arith.constant 0 : index
    %c0_14 = arith.constant 0 : index
    %30 = vector.load %arg6[%c0_13, %c0_14] : memref<1x96xf32, #tpu.memory_space<vmem>>, vector<1x96xf32>
    %31 = vector.broadcast %30 : vector<1x96xf32> to vector<8x96xf32>
    %32 = arith.addf %29, %31 : vector<8x96xf32>
    %33 = arith.truncf %32 : vector<8x96xf32> to vector<8x96xbf16>
    %c0_15 = arith.constant 0 : index
    %c0_16 = arith.constant 0 : index
    %c0_17 = arith.constant 0 : index
    %34 = vector.load %arg2[%c0_15, %c0_16, %c0_17] : memref<1x1x8xf32, #tpu.memory_space<vmem>>, vector<1x1x8xf32>
    %35 = vector.shape_cast %34 : vector<1x1x8xf32> to vector<1x8xf32>
    %36 = vector.extract_strided_slice %33 {offsets = [0, 0], sizes = [8, 16], strides = [1, 1]} : vector<8x96xbf16> to vector<8x16xbf16>
    %37 = vector.extract_strided_slice %33 {offsets = [0, 32], sizes = [8, 16], strides = [1, 1]} : vector<8x96xbf16> to vector<8x16xbf16>
    %38 = vector.extract_strided_slice %33 {offsets = [0, 64], sizes = [8, 16], strides = [1, 1]} : vector<8x96xbf16> to vector<8x16xbf16>
    %cst_18 = arith.constant dense<0.000000e+00> : vector<8x8xf32>
    %39 = tpu.matmul %36, %37, %cst_18 {dimension_numbers = #tpu.dot_dimension_numbers<[1], [1], [0], [0], [0, 0, 1, 0], [], []>} : vector<8x16xbf16>, vector<8x16xbf16>, vector<8x8xf32> -> vector<8x8xf32>
    %40 = vector.broadcast %35 : vector<1x8xf32> to vector<8x8xf32>
    %41 = arith.addf %39, %40 : vector<8x8xf32>
    %cst_19 = arith.constant dense<0xFF800000> : vector<8xf32>
    %42 = vector.multi_reduction <maximumf>, %41, %cst_19 [1] : vector<8x8xf32> to vector<8xf32>
    %43 = vector.shape_cast %42 : vector<8xf32> to vector<8x1xf32>
    %44 = vector.broadcast %43 : vector<8x1xf32> to vector<8x8xf32>
    %45 = arith.subf %41, %44 : vector<8x8xf32>
    %46 = math.exp %45 : vector<8x8xf32>
    %cst_20 = arith.constant dense<0.000000e+00> : vector<8xf32>
    %47 = vector.multi_reduction <add>, %46, %cst_20 [1] : vector<8x8xf32> to vector<8xf32>
    %48 = vector.shape_cast %47 : vector<8xf32> to vector<8x1xf32>
    %49 = tpu.reciprocal %48 {approx = true} : vector<8x1xf32> -> vector<8x1xf32>
    %50 = vector.broadcast %49 : vector<8x1xf32> to vector<8x8xf32>
    %51 = arith.mulf %46, %50 : vector<8x8xf32>
    %52 = arith.truncf %51 : vector<8x8xf32> to vector<8x8xbf16>
    %cst_21 = arith.constant dense<0.000000e+00> : vector<8x16xf32>
    %53 = tpu.matmul %52, %38, %cst_21 {dimension_numbers = #tpu.dot_dimension_numbers<[1], [0], [0], [1], [0, 0, 1, 1], [], []>} : vector<8x8xbf16>, vector<8x16xbf16>, vector<8x16xf32> -> vector<8x16xf32>
    %54 = vector.extract_strided_slice %33 {offsets = [0, 16], sizes = [8, 16], strides = [1, 1]} : vector<8x96xbf16> to vector<8x16xbf16>
    %55 = vector.extract_strided_slice %33 {offsets = [0, 48], sizes = [8, 16], strides = [1, 1]} : vector<8x96xbf16> to vector<8x16xbf16>
    %56 = vector.extract_strided_slice %33 {offsets = [0, 80], sizes = [8, 16], strides = [1, 1]} : vector<8x96xbf16> to vector<8x16xbf16>
    %cst_22 = arith.constant dense<0.000000e+00> : vector<8x8xf32>
    %57 = tpu.matmul %54, %55, %cst_22 {dimension_numbers = #tpu.dot_dimension_numbers<[1], [1], [0], [0], [0, 0, 1, 0], [], []>} : vector<8x16xbf16>, vector<8x16xbf16>, vector<8x8xf32> -> vector<8x8xf32>
    %58 = vector.broadcast %35 : vector<1x8xf32> to vector<8x8xf32>
    %59 = arith.addf %57, %58 : vector<8x8xf32>
    %cst_23 = arith.constant dense<0xFF800000> : vector<8xf32>
    %60 = vector.multi_reduction <maximumf>, %59, %cst_23 [1] : vector<8x8xf32> to vector<8xf32>
    %61 = vector.shape_cast %60 : vector<8xf32> to vector<8x1xf32>
    %62 = vector.broadcast %61 : vector<8x1xf32> to vector<8x8xf32>
    %63 = arith.subf %59, %62 : vector<8x8xf32>
    %64 = math.exp %63 : vector<8x8xf32>
    %cst_24 = arith.constant dense<0.000000e+00> : vector<8xf32>
    %65 = vector.multi_reduction <add>, %64, %cst_24 [1] : vector<8x8xf32> to vector<8xf32>
    %66 = vector.shape_cast %65 : vector<8xf32> to vector<8x1xf32>
    %67 = tpu.reciprocal %66 {approx = true} : vector<8x1xf32> -> vector<8x1xf32>
    %68 = vector.broadcast %67 : vector<8x1xf32> to vector<8x8xf32>
    %69 = arith.mulf %64, %68 : vector<8x8xf32>
    %70 = arith.truncf %69 : vector<8x8xf32> to vector<8x8xbf16>
    %cst_25 = arith.constant dense<0.000000e+00> : vector<8x16xf32>
    %71 = tpu.matmul %70, %56, %cst_25 {dimension_numbers = #tpu.dot_dimension_numbers<[1], [0], [0], [1], [0, 0, 1, 1], [], []>} : vector<8x8xbf16>, vector<8x16xbf16>, vector<8x16xf32> -> vector<8x16xf32>
    %72 = tpu.concatenate %53, %71 in 1 : vector<8x16xf32>, vector<8x16xf32> -> vector<8x32xf32>
    %73 = arith.truncf %72 : vector<8x32xf32> to vector<8x32xbf16>
    %c0_26 = arith.constant 0 : index
    %c0_27 = arith.constant 0 : index
    %74 = vector.load %arg7[%c0_26, %c0_27] : memref<32x32xbf16, #tpu.memory_space<vmem>>, vector<32x32xbf16>
    %cst_28 = arith.constant dense<0.000000e+00> : vector<8x32xf32>
    %75 = tpu.matmul %73, %74, %cst_28 {dimension_numbers = #tpu.dot_dimension_numbers<[1], [0], [0], [1], [0, 0, 1, 1], [], []>} : vector<8x32xbf16>, vector<32x32xbf16>, vector<8x32xf32> -> vector<8x32xf32>
    %c0_29 = arith.constant 0 : index
    %c0_30 = arith.constant 0 : index
    %76 = vector.load %arg8[%c0_29, %c0_30] : memref<1x32xf32, #tpu.memory_space<vmem>>, vector<1x32xf32>
    %77 = vector.broadcast %76 : vector<1x32xf32> to vector<8x32xf32>
    %78 = arith.addf %75, %77 : vector<8x32xf32>
    %79 = arith.addf %78, %26 : vector<8x32xf32>
    %c0_31 = arith.constant 0 : index
    %c0_32 = arith.constant 0 : index
    %80 = vector.load %arg9[%c0_31, %c0_32] : memref<1x32xf32, #tpu.memory_space<vmem>>, vector<1x32xf32>
    %c0_33 = arith.constant 0 : index
    %c0_34 = arith.constant 0 : index
    %81 = vector.load %arg10[%c0_33, %c0_34] : memref<1x32xf32, #tpu.memory_space<vmem>>, vector<1x32xf32>
    %cst_35 = arith.constant dense<0.000000e+00> : vector<8xf32>
    %82 = vector.multi_reduction <add>, %79, %cst_35 [1] : vector<8x32xf32> to vector<8xf32>
    %83 = vector.shape_cast %82 : vector<8xf32> to vector<8x1xf32>
    %cst_36 = arith.constant 3.200000e+01 : f32
    %84 = vector.broadcast %cst_36 : f32 to vector<8x1xf32>
    %85 = arith.divf %83, %84 : vector<8x1xf32>
    %86 = vector.broadcast %85 : vector<8x1xf32> to vector<8x32xf32>
    %87 = arith.subf %79, %86 : vector<8x32xf32>
    %88 = arith.mulf %87, %87 : vector<8x32xf32>
    %cst_37 = arith.constant dense<0.000000e+00> : vector<8xf32>
    %89 = vector.multi_reduction <add>, %88, %cst_37 [1] : vector<8x32xf32> to vector<8xf32>
    %90 = vector.shape_cast %89 : vector<8xf32> to vector<8x1xf32>
    %cst_38 = arith.constant 3.200000e+01 : f32
    %91 = vector.broadcast %cst_38 : f32 to vector<8x1xf32>
    %92 = arith.divf %90, %91 : vector<8x1xf32>
    %93 = vector.broadcast %85 : vector<8x1xf32> to vector<8x32xf32>
    %94 = arith.subf %79, %93 : vector<8x32xf32>
    %cst_39 = arith.constant 9.99999996E-13 : f32
    %95 = vector.broadcast %cst_39 : f32 to vector<8x1xf32>
    %96 = arith.addf %92, %95 : vector<8x1xf32>
    %97 = math.rsqrt %96 : vector<8x1xf32>
    %98 = vector.broadcast %97 : vector<8x1xf32> to vector<8x32xf32>
    %99 = arith.mulf %94, %98 : vector<8x32xf32>
    %100 = vector.broadcast %80 : vector<1x32xf32> to vector<8x32xf32>
    %101 = arith.mulf %99, %100 : vector<8x32xf32>
    %102 = vector.broadcast %81 : vector<1x32xf32> to vector<8x32xf32>
    %103 = arith.addf %101, %102 : vector<8x32xf32>
    %104 = arith.truncf %103 : vector<8x32xf32> to vector<8x32xbf16>
    %c0_40 = arith.constant 0 : index
    %c0_41 = arith.constant 0 : index
    %105 = vector.load %arg11[%c0_40, %c0_41] : memref<32x64xbf16, #tpu.memory_space<vmem>>, vector<32x64xbf16>
    %cst_42 = arith.constant dense<0.000000e+00> : vector<8x64xf32>
    %106 = tpu.matmul %104, %105, %cst_42 {dimension_numbers = #tpu.dot_dimension_numbers<[1], [0], [0], [1], [0, 0, 1, 1], [], []>} : vector<8x32xbf16>, vector<32x64xbf16>, vector<8x64xf32> -> vector<8x64xf32>
    %c0_43 = arith.constant 0 : index
    %c0_44 = arith.constant 0 : index
    %107 = vector.load %arg12[%c0_43, %c0_44] : memref<1x64xf32, #tpu.memory_space<vmem>>, vector<1x64xf32>
    %108 = vector.broadcast %107 : vector<1x64xf32> to vector<8x64xf32>
    %109 = arith.addf %106, %108 : vector<8x64xf32>
    %cst_45 = arith.constant 5.000000e-01 : f32
    %110 = vector.broadcast %cst_45 : f32 to vector<8x64xf32>
    %111 = arith.mulf %110, %109 : vector<8x64xf32>
    %cst_46 = arith.constant 4.471500e-02 : f32
    %112 = vector.broadcast %cst_46 : f32 to vector<8x64xf32>
    %113 = arith.mulf %112, %109 : vector<8x64xf32>
    %114 = arith.mulf %113, %109 : vector<8x64xf32>
    %115 = arith.mulf %114, %109 : vector<8x64xf32>
    %116 = arith.addf %109, %115 : vector<8x64xf32>
    %cst_47 = arith.constant 0.797884583 : f32
    %117 = vector.broadcast %cst_47 : f32 to vector<8x64xf32>
    %118 = arith.mulf %117, %116 : vector<8x64xf32>
    %119 = math.tanh %118 : vector<8x64xf32>
    %cst_48 = arith.constant 1.000000e+00 : f32
    %120 = vector.broadcast %cst_48 : f32 to vector<8x64xf32>
    %121 = arith.addf %120, %119 : vector<8x64xf32>
    %122 = arith.mulf %111, %121 : vector<8x64xf32>
    %123 = arith.truncf %122 : vector<8x64xf32> to vector<8x64xbf16>
    %c0_49 = arith.constant 0 : index
    %c0_50 = arith.constant 0 : index
    %124 = vector.load %arg13[%c0_49, %c0_50] : memref<64x32xbf16, #tpu.memory_space<vmem>>, vector<64x32xbf16>
    %cst_51 = arith.constant dense<0.000000e+00> : vector<8x32xf32>
    %125 = tpu.matmul %123, %124, %cst_51 {dimension_numbers = #tpu.dot_dimension_numbers<[1], [0], [0], [1], [0, 0, 1, 1], [], []>} : vector<8x64xbf16>, vector<64x32xbf16>, vector<8x32xf32> -> vector<8x32xf32>
    %c0_52 = arith.constant 0 : index
    %c0_53 = arith.constant 0 : index
    %126 = vector.load %arg14[%c0_52, %c0_53] : memref<1x32xf32, #tpu.memory_space<vmem>>, vector<1x32xf32>
    %127 = vector.broadcast %126 : vector<1x32xf32> to vector<8x32xf32>
    %128 = arith.addf %125, %127 : vector<8x32xf32>
    %129 = arith.addf %128, %103 : vector<8x32xf32>
    %c0_54 = arith.constant 0 : index
    %c0_55 = arith.constant 0 : index
    %130 = vector.load %arg15[%c0_54, %c0_55] : memref<1x32xf32, #tpu.memory_space<vmem>>, vector<1x32xf32>
    %c0_56 = arith.constant 0 : index
    %c0_57 = arith.constant 0 : index
    %131 = vector.load %arg16[%c0_56, %c0_57] : memref<1x32xf32, #tpu.memory_space<vmem>>, vector<1x32xf32>
    %cst_58 = arith.constant dense<0.000000e+00> : vector<8xf32>
    %132 = vector.multi_reduction <add>, %129, %cst_58 [1] : vector<8x32xf32> to vector<8xf32>
    %133 = vector.shape_cast %132 : vector<8xf32> to vector<8x1xf32>
    %cst_59 = arith.constant 3.200000e+01 : f32
    %134 = vector.broadcast %cst_59 : f32 to vector<8x1xf32>
    %135 = arith.divf %133, %134 : vector<8x1xf32>
    %136 = vector.broadcast %135 : vector<8x1xf32> to vector<8x32xf32>
    %137 = arith.subf %129, %136 : vector<8x32xf32>
    %138 = arith.mulf %137, %137 : vector<8x32xf32>
    %cst_60 = arith.constant dense<0.000000e+00> : vector<8xf32>
    %139 = vector.multi_reduction <add>, %138, %cst_60 [1] : vector<8x32xf32> to vector<8xf32>
    %140 = vector.shape_cast %139 : vector<8xf32> to vector<8x1xf32>
    %cst_61 = arith.constant 3.200000e+01 : f32
    %141 = vector.broadcast %cst_61 : f32 to vector<8x1xf32>
    %142 = arith.divf %140, %141 : vector<8x1xf32>
    %143 = vector.broadcast %135 : vector<8x1xf32> to vector<8x32xf32>
    %144 = arith.subf %129, %143 : vector<8x32xf32>
    %cst_62 = arith.constant 9.99999996E-13 : f32
    %145 = vector.broadcast %cst_62 : f32 to vector<8x1xf32>
    %146 = arith.addf %142, %145 : vector<8x1xf32>
    %147 = math.rsqrt %146 : vector<8x1xf32>
    %148 = vector.broadcast %147 : vector<8x1xf32> to vector<8x32xf32>
    %149 = arith.mulf %144, %148 : vector<8x32xf32>
    %150 = vector.broadcast %130 : vector<1x32xf32> to vector<8x32xf32>
    %151 = arith.mulf %149, %150 : vector<8x32xf32>
    %152 = vector.broadcast %131 : vector<1x32xf32> to vector<8x32xf32>
    %153 = arith.addf %151, %152 : vector<8x32xf32>
    %154 = arith.truncf %153 : vector<8x32xf32> to vector<8x32xbf16>
    %c0_63 = arith.constant 0 : index
    %c0_64 = arith.constant 0 : index
    %c0_65 = arith.constant 0 : index
    %155 = vector.load %arg17[%c0_63, %c0_64, %c0_65] : memref<1x8x32xbf16, #tpu.memory_space<vmem>>, vector<1x8x32xbf16>
    %156 = vector.shape_cast %155 : vector<1x8x32xbf16> to vector<8x32xbf16>
    %157 = vector.shape_cast %154 : vector<8x32xbf16> to vector<1x8x32xbf16>
    tpu.vector_store %arg17[%c0_63, %c0_64, %c0_65], %157 {strides = array<i32>} : memref<1x8x32xbf16, #tpu.memory_space<vmem>>, vector<1x8x32xbf16>,
    return
  }
  func.func @transform_0(%arg0: i32) -> (i32, i32, i32) {
    %c0_i32 = arith.constant 0 : i32
    %c0_i32_0 = arith.constant 0 : i32
    %c0_i32_1 = arith.constant 0 : i32
    return %arg0, %c0_i32, %c0_i32_0 : i32, i32, i32
  }
  func.func @transform_1(%arg0: i32) -> (i32, i32, i32) {
    %c0_i32 = arith.constant 0 : i32
    %c0_i32_0 = arith.constant 0 : i32
    %c0_i32_1 = arith.constant 0 : i32
    return %arg0, %c0_i32, %c0_i32_0 : i32, i32, i32
  }
  func.func @transform_2(%arg0: i32) -> (i32, i32) {
    %c0_i32 = arith.constant 0 : i32
    %c0_i32_0 = arith.constant 0 : i32
    %c0_i32_1 = arith.constant 0 : i32
    return %c0_i32, %c0_i32_0 : i32, i32
  }
  func.func @transform_3(%arg0: i32) -> (i32, i32) {
    %c0_i32 = arith.constant 0 : i32
    %c0_i32_0 = arith.constant 0 : i32
    %c0_i32_1 = arith.constant 0 : i32
    return %c0_i32, %c0_i32_0 : i32, i32
  }
  func.func @transform_4(%arg0: i32) -> (i32, i32) {
    %c0_i32 = arith.constant 0 : i32
    %c0_i32_0 = arith.constant 0 : i32
    %c0_i32_1 = arith.constant 0 : i32
    return %c0_i32, %c0_i32_0 : i32, i32
  }
  func.func @transform_5(%arg0: i32) -> (i32, i32) {
    %c0_i32 = arith.constant 0 : i32
    %c0_i32_0 = arith.constant 0 : i32
    %c0_i32_1 = arith.constant 0 : i32
    return %c0_i32, %c0_i32_0 : i32, i32
  }
  func.func @transform_6(%arg0: i32) -> (i32, i32) {
    %c0_i32 = arith.constant 0 : i32
    %c0_i32_0 = arith.constant 0 : i32
    %c0_i32_1 = arith.constant 0 : i32
    return %c0_i32, %c0_i32_0 : i32, i32
  }
  func.func @transform_7(%arg0: i32) -> (i32, i32) {
    %c0_i32 = arith.constant 0 : i32
    %c0_i32_0 = arith.constant 0 : i32
    %c0_i32_1 = arith.constant 0 : i32
    return %c0_i32, %c0_i32_0 : i32, i32
  }
  func.func @transform_8(%arg0: i32) -> (i32, i32) {
    %c0_i32 = arith.constant 0 : i32
    %c0_i32_0 = arith.constant 0 : i32
    %c0_i32_1 = arith.constant 0 : i32
    return %c0_i32, %c0_i32_0 : i32, i32
  }
  func.func @transform_9(%arg0: i32) -> (i32, i32) {
    %c0_i32 = arith.constant 0 : i32
    %c0_i32_0 = arith.constant 0 : i32
    %c0_i32_1 = arith.constant 0 : i32
    return %c0_i32, %c0_i32_0 : i32, i32
  }
  func.func @transform_10(%arg0: i32) -> (i32, i32) {
    %c0_i32 = arith.constant 0 : i32
    %c0_i32_0 = arith.constant 0 : i32
    %c0_i32_1 = arith.constant 0 : i32
    return %c0_i32, %c0_i32_0 : i32, i32
  }
  func.func @transform_11(%arg0: i32) -> (i32, i32) {
    %c0_i32 = arith.constant 0 : i32
    %c0_i32_0 = arith.constant 0 : i32
    %c0_i32_1 = arith.constant 0 : i32
    return %c0_i32, %c0_i32_0 : i32, i32
  }
  func.func @transform_12(%arg0: i32) -> (i32, i32) {
    %c0_i32 = arith.constant 0 : i32
    %c0_i32_0 = arith.constant 0 : i32
    %c0_i32_1 = arith.constant 0 : i32
    return %c0_i32, %c0_i32_0 : i32, i32
  }
  func.func @transform_13(%arg0: i32) -> (i32, i32) {
    %c0_i32 = arith.constant 0 : i32
    %c0_i32_0 = arith.constant 0 : i32
    %c0_i32_1 = arith.constant 0 : i32
    return %c0_i32, %c0_i32_0 : i32, i32
  }
  func.func @transform_14(%arg0: i32) -> (i32, i32) {
    %c0_i32 = arith.constant 0 : i32
    %c0_i32_0 = arith.constant 0 : i32
    %c0_i32_1 = arith.constant 0 : i32
    return %c0_i32, %c0_i32_0 : i32, i32
  }
  func.func @transform_15(%arg0: i32) -> (i32, i32) {
    %c0_i32 = arith.constant 0 : i32
    %c0_i32_0 = arith.constant 0 : i32
    %c0_i32_1 = arith.constant 0 : i32
    return %c0_i32, %c0_i32_0 : i32, i32
  }
  func.func @transform_16(%arg0: i32) -> (i32, i32, i32) {
    %c0_i32 = arith.constant 0 : i32
    %c0_i32_0 = arith.constant 0 : i32
    %c0_i32_1 = arith.constant 0 : i32
    return %arg0, %c0_i32, %c0_i32_0 : i32, i32, i32
  }
}

module attributes {stable_mosaic.version = 11 : i64} {
  func.func @_head_kernel(%arg0: memref<2x32xbf16, #tpu.memory_space<vmem>>, %arg1: memref<32x32xbf16, #tpu.memory_space<vmem>>, %arg2: memref<1x32xf32, #tpu.memory_space<vmem>>, %arg3: memref<32x2xbf16, #tpu.memory_space<vmem>>, %arg4: memref<1x2xf32, #tpu.memory_space<vmem>>, %arg5: memref<2x2xf32, #tpu.memory_space<vmem>>, %arg6: memref<2x2xf32, #tpu.memory_space<vmem>>, %arg7: memref<1x1xf32, #tpu.memory_space<vmem>>) attributes {dimension_semantics = [], scalar_prefetch = 0 : i64, scratch_operands = 0 : i64, tpu.core_type = #tpu.core_type<tc>} {
    %c0 = arith.constant 0 : index
    %c0_0 = arith.constant 0 : index
    %0 = vector.load %arg0[%c0, %c0_0] : memref<2x32xbf16, #tpu.memory_space<vmem>>, vector<2x32xbf16>
    %c0_1 = arith.constant 0 : index
    %c0_2 = arith.constant 0 : index
    %1 = vector.load %arg1[%c0_1, %c0_2] : memref<32x32xbf16, #tpu.memory_space<vmem>>, vector<32x32xbf16>
    %cst = arith.constant dense<0.000000e+00> : vector<2x32xf32>
    %2 = tpu.matmul %0, %1, %cst {dimension_numbers = #tpu.dot_dimension_numbers<[1], [0], [0], [1], [0, 0, 1, 1], [], []>} : vector<2x32xbf16>, vector<32x32xbf16>, vector<2x32xf32> -> vector<2x32xf32>
    %c0_3 = arith.constant 0 : index
    %c0_4 = arith.constant 0 : index
    %3 = vector.load %arg2[%c0_3, %c0_4] : memref<1x32xf32, #tpu.memory_space<vmem>>, vector<1x32xf32>
    %4 = vector.broadcast %3 : vector<1x32xf32> to vector<2x32xf32>
    %5 = arith.addf %2, %4 : vector<2x32xf32>
    %6 = math.tanh %5 : vector<2x32xf32>
    %7 = arith.truncf %6 : vector<2x32xf32> to vector<2x32xbf16>
    %c0_5 = arith.constant 0 : index
    %c0_6 = arith.constant 0 : index
    %8 = vector.load %arg3[%c0_5, %c0_6] : memref<32x2xbf16, #tpu.memory_space<vmem>>, vector<32x2xbf16>
    %cst_7 = arith.constant dense<0.000000e+00> : vector<2x2xf32>
    %9 = tpu.matmul %7, %8, %cst_7 {dimension_numbers = #tpu.dot_dimension_numbers<[1], [0], [0], [1], [0, 0, 1, 1], [], []>} : vector<2x32xbf16>, vector<32x2xbf16>, vector<2x2xf32> -> vector<2x2xf32>
    %c0_8 = arith.constant 0 : index
    %c0_9 = arith.constant 0 : index
    %10 = vector.load %arg4[%c0_8, %c0_9] : memref<1x2xf32, #tpu.memory_space<vmem>>, vector<1x2xf32>
    %11 = vector.broadcast %10 : vector<1x2xf32> to vector<2x2xf32>
    %12 = arith.addf %9, %11 : vector<2x2xf32>
    %c0_10 = arith.constant 0 : index
    %c0_11 = arith.constant 0 : index
    %13 = vector.load %arg6[%c0_10, %c0_11] : memref<2x2xf32, #tpu.memory_space<vmem>>, vector<2x2xf32>
    tpu.vector_store %arg6[%c0_10, %c0_11], %12 {strides = array<i32>} : memref<2x2xf32, #tpu.memory_space<vmem>>, vector<2x2xf32>,
    %cst_12 = arith.constant dense<0xFF800000> : vector<2xf32>
    %14 = vector.multi_reduction <maximumf>, %12, %cst_12 [1] : vector<2x2xf32> to vector<2xf32>
    %15 = vector.shape_cast %14 : vector<2xf32> to vector<2x1xf32>
    %16 = vector.broadcast %15 : vector<2x1xf32> to vector<2x2xf32>
    %17 = arith.subf %12, %16 : vector<2x2xf32>
    %18 = math.exp %17 : vector<2x2xf32>
    %cst_13 = arith.constant dense<0.000000e+00> : vector<2xf32>
    %19 = vector.multi_reduction <add>, %18, %cst_13 [1] : vector<2x2xf32> to vector<2xf32>
    %20 = vector.shape_cast %19 : vector<2xf32> to vector<2x1xf32>
    %21 = math.log %20 : vector<2x1xf32>
    %22 = arith.addf %21, %15 : vector<2x1xf32>
    %c0_14 = arith.constant 0 : index
    %c0_15 = arith.constant 0 : index
    %23 = vector.load %arg5[%c0_14, %c0_15] : memref<2x2xf32, #tpu.memory_space<vmem>>, vector<2x2xf32>
    %24 = arith.mulf %12, %23 : vector<2x2xf32>
    %cst_16 = arith.constant dense<0.000000e+00> : vector<2xf32>
    %25 = vector.multi_reduction <add>, %24, %cst_16 [1] : vector<2x2xf32> to vector<2xf32>
    %26 = vector.shape_cast %25 : vector<2xf32> to vector<2x1xf32>
    %27 = arith.subf %22, %26 : vector<2x1xf32>
    %cst_17 = arith.constant dense<0.000000e+00> : vector<1xf32>
    %28 = vector.multi_reduction <add>, %27, %cst_17 [0] : vector<2x1xf32> to vector<1xf32>
    %29 = vector.shape_cast %28 : vector<1xf32> to vector<1x1xf32>
    %cst_18 = arith.constant 2.000000e+00 : f32
    %30 = vector.broadcast %cst_18 : f32 to vector<1x1xf32>
    %31 = arith.divf %29, %30 : vector<1x1xf32>
    %c0_19 = arith.constant 0 : index
    %c0_20 = arith.constant 0 : index
    %32 = vector.load %arg7[%c0_19, %c0_20] : memref<1x1xf32, #tpu.memory_space<vmem>>, vector<1x1xf32>
    tpu.vector_store %arg7[%c0_19, %c0_20], %31 {strides = array<i32>} : memref<1x1xf32, #tpu.memory_space<vmem>>, vector<1x1xf32>,
    return
  }
}

</mosaic_0001>

<llo_original>
// kernel: bert_forward.5
$region0: #{bert_forward.5}
  #allocation0 [shape = 'u32[]', space=smem, size = 0x4, offset = 0x4, fixed_abs, tag = 'smem constant byte address 0x4 - core index']
  #allocation1 [shape = 'u32[144,128]{1,0:T(1,128)}', space=vmem, size = 0x12000, scoped, tag = 'internal scratch']
  %s0 = inlined_call_operand.vmem [shape: bf16[2,32], index: 0, kind: input, shape index: {}]
  %s1 = inlined_call_operand.vmem [shape: bf16[32,32], index: 1, kind: input, shape index: {}]
  %s2 = inlined_call_operand.vmem [shape: f32[1,32], index: 2, kind: input, shape index: {}]
  %s3 = inlined_call_operand.vmem [shape: bf16[32,2], index: 3, kind: input, shape index: {}]
  %s4 = inlined_call_operand.vmem [shape: f32[1,2], index: 4, kind: input, shape index: {}]
  %s5 = inlined_call_operand.vmem [shape: f32[2,2], index: 5, kind: input, shape index: {}]
  %s6 = inlined_call_operand.hbm [shape: f32[2,2], index: 6, kind: output, shape index: {0}]
  %s7 = inlined_call_operand.hbm [shape: f32[1,1], index: 7, kind: output, shape index: {1}]
  %8 = xla_tuple %s6, %s7
  %s9 = sld [smem:[#allocation0]]
  $region42: #{bert_forward.5} parent=0
    _
  %s11 = ssub.s32 1, %s9
  %s12 = scalar_select 0, %s11, %s9
  $region1: #{bert_forward.5} parent=0
    #allocation2 [shape = 'u8[1024]{0}', space=vmem, size = 0x400, scoped, tag = 'output window, operand 0, single buffered']
    #allocation3 [shape = 's32[1]{0}', space=sflag, size = 0x4, scoped, tag = 'scoped memory for bert_forward.5']
    #allocation4 [shape = 'u8[512]{0}', space=vmem, size = 0x400, scoped, tag = 'output window, operand 1, single buffered']
    #allocation5 [shape = 's32[1]{0}', space=sflag, size = 0x4, scoped, tag = 'scoped memory for bert_forward.5']
    %13 = vsyncpa [#allocation3], 0
    %14 = vsyncpa [#allocation5], 0
    // Predicated region
    $region2: #{bert_forward.5} parent=1 // pred_check
      _
    $region3: #{bert_forward.5} parent=1 // pred_check_branch
      %16 = sbr.rel (0) target = $region5
    $region4: #{bert_forward.5} parent=1 // pred_region
      _
    $region5: #{bert_forward.5} parent=1 // pred_fallthru
      _
    // Predicated region
    $region6: #{bert_forward.5} parent=1 // pred_check
      _
    $region7: #{bert_forward.5} parent=1 // pred_check_branch
      %18 = sbr.rel (0) target = $region9
    $region8: #{bert_forward.5} parent=1 // pred_region
      _
    $region9: #{bert_forward.5} parent=1 // pred_fallthru
      _
    // Predicated region
    $region10: #{bert_forward.5} parent=1 // pred_check
      _
    $region11: #{bert_forward.5} parent=1 // pred_check_branch
      %20 = sbr.rel (0) target = $region13
    $region12: #{bert_forward.5} parent=1 // pred_region
      _
    $region13: #{bert_forward.5} parent=1 // pred_fallthru
      _
    // Predicated region
    $region14: #{bert_forward.5} parent=1 // pred_check
      _
    $region15: #{bert_forward.5} parent=1 // pred_check_branch
      %22 = sbr.rel (0) target = $region17
    $region16: #{bert_forward.5} parent=1 // pred_region
      _
    $region17: #{bert_forward.5} parent=1 // pred_fallthru
      _
    // Predicated region
    $region18: #{bert_forward.5} parent=1 // pred_check
      _
    $region19: #{bert_forward.5} parent=1 // pred_check_branch
      %24 = sbr.rel (0) target = $region21
    $region20: #{bert_forward.5} parent=1 // pred_region
      _
    $region21: #{bert_forward.5} parent=1 // pred_fallthru
      _
    // Predicated region
    $region22: #{bert_forward.5} parent=1 // pred_check
      _
    $region23: #{bert_forward.5} parent=1 // pred_check_branch
      %26 = sbr.rel (0) target = $region25
    $region24: #{bert_forward.5} parent=1 // pred_region
      _
    $region25: #{bert_forward.5} parent=1 // pred_fallthru
      _
    %v28 = vld [vmem:[%s0] sm:$0x1]
    %v29 = vld [vmem:[%s1] sm:$0xf]
    %v30 = vld [vmem:[%s1 + $0x4] sm:$0xf]
    %v31 = vld [vmem:[%s1 + $0x8] sm:$0xf]
    %v32 = vld [vmem:[%s1 + $0xc] sm:$0xf]
    %v33 = vld [vmem:[%s2] sm:$0x1]
    %v35 = vlaneseq
    %v36 = vshrl.u32 %v35, 7
    %v37 = vsub.s32 0, %v36
    %v38 = vrot.slane %v33, %v37
    %v44 = vunpack.c.l.b16 %v29
    %v45 = vunpack.c.l.b16 %v30
    %v46 = vunpack.c.l.b16 %v31
    %v47 = vunpack.c.l.b16 %v32
    %v48 = vpack.c.b16 %v45, %v44
    %v49 = vpack.c.b16 %v47, %v46
    %vm52 = vcmask 261120
    %v54 = vsel %vm52, %v28, 0
    %56 = vmatprep.subr.bf16.mxu0 0
    %57 = vmatpush1.bf16.msra.mxu0 %v48
    %58 = vmatprep.subr.bf16.mxu0 0
    %59 = vmatpush1.bf16.msra.mxu0 %v49
    %60 = vmatprep.subr.bf16.mxu0 0
    %61 = vmatpush1.bf16.msra.mxu0 0
    %62 = vmatprep.subr.bf16.mxu0 0
    %63 = vmatpush1.bf16.msra.mxu0 0
    %64 = vmatprep.subr.bf16.mxu0 0
    %65 = vmatpush1.bf16.msra.mxu0 0
    %66 = vmatprep.subr.bf16.mxu0 0
    %67 = vmatpush1.bf16.msra.mxu0 0
    %68 = vmatprep.subr.bf16.mxu0 0
    %69 = vmatpush1.bf16.msra.mxu0 0
    %70 = vmatprep.subr.bf16.mxu0 0
    %71 = vmatpush1.bf16.msra.mxu0 0
    %72 = vmatprep.subr.bf16.mxu0 0
    %73 = vmatpush1.bf16.msra.mxu0 0
    %74 = vmatprep.subr.bf16.mxu0 0
    %75 = vmatpush1.bf16.msra.mxu0 0
    %76 = vmatprep.subr.bf16.mxu0 0
    %77 = vmatpush1.bf16.msra.mxu0 0
    %78 = vmatprep.subr.bf16.mxu0 0
    %79 = vmatpush1.bf16.msra.mxu0 0
    %80 = vmatprep.subr.bf16.mxu0 0
    %81 = vmatpush1.bf16.msra.mxu0 0
    %82 = vmatprep.subr.bf16.mxu0 0
    %83 = vmatpush1.bf16.msra.mxu0 0
    %84 = vmatprep.subr.bf16.mxu0 0
    %85 = vmatpush1.bf16.msra.mxu0 0
    %86 = vmatprep.subr.bf16.mxu0 0
    %87 = vmatpush1.bf16.msra.mxu0 0
    %88 = vmatprep.mubr.bf16.mxu0 0
    %89 = vmatmul.mubr.bf16.gmra.mrb[0].mxu0 %v54
    %v90 = vpop.f32.mrb[0].mxu0
    %v91 = vadd.f32 %v38, %v90
    %v92 = vpop.f32.mrb[0].mxu0
    %v93 = vpop.f32.mrb[0].mxu0
    %v94 = vpop.f32.mrb[0].mxu0
    %95 = vdwg.mxu0
    %v96 = vtanh.pop %v91
    %v97 = vpack.c.bf16 %v96, %v96
    %v98 = vld [vmem:[%s3] sm:$0xf]
    %v99 = vld [vmem:[%s3 + $0x4] sm:$0xf]
    %v100 = vld [vmem:[%s3 + $0x8] sm:$0xf]
    %v101 = vld [vmem:[%s3 + $0xc] sm:$0xf]
    %v102 = vld [vmem:[%s4] sm:$0x1]
    %v104 = vlaneseq
    %v105 = vshrl.u32 %v104, 7
    %v106 = vsub.s32 0, %v105
    %v107 = vrot.slane %v102, %v106
    %v113 = vunpack.c.l.b16 %v98
    %v114 = vunpack.c.l.b16 %v99
    %v115 = vunpack.c.l.b16 %v100
    %v116 = vunpack.c.l.b16 %v101
    %v117 = vpack.c.b16 %v114, %v113
    %v118 = vpack.c.b16 %v116, %v115
    %v122 = vsel %vm52, %v97, 0
    %124 = vmatprep.subr.bf16.mxu0 0
    %125 = vmatpush1.bf16.msra.mxu0 %v117
    %126 = vmatprep.subr.bf16.mxu0 0
    %127 = vmatpush1.bf16.msra.mxu0 %v118
    %128 = vmatprep.subr.bf16.mxu0 0
    %129 = vmatpush1.bf16.msra.mxu0 0
    %130 = vmatprep.subr.bf16.mxu0 0
    %131 = vmatpush1.bf16.msra.mxu0 0
    %132 = vmatprep.subr.bf16.mxu0 0
    %133 = vmatpush1.bf16.msra.mxu0 0
    %134 = vmatprep.subr.bf16.mxu0 0
    %135 = vmatpush1.bf16.msra.mxu0 0
    %136 = vmatprep.subr.bf16.mxu0 0
    %137 = vmatpush1.bf16.msra.mxu0 0
    %138 = vmatprep.subr.bf16.mxu0 0
    %139 = vmatpush1.bf16.msra.mxu0 0
    %140 = vmatprep.subr.bf16.mxu0 0
    %141 = vmatpush1.bf16.msra.mxu0 0
    %142 = vmatprep.subr.bf16.mxu0 0
    %143 = vmatpush1.bf16.msra.mxu0 0
    %144 = vmatprep.subr.bf16.mxu0 0
    %145 = vmatpush1.bf16.msra.mxu0 0
    %146 = vmatprep.subr.bf16.mxu0 0
    %147 = vmatpush1.bf16.msra.mxu0 0
    %148 = vmatprep.subr.bf16.mxu0 0
    %149 = vmatpush1.bf16.msra.mxu0 0
    %150 = vmatprep.subr.bf16.mxu0 0
    %151 = vmatpush1.bf16.msra.mxu0 0
    %152 = vmatprep.subr.bf16.mxu0 0
    %153 = vmatpush1.bf16.msra.mxu0 0
    %154 = vmatprep.subr.bf16.mxu0 0
    %155 = vmatpush1.bf16.msra.mxu0 0
    %156 = vmatprep.mubr.bf16.mxu0 0
    %157 = vmatmul.mubr.bf16.gmra.mrb[0].mxu0 %v122
    %v158 = vpop.f32.mrb[0].mxu0
    %v159 = vadd.f32 %v107, %v158
    %v160 = vpop.f32.mrb[0].mxu0
    %v161 = vpop.f32.mrb[0].mxu0
    %v162 = vpop.f32.mrb[0].mxu0
    %163 = vdwg.mxu0
    %vm164 = vcmask 9216
    %165 = vst.msk [vmem:[#allocation2] sm:$0x3] %vm164, %v159
    %v166 = vsel %vm164, %v159, -inf
    %167 = vmax.xlane.f32.xlu0 %v166
    %v168 = vpop.xlane.xlu0 %167
    %v169 = vsub.f32 %v159, %v168
    %v170 = vmul.f32 %v169, 1.442695
    %v171 = vpow.pop %v170
    %v172 = vsel %vm164, %v171, 0.0
    %173 = vadd.xlane.f32.xlu0 %v172
    %v174 = vpop.xlane.xlu0 %173
    %v175 = vlog2.pop %v174
    %v176 = vmul.f32 %v175, 0.6931472
    %v177 = vadd.f32 %v176, %v168
    %v178 = vld [vmem:[%s5] sm:$0x3]
    %v179 = vmul.f32 %v159, %v178
    %v180 = vsel %vm164, %v179, 0.0
    %181 = vadd.xlane.f32.xlu0 %v180
    %v182 = vpop.xlane.xlu0 %181
    %v183 = vsub.f32 %v177, %v182
    %vm184 = vcmask 1041408
    %v185 = vsel %vm184, %v183, 0.0
    %v186 = vrot.slane %v185, 4
    %v187 = vadd.f32 %v185, %v186
    %v188 = vrot.slane %v187, 2
    %v189 = vadd.f32 %v187, %v188
    %v190 = vrot.slane %v189, 1
    %v191 = vadd.f32 %v189, %v190
    %v192 = vrcp.pop 2.0
    %v193 = vmul.f32 %v191, %v192
    %vm194 = vcmask 0
    %195 = vst.msk [vmem:[#allocation4] sm:$0x1] %vm194, %v193
    // Predicated region
    $region26: #{bert_forward.5} parent=1 // pred_check
      _
    $region27: #{bert_forward.5} parent=1 // pred_check_branch
      %197 = sbr.rel (0) target = $region29
    $region28: #{bert_forward.5} parent=1 // pred_region
      %s199 = ssub.s32 32, 32
      %200 = vsyncadd [#allocation3], %s199
      %s202 = sshll.u32 [#allocation2], 4
      %s203 = int_to_ptr.vmem [resolvable:$true] %s202
      %205 = dma.vmem_to_hbm [thread:$0]  %s203, 32, %s6, [#allocation3]
    $region29: #{bert_forward.5} parent=1 // pred_fallthru
      _
    // Predicated region
    $region30: #{bert_forward.5} parent=1 // pred_check
      _
    $region31: #{bert_forward.5} parent=1 // pred_check_branch
      %207 = sbr.rel (0) target = $region33
    $region32: #{bert_forward.5} parent=1 // pred_region
      %s209 = ssub.s32 16, 16
      %210 = vsyncadd [#allocation5], %s209
      %s212 = sshll.u32 [#allocation4], 4
      %s213 = int_to_ptr.vmem [resolvable:$true] %s212
      %215 = dma.vmem_to_hbm [thread:$0]  %s213, 16, %s7, [#allocation5]
    $region33: #{bert_forward.5} parent=1 // pred_fallthru
      _
    // Predicated region
    $region34: #{bert_forward.5} parent=1 // pred_check
      _
    $region35: #{bert_forward.5} parent=1 // pred_check_branch
      %217 = sbr.rel (0) target = $region37
    $region36: #{bert_forward.5} parent=1 // pred_region
      %218 = dma.done [#allocation3], 32
    $region37: #{bert_forward.5} parent=1 // pred_fallthru
      _
    // Predicated region
    $region38: #{bert_forward.5} parent=1 // pred_check
      _
    $region39: #{bert_forward.5} parent=1 // pred_check_branch
      %220 = sbr.rel (0) target = $region41
    $region40: #{bert_forward.5} parent=1 // pred_region
      %221 = dma.done [#allocation5], 16
    $region41: #{bert_forward.5} parent=1 // pred_fallthru
      _
    %222 = vsyncpa [#allocation3], 1
    %223 = vsyncpa [#allocation5], 1

// kernel: bert_forward.4
$region0: #{bert_forward.4}
  #allocation0 [shape = 'u32[]', space=smem, size = 0x4, offset = 0x4, fixed_abs, tag = 'smem constant byte address 0x4 - core index']
  #allocation1 [shape = 'u32[144,128]{1,0:T(1,128)}', space=vmem, size = 0x12000, scoped, tag = 'internal scratch']
  %s0 = inlined_call_operand.vmem [shape: bf16[2,8,32], index: 0, kind: input, shape index: {}]
  %s1 = inlined_call_operand.vmem [shape: f32[2,1,8], index: 1, kind: input, shape index: {}]
  %s2 = inlined_call_operand.vmem [shape: f32[1,32], index: 2, kind: input, shape index: {}]
  %s3 = inlined_call_operand.vmem [shape: f32[1,32], index: 3, kind: input, shape index: {}]
  %s4 = inlined_call_operand.vmem [shape: bf16[32,96], index: 4, kind: input, shape index: {}]
  %s5 = inlined_call_operand.vmem [shape: f32[1,96], index: 5, kind: input, shape index: {}]
  %s6 = inlined_call_operand.vmem [shape: bf16[32,32], index: 6, kind: input, shape index: {}]
  %s7 = inlined_call_operand.vmem [shape: f32[1,32], index: 7, kind: input, shape index: {}]
  %s8 = inlined_call_operand.vmem [shape: f32[1,32], index: 8, kind: input, shape index: {}]
  %s9 = inlined_call_operand.vmem [shape: f32[1,32], index: 9, kind: input, shape index: {}]
  %s10 = inlined_call_operand.vmem [shape: bf16[32,64], index: 10, kind: input, shape index: {}]
  %s11 = inlined_call_operand.vmem [shape: f32[1,64], index: 11, kind: input, shape index: {}]
  %s12 = inlined_call_operand.vmem [shape: bf16[64,32], index: 12, kind: input, shape index: {}]
  %s13 = inlined_call_operand.vmem [shape: f32[1,32], index: 13, kind: input, shape index: {}]
  %s14 = inlined_call_operand.vmem [shape: f32[1,32], index: 14, kind: input, shape index: {}]
  %s15 = inlined_call_operand.vmem [shape: f32[1,32], index: 15, kind: input, shape index: {}]
  %s16 = inlined_call_operand.vmem [shape: bf16[2,8,32], index: 16, kind: output, shape index: {}]
  %s17 = sld [smem:[#allocation0]]
  $region97: #{bert_forward.4} parent=0
    _
  %s19 = ssub.s32 1, %s17
  %s20 = scalar_select 0, %s19, %s17
  loop: start=0, step=1, limit=4
  $region2: #{bert_forward.4} parent=0 // loop_pre_header
    _
  $region3: #{bert_forward.4} parent=0 // loop_header
    %s22 = sphi 0, %s26
    %p23 = scmp.ge.s32.totalorder %s22, 4
    %s32 = sphi 0, %s34
    %s35 = sphi 0, %s32
    %s36 = sphi 0, %s35
    %s52 = sphi 0, %s36
    %s58 = sphi 0, %s60
    %s61 = sphi 0, %s58
    %s62 = sphi 0, %s61
    %s78 = sphi 0, %s62
    %s82 = sphi 0, %s82
    %s84 = sphi 0, %s82
    %s85 = sphi 0, %s84
    %s99 = sphi 0, %s85
    %s103 = sphi 0, %s103
    %s105 = sphi 0, %s103
    %s106 = sphi 0, %s105
    %s120 = sphi 0, %s106
    %s124 = sphi 0, %s124
    %s126 = sphi 0, %s124
    %s127 = sphi 0, %s126
    %s141 = sphi 0, %s127
    %s145 = sphi 0, %s145
    %s147 = sphi 0, %s145
    %s148 = sphi 0, %s147
    %s162 = sphi 0, %s148
    %s166 = sphi 0, %s166
    %s168 = sphi 0, %s166
    %s169 = sphi 0, %s168
    %s183 = sphi 0, %s169
    %s187 = sphi 0, %s187
    %s189 = sphi 0, %s187
    %s190 = sphi 0, %s189
    %s204 = sphi 0, %s190
    %s208 = sphi 0, %s208
    %s210 = sphi 0, %s208
    %s211 = sphi 0, %s210
    %s225 = sphi 0, %s211
    %s229 = sphi 0, %s229
    %s231 = sphi 0, %s229
    %s232 = sphi 0, %s231
    %s246 = sphi 0, %s232
    %s250 = sphi 0, %s250
    %s252 = sphi 0, %s250
    %s253 = sphi 0, %s252
    %s267 = sphi 0, %s253
    %s271 = sphi 0, %s271
    %s273 = sphi 0, %s271
    %s274 = sphi 0, %s273
    %s288 = sphi 0, %s274
    %s292 = sphi 0, %s292
    %s294 = sphi 0, %s292
    %s295 = sphi 0, %s294
    %s309 = sphi 0, %s295
    %s313 = sphi 0, %s313
    %s315 = sphi 0, %s313
    %s316 = sphi 0, %s315
    %s330 = sphi 0, %s316
    %s334 = sphi 0, %s334
    %s336 = sphi 0, %s334
    %s337 = sphi 0, %s336
    %s351 = sphi 0, %s337
    %s355 = sphi 0, %s355
    %s357 = sphi 0, %s355
    %s358 = sphi 0, %s357
    %s372 = sphi 0, %s358
    %s378 = sphi 0, %s380
    %s381 = sphi 0, %s378
    %s382 = sphi 0, %s381
    %s398 = sphi 0, %s382
  $region4: #{bert_forward.4} parent=0 // loop_header_branch
    %25 = sbr.rel (%p23) target = $region8
  $region5: #{bert_forward.4} parent=0 // loop_body
    %s27 = ssub.s32 %s22, 1
    %s28 = ssub.s32 %s22, 2
    %s29 = sadd.s32 %s22, 1
    %s30 = ssub.s32 %s22, %s29
    %p31 = scmp.eq.s32.totalorder %s30, 0
    %s33 = sadd.s32 %s32, 1
    %s34 = scalar_select %p31, %s32, %s33
    %p37 = pneg %p31
    %p38 = scmp.eq.s32.totalorder %s22, 1
    %p39 = por %p37, %p38
    %p40 = scmp.ne.s32.totalorder %s32, %s35
    %p41 = scmp.eq.s32.totalorder %s22, 0
    %p42 = por %p40, %p41
    %p43 = scmp.ne.s32.totalorder %s32, %s35
    %p44 = scmp.eq.s32.totalorder %s27, 1
    %p45 = por %p43, %p44
    %p46 = scmp.ne.s32.totalorder %s35, %s36
    %p47 = scmp.eq.s32.totalorder %s27, 0
    %p48 = por %p46, %p47
    %p49 = scmp.ne.s32.totalorder %s35, %s36
    %p50 = scmp.eq.s32.totalorder %s28, 1
    %p51 = por %p49, %p50
    %p53 = scmp.ne.s32.totalorder %s36, %s52
    %p54 = scmp.eq.s32.totalorder %s28, 0
    %p55 = por %p53, %p54
    %s56 = ssub.s32 %s22, %s29
    %p57 = scmp.eq.s32.totalorder %s56, 0
    %s59 = sadd.s32 %s58, 1
    %s60 = scalar_select %p57, %s58, %s59
    %p63 = pneg %p57
    %p64 = scmp.eq.s32.totalorder %s22, 1
    %p65 = por %p63, %p64
    %p66 = scmp.ne.s32.totalorder %s58, %s61
    %p67 = scmp.eq.s32.totalorder %s22, 0
    %p68 = por %p66, %p67
    %p69 = scmp.ne.s32.totalorder %s58, %s61
    %p70 = scmp.eq.s32.totalorder %s27, 1
    %p71 = por %p69, %p70
    %p72 = scmp.ne.s32.totalorder %s61, %s62
    %p73 = scmp.eq.s32.totalorder %s27, 0
    %p74 = por %p72, %p73
    %p75 = scmp.ne.s32.totalorder %s61, %s62
    %p76 = scmp.eq.s32.totalorder %s28, 1
    %p77 = por %p75, %p76
    %p79 = scmp.ne.s32.totalorder %s62, %s78
    %p80 = scmp.eq.s32.totalorder %s28, 0
    %p81 = por %p79, %p80
    %s83 = sadd.s32 %s82, 1
    %p86 = scmp.eq.s32.totalorder %s22, 1
    %p87 = scmp.ne.s32.totalorder %s82, %s84
    %p88 = scmp.eq.s32.totalorder %s22, 0
    %p89 = por %p87, %p88
    %p90 = scmp.ne.s32.totalorder %s82, %s84
    %p91 = scmp.eq.s32.totalorder %s27, 1
    %p92 = por %p90, %p91
    %p93 = scmp.ne.s32.totalorder %s84, %s85
    %p94 = scmp.eq.s32.totalorder %s27, 0
    %p95 = por %p93, %p94
    %p96 = scmp.ne.s32.totalorder %s84, %s85
    %p97 = scmp.eq.s32.totalorder %s28, 1
    %p98 = por %p96, %p97
    %p100 = scmp.ne.s32.totalorder %s85, %s99
    %p101 = scmp.eq.s32.totalorder %s28, 0
    %p102 = por %p100, %p101
    %s104 = sadd.s32 %s103, 1
    %p107 = scmp.eq.s32.totalorder %s22, 1
    %p108 = scmp.ne.s32.totalorder %s103, %s105
    %p109 = scmp.eq.s32.totalorder %s22, 0
    %p110 = por %p108, %p109
    %p111 = scmp.ne.s32.totalorder %s103, %s105
    %p112 = scmp.eq.s32.totalorder %s27, 1
    %p113 = por %p111, %p112
    %p114 = scmp.ne.s32.totalorder %s105, %s106
    %p115 = scmp.eq.s32.totalorder %s27, 0
    %p116 = por %p114, %p115
    %p117 = scmp.ne.s32.totalorder %s105, %s106
    %p118 = scmp.eq.s32.totalorder %s28, 1
    %p119 = por %p117, %p118
    %p121 = scmp.ne.s32.totalorder %s106, %s120
    %p122 = scmp.eq.s32.totalorder %s28, 0
    %p123 = por %p121, %p122
    %s125 = sadd.s32 %s124, 1
    %p128 = scmp.eq.s32.totalorder %s22, 1
    %p129 = scmp.ne.s32.totalorder %s124, %s126
    %p130 = scmp.eq.s32.totalorder %s22, 0
    %p131 = por %p129, %p130
    %p132 = scmp.ne.s32.totalorder %s124, %s126
    %p133 = scmp.eq.s32.totalorder %s27, 1
    %p134 = por %p132, %p133
    %p135 = scmp.ne.s32.totalorder %s126, %s127
    %p136 = scmp.eq.s32.totalorder %s27, 0
    %p137 = por %p135, %p136
    %p138 = scmp.ne.s32.totalorder %s126, %s127
    %p139 = scmp.eq.s32.totalorder %s28, 1
    %p140 = por %p138, %p139
    %p142 = scmp.ne.s32.totalorder %s127, %s141
    %p143 = scmp.eq.s32.totalorder %s28, 0
    %p144 = por %p142, %p143
    %s146 = sadd.s32 %s145, 1
    %p149 = scmp.eq.s32.totalorder %s22, 1
    %p150 = scmp.ne.s32.totalorder %s145, %s147
    %p151 = scmp.eq.s32.totalorder %s22, 0
    %p152 = por %p150, %p151
    %p153 = scmp.ne.s32.totalorder %s145, %s147
    %p154 = scmp.eq.s32.totalorder %s27, 1
    %p155 = por %p153, %p154
    %p156 = scmp.ne.s32.totalorder %s147, %s148
    %p157 = scmp.eq.s32.totalorder %s27, 0
    %p158 = por %p156, %p157
    %p159 = scmp.ne.s32.totalorder %s147, %s148
    %p160 = scmp.eq.s32.totalorder %s28, 1
    %p161 = por %p159, %p160
    %p163 = scmp.ne.s32.totalorder %s148, %s162
    %p164 = scmp.eq.s32.totalorder %s28, 0
    %p165 = por %p163, %p164
    %s167 = sadd.s32 %s166, 1
    %p170 = scmp.eq.s32.totalorder %s22, 1
    %p171 = scmp.ne.s32.totalorder %s166, %s168
    %p172 = scmp.eq.s32.totalorder %s22, 0
    %p173 = por %p171, %p172
    %p174 = scmp.ne.s32.totalorder %s166, %s168
    %p175 = scmp.eq.s32.totalorder %s27, 1
    %p176 = por %p174, %p175
    %p177 = scmp.ne.s32.totalorder %s168, %s169
    %p178 = scmp.eq.s32.totalorder %s27, 0
    %p179 = por %p177, %p178
    %p180 = scmp.ne.s32.totalorder %s168, %s169
    %p181 = scmp.eq.s32.totalorder %s28, 1
    %p182 = por %p180, %p181
    %p184 = scmp.ne.s32.totalorder %s169, %s183
    %p185 = scmp.eq.s32.totalorder %s28, 0
    %p186 = por %p184, %p185
    %s188 = sadd.s32 %s187, 1
    %p191 = scmp.eq.s32.totalorder %s22, 1
    %p192 = scmp.ne.s32.totalorder %s187, %s189
    %p193 = scmp.eq.s32.totalorder %s22, 0
    %p194 = por %p192, %p193
    %p195 = scmp.ne.s32.totalorder %s187, %s189
    %p196 = scmp.eq.s32.totalorder %s27, 1
    %p197 = por %p195, %p196
    %p198 = scmp.ne.s32.totalorder %s189, %s190
    %p199 = scmp.eq.s32.totalorder %s27, 0
    %p200 = por %p198, %p199
    %p201 = scmp.ne.s32.totalorder %s189, %s190
    %p202 = scmp.eq.s32.totalorder %s28, 1
    %p203 = por %p201, %p202
    %p205 = scmp.ne.s32.totalorder %s190, %s204
    %p206 = scmp.eq.s32.totalorder %s28, 0
    %p207 = por %p205, %p206
    %s209 = sadd.s32 %s208, 1
    %p212 = scmp.eq.s32.totalorder %s22, 1
    %p213 = scmp.ne.s32.totalorder %s208, %s210
    %p214 = scmp.eq.s32.totalorder %s22, 0
    %p215 = por %p213, %p214
    %p216 = scmp.ne.s32.totalorder %s208, %s210
    %p217 = scmp.eq.s32.totalorder %s27, 1
    %p218 = por %p216, %p217
    %p219 = scmp.ne.s32.totalorder %s210, %s211
    %p220 = scmp.eq.s32.totalorder %s27, 0
    %p221 = por %p219, %p220
    %p222 = scmp.ne.s32.totalorder %s210, %s211
    %p223 = scmp.eq.s32.totalorder %s28, 1
    %p224 = por %p222, %p223
    %p226 = scmp.ne.s32.totalorder %s211, %s225
    %p227 = scmp.eq.s32.totalorder %s28, 0
    %p228 = por %p226, %p227
    %s230 = sadd.s32 %s229, 1
    %p233 = scmp.eq.s32.totalorder %s22, 1
    %p234 = scmp.ne.s32.totalorder %s229, %s231
    %p235 = scmp.eq.s32.totalorder %s22, 0
    %p236 = por %p234, %p235
    %p237 = scmp.ne.s32.totalorder %s229, %s231
    %p238 = scmp.eq.s32.totalorder %s27, 1
    %p239 = por %p237, %p238
    %p240 = scmp.ne.s32.totalorder %s231, %s232
    %p241 = scmp.eq.s32.totalorder %s27, 0
    %p242 = por %p240, %p241
    %p243 = scmp.ne.s32.totalorder %s231, %s232
    %p244 = scmp.eq.s32.totalorder %s28, 1
    %p245 = por %p243, %p244
    %p247 = scmp.ne.s32.totalorder %s232, %s246
    %p248 = scmp.eq.s32.totalorder %s28, 0
    %p249 = por %p247, %p248
    %s251 = sadd.s32 %s250, 1
    %p254 = scmp.eq.s32.totalorder %s22, 1
    %p255 = scmp.ne.s32.totalorder %s250, %s252
    %p256 = scmp.eq.s32.totalorder %s22, 0
    %p257 = por %p255, %p256
    %p258 = scmp.ne.s32.totalorder %s250, %s252
    %p259 = scmp.eq.s32.totalorder %s27, 1
    %p260 = por %p258, %p259
    %p261 = scmp.ne.s32.totalorder %s252, %s253
    %p262 = scmp.eq.s32.totalorder %s27, 0
    %p263 = por %p261, %p262
    %p264 = scmp.ne.s32.totalorder %s252, %s253
    %p265 = scmp.eq.s32.totalorder %s28, 1
    %p266 = por %p264, %p265
    %p268 = scmp.ne.s32.totalorder %s253, %s267
    %p269 = scmp.eq.s32.totalorder %s28, 0
    %p270 = por %p268, %p269
    %s272 = sadd.s32 %s271, 1
    %p275 = scmp.eq.s32.totalorder %s22, 1
    %p276 = scmp.ne.s32.totalorder %s271, %s273
    %p277 = scmp.eq.s32.totalorder %s22, 0
    %p278 = por %p276, %p277
    %p279 = scmp.ne.s32.totalorder %s271, %s273
    %p280 = scmp.eq.s32.totalorder %s27, 1
    %p281 = por %p279, %p280
    %p282 = scmp.ne.s32.totalorder %s273, %s274
    %p283 = scmp.eq.s32.totalorder %s27, 0
    %p284 = por %p282, %p283
    %p285 = scmp.ne.s32.totalorder %s273, %s274
    %p286 = scmp.eq.s32.totalorder %s28, 1
    %p287 = por %p285, %p286
    %p289 = scmp.ne.s32.totalorder %s274, %s288
    %p290 = scmp.eq.s32.totalorder %s28, 0
    %p291 = por %p289, %p290
    %s293 = sadd.s32 %s292, 1
    %p296 = scmp.eq.s32.totalorder %s22, 1
    %p297 = scmp.ne.s32.totalorder %s292, %s294
    %p298 = scmp.eq.s32.totalorder %s22, 0
    %p299 = por %p297, %p298
    %p300 = scmp.ne.s32.totalorder %s292, %s294
    %p301 = scmp.eq.s32.totalorder %s27, 1
    %p302 = por %p300, %p301
    %p303 = scmp.ne.s32.totalorder %s294, %s295
    %p304 = scmp.eq.s32.totalorder %s27, 0
    %p305 = por %p303, %p304
    %p306 = scmp.ne.s32.totalorder %s294, %s295
    %p307 = scmp.eq.s32.totalorder %s28, 1
    %p308 = por %p306, %p307
    %p310 = scmp.ne.s32.totalorder %s295, %s309
    %p311 = scmp.eq.s32.totalorder %s28, 0
    %p312 = por %p310, %p311
    %s314 = sadd.s32 %s313, 1
    %p317 = scmp.eq.s32.totalorder %s22, 1
    %p318 = scmp.ne.s32.totalorder %s313, %s315
    %p319 = scmp.eq.s32.totalorder %s22, 0
    %p320 = por %p318, %p319
    %p321 = scmp.ne.s32.totalorder %s313, %s315
    %p322 = scmp.eq.s32.totalorder %s27, 1
    %p323 = por %p321, %p322
    %p324 = scmp.ne.s32.totalorder %s315, %s316
    %p325 = scmp.eq.s32.totalorder %s27, 0
    %p326 = por %p324, %p325
    %p327 = scmp.ne.s32.totalorder %s315, %s316
    %p328 = scmp.eq.s32.totalorder %s28, 1
    %p329 = por %p327, %p328
    %p331 = scmp.ne.s32.totalorder %s316, %s330
    %p332 = scmp.eq.s32.totalorder %s28, 0
    %p333 = por %p331, %p332
    %s335 = sadd.s32 %s334, 1
    %p338 = scmp.eq.s32.totalorder %s22, 1
    %p339 = scmp.ne.s32.totalorder %s334, %s336
    %p340 = scmp.eq.s32.totalorder %s22, 0
    %p341 = por %p339, %p340
    %p342 = scmp.ne.s32.totalorder %s334, %s336
    %p343 = scmp.eq.s32.totalorder %s27, 1
    %p344 = por %p342, %p343
    %p345 = scmp.ne.s32.totalorder %s336, %s337
    %p346 = scmp.eq.s32.totalorder %s27, 0
    %p347 = por %p345, %p346
    %p348 = scmp.ne.s32.totalorder %s336, %s337
    %p349 = scmp.eq.s32.totalorder %s28, 1
    %p350 = por %p348, %p349
    %p352 = scmp.ne.s32.totalorder %s337, %s351
    %p353 = scmp.eq.s32.totalorder %s28, 0
    %p354 = por %p352, %p353
    %s356 = sadd.s32 %s355, 1
    %p359 = scmp.eq.s32.totalorder %s22, 1
    %p360 = scmp.ne.s32.totalorder %s355, %s357
    %p361 = scmp.eq.s32.totalorder %s22, 0
    %p362 = por %p360, %p361
    %p363 = scmp.ne.s32.totalorder %s355, %s357
    %p364 = scmp.eq.s32.totalorder %s27, 1
    %p365 = por %p363, %p364
    %p366 = scmp.ne.s32.totalorder %s357, %s358
    %p367 = scmp.eq.s32.totalorder %s27, 0
    %p368 = por %p366, %p367
    %p369 = scmp.ne.s32.totalorder %s357, %s358
    %p370 = scmp.eq.s32.totalorder %s28, 1
    %p371 = por %p369, %p370
    %p373 = scmp.ne.s32.totalorder %s358, %s372
    %p374 = scmp.eq.s32.totalorder %s28, 0
    %p375 = por %p373, %p374
    %s376 = ssub.s32 %s22, %s29
    %p377 = scmp.eq.s32.totalorder %s376, 0
    %s379 = sadd.s32 %s378, 1
    %s380 = scalar_select %p377, %s378, %s379
    %p383 = pneg %p377
    %p384 = scmp.eq.s32.totalorder %s22, 1
    %p385 = por %p383, %p384
    %p386 = scmp.ne.s32.totalorder %s378, %s381
    %p387 = scmp.eq.s32.totalorder %s22, 0
    %p388 = por %p386, %p387
    %p389 = scmp.ne.s32.totalorder %s378, %s381
    %p390 = scmp.eq.s32.totalorder %s27, 1
    %p391 = por %p389, %p390
    %p392 = scmp.ne.s32.totalorder %s381, %s382
    %p393 = scmp.eq.s32.totalorder %s27, 0
    %p394 = por %p392, %p393
    %p395 = scmp.ne.s32.totalorder %s381, %s382
    %p396 = scmp.eq.s32.totalorder %s28, 1
    %p397 = por %p395, %p396
    %p399 = scmp.ne.s32.totalorder %s382, %s398
    %p400 = scmp.eq.s32.totalorder %s28, 0
    %p401 = por %p399, %p400
    %p402 = scmp.le.s32.totalorder 1, %s22
    %p403 = scmp.lt.s32.totalorder %s22, 3
    %p404 = pnand %p402, %p403
    %p405 = pneg %p404
    // Predicated region
    $region9: #{bert_forward.4} parent=5 // pred_check
      _
    $region10: #{bert_forward.4} parent=5 // pred_check_branch
      %407 = sbr.rel (%p404) target = $region12
    $region11: #{bert_forward.4} parent=5 // pred_region
      %s408 = ssub.s32 %s22, 1
      // Predicated region
      $region13: #{bert_forward.4} parent=11 // pred_check
        %p409 = pneg %p95
      $region14: #{bert_forward.4} parent=11 // pred_check_branch
        %411 = sbr.rel (%p409) target = $region16
      $region15: #{bert_forward.4} parent=11 // pred_region
        _
      $region16: #{bert_forward.4} parent=11 // pred_fallthru
        _
      // Predicated region
      $region17: #{bert_forward.4} parent=11 // pred_check
        %p412 = pneg %p116
      $region18: #{bert_forward.4} parent=11 // pred_check_branch
        %414 = sbr.rel (%p412) target = $region20
      $region19: #{bert_forward.4} parent=11 // pred_region
        _
      $region20: #{bert_forward.4} parent=11 // pred_fallthru
        _
      // Predicated region
      $region21: #{bert_forward.4} parent=11 // pred_check
        %p415 = pneg %p137
      $region22: #{bert_forward.4} parent=11 // pred_check_branch
        %417 = sbr.rel (%p415) target = $region24
      $region23: #{bert_forward.4} parent=11 // pred_region
        _
      $region24: #{bert_forward.4} parent=11 // pred_fallthru
        _
      // Predicated region
      $region25: #{bert_forward.4} parent=11 // pred_check
        %p418 = pneg %p158
      $region26: #{bert_forward.4} parent=11 // pred_check_branch
        %420 = sbr.rel (%p418) target = $region28
      $region27: #{bert_forward.4} parent=11 // pred_region
        _
      $region28: #{bert_forward.4} parent=11 // pred_fallthru
        _
      // Predicated region
      $region29: #{bert_forward.4} parent=11 // pred_check
        %p421 = pneg %p179
      $region30: #{bert_forward.4} parent=11 // pred_check_branch
        %423 = sbr.rel (%p421) target = $region32
      $region31: #{bert_forward.4} parent=11 // pred_region
        _
      $region32: #{bert_forward.4} parent=11 // pred_fallthru
        _
      // Predicated region
      $region33: #{bert_forward.4} parent=11 // pred_check
        %p424 = pneg %p200
      $region34: #{bert_forward.4} parent=11 // pred_check_branch
        %426 = sbr.rel (%p424) target = $region36
      $region35: #{bert_forward.4} parent=11 // pred_region
        _
      $region36: #{bert_forward.4} parent=11 // pred_fallthru
        _
      // Predicated region
      $region37: #{bert_forward.4} parent=11 // pred_check
        %p427 = pneg %p221
      $region38: #{bert_forward.4} parent=11 // pred_check_branch
        %429 = sbr.rel (%p427) target = $region40
      $region39: #{bert_forward.4} parent=11 // pred_region
        _
      $region40: #{bert_forward.4} parent=11 // pred_fallthru
        _
      // Predicated region
      $region41: #{bert_forward.4} parent=11 // pred_check
        %p430 = pneg %p242
      $region42: #{bert_forward.4} parent=11 // pred_check_branch
        %432 = sbr.rel (%p430) target = $region44
      $region43: #{bert_forward.4} parent=11 // pred_region
        _
      $region44: #{bert_forward.4} parent=11 // pred_fallthru
        _
      // Predicated region
      $region45: #{bert_forward.4} parent=11 // pred_check
        %p433 = pneg %p263
      $region46: #{bert_forward.4} parent=11 // pred_check_branch
        %435 = sbr.rel (%p433) target = $region48
      $region47: #{bert_forward.4} parent=11 // pred_region
        _
      $region48: #{bert_forward.4} parent=11 // pred_fallthru
        _
      // Predicated region
      $region49: #{bert_forward.4} parent=11 // pred_check
        %p436 = pneg %p284
      $region50: #{bert_forward.4} parent=11 // pred_check_branch
        %438 = sbr.rel (%p436) target = $region52
      $region51: #{bert_forward.4} parent=11 // pred_region
        _
      $region52: #{bert_forward.4} parent=11 // pred_fallthru
        _
      // Predicated region
      $region53: #{bert_forward.4} parent=11 // pred_check
        %p439 = pneg %p305
      $region54: #{bert_forward.4} parent=11 // pred_check_branch
        %441 = sbr.rel (%p439) target = $region56
      $region55: #{bert_forward.4} parent=11 // pred_region
        _
      $region56: #{bert_forward.4} parent=11 // pred_fallthru
        _
      // Predicated region
      $region57: #{bert_forward.4} parent=11 // pred_check
        %p442 = pneg %p326
      $region58: #{bert_forward.4} parent=11 // pred_check_branch
        %444 = sbr.rel (%p442) target = $region60
      $region59: #{bert_forward.4} parent=11 // pred_region
        _
      $region60: #{bert_forward.4} parent=11 // pred_fallthru
        _
      // Predicated region
      $region61: #{bert_forward.4} parent=11 // pred_check
        %p445 = pneg %p347
      $region62: #{bert_forward.4} parent=11 // pred_check_branch
        %447 = sbr.rel (%p445) target = $region64
      $region63: #{bert_forward.4} parent=11 // pred_region
        _
      $region64: #{bert_forward.4} parent=11 // pred_fallthru
        _
      // Predicated region
      $region65: #{bert_forward.4} parent=11 // pred_check
        %p448 = pneg %p368
      $region66: #{bert_forward.4} parent=11 // pred_check_branch
        %450 = sbr.rel (%p448) target = $region68
      $region67: #{bert_forward.4} parent=11 // pred_region
        _
      $region68: #{bert_forward.4} parent=11 // pred_fallthru
        _
    $region12: #{bert_forward.4} parent=5 // pred_fallthru
      _
    %p451 = scmp.lt.s32.totalorder %s22, 2
    // Predicated region
    $region69: #{bert_forward.4} parent=5 // pred_check
      %p452 = pneg %p451
    $region70: #{bert_forward.4} parent=5 // pred_check_branch
      %454 = sbr.rel (%p452) target = $region72
    $region71: #{bert_forward.4} parent=5 // pred_region
      // Predicated region
      $region73: #{bert_forward.4} parent=71 // pred_check
        %p455 = pneg %p42
      $region74: #{bert_forward.4} parent=71 // pred_check_branch
        %457 = sbr.rel (%p455) target = $region76
      $region75: #{bert_forward.4} parent=71 // pred_region
        %p458 = scmp.lt.s32.totalorder %s22, 1
        %s459 = scalar_select %p458, %s22, 1
        %s460 = smul.addr %s459, 4
        %s461 = scalar_lea.vmem %s0, %s460
      $region76: #{bert_forward.4} parent=71 // pred_fallthru
        _
      // Predicated region
      $region77: #{bert_forward.4} parent=71 // pred_check
        %p462 = pneg %p68
      $region78: #{bert_forward.4} parent=71 // pred_check_branch
        %464 = sbr.rel (%p462) target = $region80
      $region79: #{bert_forward.4} parent=71 // pred_region
        %p465 = scmp.lt.s32.totalorder %s22, 1
        %s466 = scalar_select %p465, %s22, 1
        %s467 = scalar_lea.vmem %s1, %s466
      $region80: #{bert_forward.4} parent=71 // pred_fallthru
        _
    $region72: #{bert_forward.4} parent=5 // pred_fallthru
      _
    %p468 = scmp.le.s32.totalorder 1, %s22
    %p469 = scmp.lt.s32.totalorder %s22, 3
    %p470 = pnand %p468, %p469
    %p471 = pneg %p470
    // Predicated region
    $region81: #{bert_forward.4} parent=5 // pred_check
      _
    $region82: #{bert_forward.4} parent=5 // pred_check_branch
      %473 = sbr.rel (%p470) target = $region84
    $region83: #{bert_forward.4} parent=5 // pred_region
      %s474 = ssub.s32 %s22, 1
      %p475 = scmp.lt.s32.totalorder %s27, 1
      %s476 = scalar_select %p475, %s27, 1
      %s477 = smul.addr %s476, 4
      %s478 = scalar_lea.vmem %s0, %s477
      %p479 = pneg %p48
      %p480 = pneg %p45
      %p481 = scmp.lt.s32.totalorder %s27, 1
      %s482 = scalar_select %p481, %s27, 1
      %s483 = scalar_lea.vmem %s1, %s482
      %p484 = pneg %p74
      %p485 = pneg %p71
      %p486 = pneg %p95
      %p487 = pneg %p92
      %p488 = pneg %p116
      %p489 = pneg %p113
      %p490 = pneg %p137
      %p491 = pneg %p134
      %p492 = pneg %p158
      %p493 = pneg %p155
      %p494 = pneg %p179
      %p495 = pneg %p176
      %p496 = pneg %p200
      %p497 = pneg %p197
      %p498 = pneg %p221
      %p499 = pneg %p218
      %p500 = pneg %p242
      %p501 = pneg %p239
      %p502 = pneg %p263
      %p503 = pneg %p260
      %p504 = pneg %p284
      %p505 = pneg %p281
      %p506 = pneg %p305
      %p507 = pneg %p302
      %p508 = pneg %p326
      %p509 = pneg %p323
      %p510 = pneg %p347
      %p511 = pneg %p344
      %p512 = pneg %p368
      %p513 = pneg %p365
      %p514 = pneg %p394
      %p515 = pneg %p391
      %p516 = scmp.lt.s32.totalorder %s27, 1
      %s517 = scalar_select %p516, %s27, 1
      %s518 = smul.addr %s517, 4
      %s519 = scalar_lea.vmem %s16, %s518
      %p520 = scmp.lt.s32.totalorder %s27, 1
      %s521 = scalar_select %p520, %s27, 1
      %s522 = smul.addr %s521, 4
      %s523 = scalar_lea.vmem %s0, %s522
      %p524 = scmp.lt.s32.totalorder %s27, 1
      %s525 = scalar_select %p524, %s27, 1
      %s526 = scalar_lea.vmem %s1, %s525
      %p527 = scmp.lt.s32.totalorder %s27, 1
      %s528 = scalar_select %p527, %s27, 1
      %s529 = smul.addr %s528, 4
      %s530 = scalar_lea.vmem %s16, %s529
      %v532 = vld [vmem:[%s523] sm:$0xf]
      %v533 = vunpack.c.l.bf16 %v532
      %v534 = vld [vmem:[%s4] sm:$0xf]
      %v535 = vld [vmem:[%s4 + $0x4] sm:$0xf]
      %v536 = vld [vmem:[%s4 + $0x8] sm:$0xf]
      %v537 = vld [vmem:[%s4 + $0xc] sm:$0xf]
      %v538 = vld [vmem:[%s5] sm:$0x1]
      %v540 = vlaneseq
      %v541 = vshrl.u32 %v540, 7
      %v542 = vsub.s32 0, %v541
      %v543 = vrot.slane %v538, %v542
      %v549 = vunpack.c.l.b16 %v534
      %v550 = vunpack.c.l.b16 %v535
      %v551 = vunpack.c.l.b16 %v536
      %v552 = vunpack.c.l.b16 %v537
      %v553 = vpack.c.b16 %v550, %v549
      %v554 = vpack.c.b16 %v552, %v551
      %vm557 = vcmask 261120
      %v559 = vsel %vm557, %v532, 0
      %561 = vmatprep.subr.bf16.mxu0 0
      %562 = vmatpush1.bf16.msra.mxu0 %v553
      %563 = vmatprep.subr.bf16.mxu0 0
      %564 = vmatpush1.bf16.msra.mxu0 %v554
      %565 = vmatprep.subr.bf16.mxu0 0
      %566 = vmatpush1.bf16.msra.mxu0 0
      %567 = vmatprep.subr.bf16.mxu0 0
      %568 = vmatpush1.bf16.msra.mxu0 0
      %569 = vmatprep.subr.bf16.mxu0 0
      %570 = vmatpush1.bf16.msra.mxu0 0
      %571 = vmatprep.subr.bf16.mxu0 0
      %572 = vmatpush1.bf16.msra.mxu0 0
      %573 = vmatprep.subr.bf16.mxu0 0
      %574 = vmatpush1.bf16.msra.mxu0 0
      %575 = vmatprep.subr.bf16.mxu0 0
      %576 = vmatpush1.bf16.msra.mxu0 0
      %577 = vmatprep.subr.bf16.mxu0 0
      %578 = vmatpush1.bf16.msra.mxu0 0
      %579 = vmatprep.subr.bf16.mxu0 0
      %580 = vmatpush1.bf16.msra.mxu0 0
      %581 = vmatprep.subr.bf16.mxu0 0
      %582 = vmatpush1.bf16.msra.mxu0 0
      %583 = vmatprep.subr.bf16.mxu0 0
      %584 = vmatpush1.bf16.msra.mxu0 0
      %585 = vmatprep.subr.bf16.mxu0 0
      %586 = vmatpush1.bf16.msra.mxu0 0
      %587 = vmatprep.subr.bf16.mxu0 0
      %588 = vmatpush1.bf16.msra.mxu0 0
      %589 = vmatprep.subr.bf16.mxu0 0
      %590 = vmatpush1.bf16.msra.mxu0 0
      %591 = vmatprep.subr.bf16.mxu0 0
      %592 = vmatpush1.bf16.msra.mxu0 0
      %593 = vmatprep.mubr.bf16.mxu0 0
      %594 = vmatmul.mubr.bf16.gmra.mrb[0].mxu0 %v559
      %v595 = vpop.f32.mrb[0].mxu0
      %v596 = vadd.f32 %v543, %v595
      %v597 = vpop.f32.mrb[0].mxu0
      %v598 = vpop.f32.mrb[0].mxu0
      %v599 = vpop.f32.mrb[0].mxu0
      %600 = vdwg.mxu0
      %v601 = vpack.c.bf16 %v596, %v596
      %v602 = vld [vmem:[%s526] sm:$0x1]
      %v604 = vlaneseq
      %v605 = vshrl.u32 %v604, 7
      %v606 = vsub.s32 0, %v605
      %v607 = vrot.slane %v602, %v606
      %610 = vrot.lane.b32.xlu0 %v601, 96
      %v611 = vpop.permute.xlu0 %610
      %vm612 = vcmask 130048
      %v614 = vsel %vm612, %v601, 0
      %v617 = vsel %vm612, %v611, 0
      %619 = vmatprep.subr.bf16.mxu0 0
      %620 = vmatpush1.bf16.xpose.msra.mxu0 %v617
      %621 = vmatprep.subr.bf16.mxu0 0
      %622 = vmatpush1.bf16.xpose.msra.mxu0 0
      %623 = vmatprep.subr.bf16.mxu0 0
      %624 = vmatpush1.bf16.xpose.msra.mxu0 0
      %625 = vmatprep.subr.bf16.mxu0 0
      %626 = vmatpush1.bf16.xpose.msra.mxu0 0
      %627 = vmatprep.subr.bf16.mxu0 0
      %628 = vmatpush1.bf16.xpose.msra.mxu0 0
      %629 = vmatprep.subr.bf16.mxu0 0
      %630 = vmatpush1.bf16.xpose.msra.mxu0 0
      %631 = vmatprep.subr.bf16.mxu0 0
      %632 = vmatpush1.bf16.xpose.msra.mxu0 0
      %633 = vmatprep.subr.bf16.mxu0 0
      %634 = vmatpush1.bf16.xpose.msra.mxu0 0
      %635 = vmatprep.subr.bf16.mxu0 0
      %636 = vmatpush1.bf16.xpose.msra.mxu0 0
      %637 = vmatprep.subr.bf16.mxu0 0
      %638 = vmatpush1.bf16.xpose.msra.mxu0 0
      %639 = vmatprep.subr.bf16.mxu0 0
      %640 = vmatpush1.bf16.xpose.msra.mxu0 0
      %641 = vmatprep.subr.bf16.mxu0 0
      %642 = vmatpush1.bf16.xpose.msra.mxu0 0
      %643 = vmatprep.subr.bf16.mxu0 0
      %644 = vmatpush1.bf16.xpose.msra.mxu0 0
      %645 = vmatprep.subr.bf16.mxu0 0
      %646 = vmatpush1.bf16.xpose.msra.mxu0 0
      %647 = vmatprep.subr.bf16.mxu0 0
      %648 = vmatpush1.bf16.xpose.msra.mxu0 0
      %649 = vmatprep.subr.bf16.mxu0 0
      %650 = vmatpush1.bf16.xpose.msra.mxu0 0
      %651 = vmatprep.mubr.bf16.mxu0 0
      %652 = vmatmul.mubr.bf16.gmra.mrb[0].mxu0 %v614
      %v653 = vpop.f32.mrb[0].mxu0
      %v654 = vadd.f32 %v607, %v653
      %v655 = vpop.f32.mrb[0].mxu0
      %v656 = vpop.f32.mrb[0].mxu0
      %v657 = vpop.f32.mrb[0].mxu0
      %658 = vdwg.mxu0
      %vm659 = vcmask 64512
      %v660 = vsel %vm659, %v654, -inf
      %661 = vmax.xlane.f32.xlu0 %v660
      %v662 = vpop.xlane.xlu0 %661
      %v663 = vsub.f32 %v654, %v662
      %v664 = vmul.f32 %v663, 1.442695
      %v665 = vpow.pop %v664
      %v666 = vsel %vm659, %v665, 0.0
      %667 = vadd.xlane.f32.xlu0 %v666
      %v668 = vpop.xlane.xlu0 %667
      %v669 = vrcp.pop %v668
      %v670 = vmul.f32 %v665, %v669
      %v671 = vpack.c.bf16 %v670, %v670
      %672 = vrot.lane.b32.xlu0 %v601, 64
      %v673 = vpop.permute.xlu0 %672
      %v675 = vsel %vm659, %v671, 0
      %vm677 = vcmask 1043456
      %v679 = vsel %vm677, %v673, 0
      %681 = vmatprep.subr.bf16.mxu0 0
      %682 = vmatpush1.bf16.msra.mxu0 %v679
      %683 = vmatprep.subr.bf16.mxu0 0
      %684 = vmatpush1.bf16.msra.mxu0 0
      %685 = vmatprep.subr.bf16.mxu0 0
      %686 = vmatpush1.bf16.msra.mxu0 0
      %687 = vmatprep.subr.bf16.mxu0 0
      %688 = vmatpush1.bf16.msra.mxu0 0
      %689 = vmatprep.subr.bf16.mxu0 0
      %690 = vmatpush1.bf16.msra.mxu0 0
      %691 = vmatprep.subr.bf16.mxu0 0
      %692 = vmatpush1.bf16.msra.mxu0 0
      %693 = vmatprep.subr.bf16.mxu0 0
      %694 = vmatpush1.bf16.msra.mxu0 0
      %695 = vmatprep.subr.bf16.mxu0 0
      %696 = vmatpush1.bf16.msra.mxu0 0
      %697 = vmatprep.subr.bf16.mxu0 0
      %698 = vmatpush1.bf16.msra.mxu0 0
      %699 = vmatprep.subr.bf16.mxu0 0
      %700 = vmatpush1.bf16.msra.mxu0 0
      %701 = vmatprep.subr.bf16.mxu0 0
      %702 = vmatpush1.bf16.msra.mxu0 0
      %703 = vmatprep.subr.bf16.mxu0 0
      %704 = vmatpush1.bf16.msra.mxu0 0
      %705 = vmatprep.subr.bf16.mxu0 0
      %706 = vmatpush1.bf16.msra.mxu0 0
      %707 = vmatprep.subr.bf16.mxu0 0
      %708 = vmatpush1.bf16.msra.mxu0 0
      %709 = vmatprep.subr.bf16.mxu0 0
      %710 = vmatpush1.bf16.msra.mxu0 0
      %711 = vmatprep.subr.bf16.mxu0 0
      %712 = vmatpush1.bf16.msra.mxu0 0
      %713 = vmatprep.mubr.bf16.mxu0 0
      %714 = vmatmul.mubr.bf16.gmra.mrb[0].mxu0 %v675
      %v715 = vpop.f32.mrb[0].mxu0
      %v716 = vadd.f32 0.0, %v715
      %v717 = vpop.f32.mrb[0].mxu0
      %v718 = vpop.f32.mrb[0].mxu0
      %v719 = vpop.f32.mrb[0].mxu0
      %720 = vdwg.mxu0
      %721 = vrot.lane.b32.xlu0 %v601, 112
      %v722 = vpop.permute.xlu0 %721
      %723 = vrot.lane.b32.xlu0 %v601, 80
      %v724 = vpop.permute.xlu0 %723
      %v726 = vsel %vm612, %v722, 0
      %v729 = vsel %vm612, %v724, 0
      %731 = vmatprep.subr.bf16.mxu0 0
      %732 = vmatpush1.bf16.xpose.msra.mxu0 %v729
      %733 = vmatprep.subr.bf16.mxu0 0
      %734 = vmatpush1.bf16.xpose.msra.mxu0 0
      %735 = vmatprep.subr.bf16.mxu0 0
      %736 = vmatpush1.bf16.xpose.msra.mxu0 0
      %737 = vmatprep.subr.bf16.mxu0 0
      %738 = vmatpush1.bf16.xpose.msra.mxu0 0
      %739 = vmatprep.subr.bf16.mxu0 0
      %740 = vmatpush1.bf16.xpose.msra.mxu0 0
      %741 = vmatprep.subr.bf16.mxu0 0
      %742 = vmatpush1.bf16.xpose.msra.mxu0 0
      %743 = vmatprep.subr.bf16.mxu0 0
      %744 = vmatpush1.bf16.xpose.msra.mxu0 0
      %745 = vmatprep.subr.bf16.mxu0 0
      %746 = vmatpush1.bf16.xpose.msra.mxu0 0
      %747 = vmatprep.subr.bf16.mxu0 0
      %748 = vmatpush1.bf16.xpose.msra.mxu0 0
      %749 = vmatprep.subr.bf16.mxu0 0
      %750 = vmatpush1.bf16.xpose.msra.mxu0 0
      %751 = vmatprep.subr.bf16.mxu0 0
      %752 = vmatpush1.bf16.xpose.msra.mxu0 0
      %753 = vmatprep.subr.bf16.mxu0 0
      %754 = vmatpush1.bf16.xpose.msra.mxu0 0
      %755 = vmatprep.subr.bf16.mxu0 0
      %756 = vmatpush1.bf16.xpose.msra.mxu0 0
      %757 = vmatprep.subr.bf16.mxu0 0
      %758 = vmatpush1.bf16.xpose.msra.mxu0 0
      %759 = vmatprep.subr.bf16.mxu0 0
      %760 = vmatpush1.bf16.xpose.msra.mxu0 0
      %761 = vmatprep.subr.bf16.mxu0 0
      %762 = vmatpush1.bf16.xpose.msra.mxu0 0
      %763 = vmatprep.mubr.bf16.mxu0 0
      %764 = vmatmul.mubr.bf16.gmra.mrb[0].mxu0 %v726
      %v765 = vpop.f32.mrb[0].mxu0
      %v766 = vadd.f32 %v607, %v765
      %v767 = vpop.f32.mrb[0].mxu0
      %v768 = vpop.f32.mrb[0].mxu0
      %v769 = vpop.f32.mrb[0].mxu0
      %770 = vdwg.mxu0
      %v771 = vsel %vm659, %v766, -inf
      %772 = vmax.xlane.f32.xlu0 %v771
      %v773 = vpop.xlane.xlu0 %772
      %v774 = vsub.f32 %v766, %v773
      %v775 = vmul.f32 %v774, 1.442695
      %v776 = vpow.pop %v775
      %v777 = vsel %vm659, %v776, 0.0
      %778 = vadd.xlane.f32.xlu0 %v777
      %v779 = vpop.xlane.xlu0 %778
      %v780 = vrcp.pop %v779
      %v781 = vmul.f32 %v776, %v780
      %v782 = vpack.c.bf16 %v781, %v781
      %783 = vrot.lane.b32.xlu0 %v601, 48
      %v784 = vpop.permute.xlu0 %783
      %v786 = vsel %vm659, %v782, 0
      %v789 = vsel %vm677, %v784, 0
      %791 = vmatprep.subr.bf16.mxu0 0
      %792 = vmatpush1.bf16.msra.mxu0 %v789
      %793 = vmatprep.subr.bf16.mxu0 0
      %794 = vmatpush1.bf16.msra.mxu0 0
      %795 = vmatprep.subr.bf16.mxu0 0
      %796 = vmatpush1.bf16.msra.mxu0 0
      %797 = vmatprep.subr.bf16.mxu0 0
      %798 = vmatpush1.bf16.msra.mxu0 0
      %799 = vmatprep.subr.bf16.mxu0 0
      %800 = vmatpush1.bf16.msra.mxu0 0
      %801 = vmatprep.subr.bf16.mxu0 0
      %802 = vmatpush1.bf16.msra.mxu0 0
      %803 = vmatprep.subr.bf16.mxu0 0
      %804 = vmatpush1.bf16.msra.mxu0 0
      %805 = vmatprep.subr.bf16.mxu0 0
      %806 = vmatpush1.bf16.msra.mxu0 0
      %807 = vmatprep.subr.bf16.mxu0 0
      %808 = vmatpush1.bf16.msra.mxu0 0
      %809 = vmatprep.subr.bf16.mxu0 0
      %810 = vmatpush1.bf16.msra.mxu0 0
      %811 = vmatprep.subr.bf16.mxu0 0
      %812 = vmatpush1.bf16.msra.mxu0 0
      %813 = vmatprep.subr.bf16.mxu0 0
      %814 = vmatpush1.bf16.msra.mxu0 0
      %815 = vmatprep.subr.bf16.mxu0 0
      %816 = vmatpush1.bf16.msra.mxu0 0
      %817 = vmatprep.subr.bf16.mxu0 0
      %818 = vmatpush1.bf16.msra.mxu0 0
      %819 = vmatprep.subr.bf16.mxu0 0
      %820 = vmatpush1.bf16.msra.mxu0 0
      %821 = vmatprep.subr.bf16.mxu0 0
      %822 = vmatpush1.bf16.msra.mxu0 0
      %823 = vmatprep.mubr.bf16.mxu0 0
      %824 = vmatmul.mubr.bf16.gmra.mrb[0].mxu0 %v786
      %v825 = vpop.f32.mrb[0].mxu0
      %v826 = vadd.f32 0.0, %v825
      %v827 = vpop.f32.mrb[0].mxu0
      %v828 = vpop.f32.mrb[0].mxu0
      %v829 = vpop.f32.mrb[0].mxu0
      %830 = vdwg.mxu0
      %832 = vrot.lane.b32.xlu0 %v826, 16
      %v833 = vpop.permute.xlu0 %832
      %v835 = vsel %vm612, %v716, %v833
      %v836 = vpack.c.bf16 %v835, %v835
      %v837 = vld [vmem:[%s6] sm:$0xf]
      %v838 = vld [vmem:[%s6 + $0x4] sm:$0xf]
      %v839 = vld [vmem:[%s6 + $0x8] sm:$0xf]
      %v840 = vld [vmem:[%s6 + $0xc] sm:$0xf]
      %v841 = vld [vmem:[%s7] sm:$0x1]
      %v843 = vlaneseq
      %v844 = vshrl.u32 %v843, 7
      %v845 = vsub.s32 0, %v844
      %v846 = vrot.slane %v841, %v845
      %v852 = vunpack.c.l.b16 %v837
      %v853 = vunpack.c.l.b16 %v838
      %v854 = vunpack.c.l.b16 %v839
      %v855 = vunpack.c.l.b16 %v840
      %v856 = vpack.c.b16 %v853, %v852
      %v857 = vpack.c.b16 %v855, %v854
      %v861 = vsel %vm557, %v836, 0
      %863 = vmatprep.subr.bf16.mxu0 0
      %864 = vmatpush1.bf16.msra.mxu0 %v856
      %865 = vmatprep.subr.bf16.mxu0 0
      %866 = vmatpush1.bf16.msra.mxu0 %v857
      %867 = vmatprep.subr.bf16.mxu0 0
      %868 = vmatpush1.bf16.msra.mxu0 0
      %869 = vmatprep.subr.bf16.mxu0 0
      %870 = vmatpush1.bf16.msra.mxu0 0
      %871 = vmatprep.subr.bf16.mxu0 0
      %872 = vmatpush1.bf16.msra.mxu0 0
      %873 = vmatprep.subr.bf16.mxu0 0
      %874 = vmatpush1.bf16.msra.mxu0 0
      %875 = vmatprep.subr.bf16.mxu0 0
      %876 = vmatpush1.bf16.msra.mxu0 0
      %877 = vmatprep.subr.bf16.mxu0 0
      %878 = vmatpush1.bf16.msra.mxu0 0
      %879 = vmatprep.subr.bf16.mxu0 0
      %880 = vmatpush1.bf16.msra.mxu0 0
      %881 = vmatprep.subr.bf16.mxu0 0
      %882 = vmatpush1.bf16.msra.mxu0 0
      %883 = vmatprep.subr.bf16.mxu0 0
      %884 = vmatpush1.bf16.msra.mxu0 0
      %885 = vmatprep.subr.bf16.mxu0 0
      %886 = vmatpush1.bf16.msra.mxu0 0
      %887 = vmatprep.subr.bf16.mxu0 0
      %888 = vmatpush1.bf16.msra.mxu0 0
      %889 = vmatprep.subr.bf16.mxu0 0
      %890 = vmatpush1.bf16.msra.mxu0 0
      %891 = vmatprep.subr.bf16.mxu0 0
      %892 = vmatpush1.bf16.msra.mxu0 0
      %893 = vmatprep.subr.bf16.mxu0 0
      %894 = vmatpush1.bf16.msra.mxu0 0
      %895 = vmatprep.mubr.bf16.mxu0 0
      %896 = vmatmul.mubr.bf16.gmra.mrb[0].mxu0 %v861
      %v897 = vpop.f32.mrb[0].mxu0
      %v898 = vadd.f32 %v846, %v897
      %v899 = vpop.f32.mrb[0].mxu0
      %v900 = vpop.f32.mrb[0].mxu0
      %v901 = vpop.f32.mrb[0].mxu0
      %902 = vdwg.mxu0
      %v903 = vadd.f32 %v898, %v533
      %v904 = vld [vmem:[%s8] sm:$0x1]
      %v905 = vld [vmem:[%s9] sm:$0x1]
      %v906 = vsel %vm557, %v903, 0.0
      %907 = vadd.xlane.f32.xlu0 %v906
      %v908 = vpop.xlane.xlu0 %907
      %v909 = vrcp.pop 32.0
      %v910 = vmul.f32 %v908, %v909
      %v911 = vsub.f32 %v903, %v910
      %v912 = vmul.f32 %v911, %v911
      %v913 = vsel %vm557, %v912, 0.0
      %914 = vadd.xlane.f32.xlu0 %v913
      %v915 = vpop.xlane.xlu0 %914
      %v916 = vmul.f32 %v915, %v909
      %v917 = vadd.f32 %v916, 1e-12
      %v918 = vrsqrt.pop %v917
      %v919 = vmul.f32 %v911, %v918
      %v921 = vlaneseq
      %v922 = vshrl.u32 %v921, 7
      %v923 = vsub.s32 0, %v922
      %v924 = vrot.slane %v904, %v923
      %v926 = vmul.f32 %v919, %v924
      %v928 = vlaneseq
      %v929 = vshrl.u32 %v928, 7
      %v930 = vsub.s32 0, %v929
      %v931 = vrot.slane %v905, %v930
      %v933 = vadd.f32 %v926, %v931
      %v934 = vpack.c.bf16 %v933, %v933
      %v935 = vld [vmem:[%s10] sm:$0xf]
      %v936 = vld [vmem:[%s10 + $0x4] sm:$0xf]
      %v937 = vld [vmem:[%s10 + $0x8] sm:$0xf]
      %v938 = vld [vmem:[%s10 + $0xc] sm:$0xf]
      %v939 = vld [vmem:[%s11] sm:$0x1]
      %v941 = vlaneseq
      %v942 = vshrl.u32 %v941, 7
      %v943 = vsub.s32 0, %v942
      %v944 = vrot.slane %v939, %v943
      %v950 = vunpack.c.l.b16 %v935
      %v951 = vunpack.c.l.b16 %v936
      %v952 = vunpack.c.l.b16 %v937
      %v953 = vunpack.c.l.b16 %v938
      %v954 = vpack.c.b16 %v951, %v950
      %v955 = vpack.c.b16 %v953, %v952
      %v959 = vsel %vm557, %v934, 0
      %961 = vmatprep.subr.bf16.mxu0 0
      %962 = vmatpush1.bf16.msra.mxu0 %v954
      %963 = vmatprep.subr.bf16.mxu0 0
      %964 = vmatpush1.bf16.msra.mxu0 %v955
      %965 = vmatprep.subr.bf16.mxu0 0
      %966 = vmatpush1.bf16.msra.mxu0 0
      %967 = vmatprep.subr.bf16.mxu0 0
      %968 = vmatpush1.bf16.msra.mxu0 0
      %969 = vmatprep.subr.bf16.mxu0 0
      %970 = vmatpush1.bf16.msra.mxu0 0
      %971 = vmatprep.subr.bf16.mxu0 0
      %972 = vmatpush1.bf16.msra.mxu0 0
      %973 = vmatprep.subr.bf16.mxu0 0
      %974 = vmatpush1.bf16.msra.mxu0 0
      %975 = vmatprep.subr.bf16.mxu0 0
      %976 = vmatpush1.bf16.msra.mxu0 0
      %977 = vmatprep.subr.bf16.mxu0 0
      %978 = vmatpush1.bf16.msra.mxu0 0
      %979 = vmatprep.subr.bf16.mxu0 0
      %980 = vmatpush1.bf16.msra.mxu0 0
      %981 = vmatprep.subr.bf16.mxu0 0
      %982 = vmatpush1.bf16.msra.mxu0 0
      %983 = vmatprep.subr.bf16.mxu0 0
      %984 = vmatpush1.bf16.msra.mxu0 0
      %985 = vmatprep.subr.bf16.mxu0 0
      %986 = vmatpush1.bf16.msra.mxu0 0
      %987 = vmatprep.subr.bf16.mxu0 0
      %988 = vmatpush1.bf16.msra.mxu0 0
      %989 = vmatprep.subr.bf16.mxu0 0
      %990 = vmatpush1.bf16.msra.mxu0 0
      %991 = vmatprep.subr.bf16.mxu0 0
      %992 = vmatpush1.bf16.msra.mxu0 0
      %993 = vmatprep.mubr.bf16.mxu0 0
      %994 = vmatmul.mubr.bf16.gmra.mrb[0].mxu0 %v959
      %v995 = vpop.f32.mrb[0].mxu0
      %v996 = vadd.f32 %v944, %v995
      %v997 = vpop.f32.mrb[0].mxu0
      %v998 = vpop.f32.mrb[0].mxu0
      %v999 = vpop.f32.mrb[0].mxu0
      %1000 = vdwg.mxu0
      %v1001 = vmul.f32 %v996, 0.5
      %v1002 = vmul.f32 %v996, 0.044715
      %v1003 = vmul.f32 %v1002, %v996
      %v1004 = vmul.f32 %v1003, %v996
      %v1005 = vadd.f32 %v996, %v1004
      %v1006 = vmul.f32 %v1005, 0.7978846
      %v1007 = vtanh.pop %v1006
      %v1008 = vadd.f32 %v1007, 1.0
      %v1009 = vmul.f32 %v1001, %v1008
      %v1010 = vpack.c.bf16 %v1009, %v1009
      %v1011 = vld [vmem:[%s12] sm:$0xf]
      %v1012 = vld [vmem:[%s12 + $0x4] sm:$0xf]
      %v1013 = vld [vmem:[%s12 + $0x8] sm:$0xf]
      %v1014 = vld [vmem:[%s12 + $0xc] sm:$0xf]
      %v1015 = vld [vmem:[%s12 + $0x10] sm:$0xf]
      %v1016 = vld [vmem:[%s12 + $0x14] sm:$0xf]
      %v1017 = vld [vmem:[%s12 + $0x18] sm:$0xf]
      %v1018 = vld [vmem:[%s12 + $0x1c] sm:$0xf]
      %v1019 = vld [vmem:[%s13] sm:$0x1]
      %v1021 = vlaneseq
      %v1022 = vshrl.u32 %v1021, 7
      %v1023 = vsub.s32 0, %v1022
      %v1024 = vrot.slane %v1019, %v1023
      %v1034 = vunpack.c.l.b16 %v1011
      %v1035 = vunpack.c.l.b16 %v1012
      %v1036 = vunpack.c.l.b16 %v1013
      %v1037 = vunpack.c.l.b16 %v1014
      %v1038 = vunpack.c.l.b16 %v1015
      %v1039 = vunpack.c.l.b16 %v1016
      %v1040 = vunpack.c.l.b16 %v1017
      %v1041 = vunpack.c.l.b16 %v1018
      %v1042 = vpack.c.b16 %v1035, %v1034
      %v1043 = vpack.c.b16 %v1037, %v1036
      %v1044 = vpack.c.b16 %v1039, %v1038
      %v1045 = vpack.c.b16 %v1041, %v1040
      %vm1050 = vcmask 523264
      %v1052 = vsel %vm1050, %v1010, 0
      %1054 = vmatprep.subr.bf16.mxu0 0
      %1055 = vmatpush1.bf16.msra.mxu0 %v1042
      %1056 = vmatprep.subr.bf16.mxu0 0
      %1057 = vmatpush1.bf16.msra.mxu0 %v1043
      %1058 = vmatprep.subr.bf16.mxu0 0
      %1059 = vmatpush1.bf16.msra.mxu0 %v1044
      %1060 = vmatprep.subr.bf16.mxu0 0
      %1061 = vmatpush1.bf16.msra.mxu0 %v1045
      %1062 = vmatprep.subr.bf16.mxu0 0
      %1063 = vmatpush1.bf16.msra.mxu0 0
      %1064 = vmatprep.subr.bf16.mxu0 0
      %1065 = vmatpush1.bf16.msra.mxu0 0
      %1066 = vmatprep.subr.bf16.mxu0 0
      %1067 = vmatpush1.bf16.msra.mxu0 0
      %1068 = vmatprep.subr.bf16.mxu0 0
      %1069 = vmatpush1.bf16.msra.mxu0 0
      %1070 = vmatprep.subr.bf16.mxu0 0
      %1071 = vmatpush1.bf16.msra.mxu0 0
      %1072 = vmatprep.subr.bf16.mxu0 0
      %1073 = vmatpush1.bf16.msra.mxu0 0
      %1074 = vmatprep.subr.bf16.mxu0 0
      %1075 = vmatpush1.bf16.msra.mxu0 0
      %1076 = vmatprep.subr.bf16.mxu0 0
      %1077 = vmatpush1.bf16.msra.mxu0 0
      %1078 = vmatprep.subr.bf16.mxu0 0
      %1079 = vmatpush1.bf16.msra.mxu0 0
      %1080 = vmatprep.subr.bf16.mxu0 0
      %1081 = vmatpush1.bf16.msra.mxu0 0
      %1082 = vmatprep.subr.bf16.mxu0 0
      %1083 = vmatpush1.bf16.msra.mxu0 0
      %1084 = vmatprep.subr.bf16.mxu0 0
      %1085 = vmatpush1.bf16.msra.mxu0 0
      %1086 = vmatprep.mubr.bf16.mxu0 0
      %1087 = vmatmul.mubr.bf16.gmra.mrb[0].mxu0 %v1052
      %v1088 = vpop.f32.mrb[0].mxu0
      %v1089 = vadd.f32 %v1024, %v1088
      %v1090 = vpop.f32.mrb[0].mxu0
      %v1091 = vpop.f32.mrb[0].mxu0
      %v1092 = vpop.f32.mrb[0].mxu0
      %1093 = vdwg.mxu0
      %v1094 = vadd.f32 %v1089, %v933
      %v1095 = vld [vmem:[%s14] sm:$0x1]
      %v1096 = vld [vmem:[%s15] sm:$0x1]
      %v1097 = vsel %vm557, %v1094, 0.0
      %1098 = vadd.xlane.f32.xlu0 %v1097
      %v1099 = vpop.xlane.xlu0 %1098
      %v1100 = vmul.f32 %v1099, %v909
      %v1101 = vsub.f32 %v1094, %v1100
      %v1102 = vmul.f32 %v1101, %v1101
      %v1103 = vsel %vm557, %v1102, 0.0
      %1104 = vadd.xlane.f32.xlu0 %v1103
      %v1105 = vpop.xlane.xlu0 %1104
      %v1106 = vmul.f32 %v1105, %v909
      %v1107 = vadd.f32 %v1106, 1e-12
      %v1108 = vrsqrt.pop %v1107
      %v1109 = vmul.f32 %v1101, %v1108
      %v1111 = vlaneseq
      %v1112 = vshrl.u32 %v1111, 7
      %v1113 = vsub.s32 0, %v1112
      %v1114 = vrot.slane %v1095, %v1113
      %v1116 = vmul.f32 %v1109, %v1114
      %v1118 = vlaneseq
      %v1119 = vshrl.u32 %v1118, 7
      %v1120 = vsub.s32 0, %v1119
      %v1121 = vrot.slane %v1096, %v1120
      %v1123 = vadd.f32 %v1116, %v1121
      %v1124 = vpack.c.bf16 %v1123, %v1123
      %vm1125 = vcmask 257024
      %1126 = vst.msk [vmem:[%s530] sm:$0xf] %vm1125, %v1124
      %p1127 = scmp.lt.s32.totalorder %s27, 1
      %s1128 = scalar_select %p1127, %s27, 1
      %s1129 = smul.addr %s1128, 4
      %s1130 = scalar_lea.vmem %s16, %s1129
      // Predicated region
      $region85: #{bert_forward.4} parent=83 // pred_check
        %p1131 = pneg %p391
      $region86: #{bert_forward.4} parent=83 // pred_check_branch
        %1133 = sbr.rel (%p1131) target = $region88
      $region87: #{bert_forward.4} parent=83 // pred_region
        _
      $region88: #{bert_forward.4} parent=83 // pred_fallthru
        _
    $region84: #{bert_forward.4} parent=5 // pred_fallthru
      _
    %p1134 = scmp.le.s32.totalorder 2, %s22
    // Predicated region
    $region89: #{bert_forward.4} parent=5 // pred_check
      %p1135 = pneg %p1134
    $region90: #{bert_forward.4} parent=5 // pred_check_branch
      %1137 = sbr.rel (%p1135) target = $region92
    $region91: #{bert_forward.4} parent=5 // pred_region
      %s1138 = ssub.s32 %s22, 2
      // Predicated region
      $region93: #{bert_forward.4} parent=91 // pred_check
        %p1139 = pneg %p397
      $region94: #{bert_forward.4} parent=91 // pred_check_branch
        %1141 = sbr.rel (%p1139) target = $region96
      $region95: #{bert_forward.4} parent=91 // pred_region
        %p1142 = scmp.lt.s32.totalorder %s28, 1
        %s1143 = scalar_select %p1142, %s28, 1
        %s1144 = smul.addr %s1143, 4
        %s1145 = scalar_lea.vmem %s16, %s1144
      $region96: #{bert_forward.4} parent=91 // pred_fallthru
        _
    $region92: #{bert_forward.4} parent=5 // pred_fallthru
      _
  $region6: #{bert_forward.4} parent=0 // loop_footer
    %s26 = sadd.s32 1, %s22
  $region7: #{bert_forward.4} parent=0 // loop_footer_branch
    %21 = sbr.rel target = $region3
  $region8: #{bert_forward.4} parent=0 // loop_exit
    _

// kernel: bert_forward.3
$region0: #{bert_forward.3}
  #allocation0 [shape = 'u32[]', space=smem, size = 0x4, offset = 0x4, fixed_abs, tag = 'smem constant byte address 0x4 - core index']
  #allocation1 [shape = 'u32[144,128]{1,0:T(1,128)}', space=vmem, size = 0x12000, scoped, tag = 'internal scratch']
  %s0 = inlined_call_operand.vmem [shape: bf16[2,8,32], index: 0, kind: input, shape index: {}]
  %s1 = inlined_call_operand.vmem [shape: f32[2,1,8], index: 1, kind: input, shape index: {}]
  %s2 = inlined_call_operand.vmem [shape: f32[1,32], index: 2, kind: input, shape index: {}]
  %s3 = inlined_call_operand.vmem [shape: f32[1,32], index: 3, kind: input, shape index: {}]
  %s4 = inlined_call_operand.vmem [shape: bf16[32,96], index: 4, kind: input, shape index: {}]
  %s5 = inlined_call_operand.vmem [shape: f32[1,96], index: 5, kind: input, shape index: {}]
  %s6 = inlined_call_operand.vmem [shape: bf16[32,32], index: 6, kind: input, shape index: {}]
  %s7 = inlined_call_operand.vmem [shape: f32[1,32], index: 7, kind: input, shape index: {}]
  %s8 = inlined_call_operand.vmem [shape: f32[1,32], index: 8, kind: input, shape index: {}]
  %s9 = inlined_call_operand.vmem [shape: f32[1,32], index: 9, kind: input, shape index: {}]
  %s10 = inlined_call_operand.vmem [shape: bf16[32,64], index: 10, kind: input, shape index: {}]
  %s11 = inlined_call_operand.vmem [shape: f32[1,64], index: 11, kind: input, shape index: {}]
  %s12 = inlined_call_operand.vmem [shape: bf16[64,32], index: 12, kind: input, shape index: {}]
  %s13 = inlined_call_operand.vmem [shape: f32[1,32], index: 13, kind: input, shape index: {}]
  %s14 = inlined_call_operand.vmem [shape: f32[1,32], index: 14, kind: input, shape index: {}]
  %s15 = inlined_call_operand.vmem [shape: f32[1,32], index: 15, kind: input, shape index: {}]
  %s16 = inlined_call_operand.vmem [shape: bf16[2,8,32], index: 16, kind: output, shape index: {}]
  %s17 = sld [smem:[#allocation0]]
  $region97: #{bert_forward.3} parent=0
    _
  %s19 = ssub.s32 1, %s17
  %s20 = scalar_select 0, %s19, %s17
  loop: start=0, step=1, limit=4
  $region2: #{bert_forward.3} parent=0 // loop_pre_header
    _
  $region3: #{bert_forward.3} parent=0 // loop_header
    %s22 = sphi 0, %s26
    %p23 = scmp.ge.s32.totalorder %s22, 4
    %s32 = sphi 0, %s34
    %s35 = sphi 0, %s32
    %s36 = sphi 0, %s35
    %s52 = sphi 0, %s36
    %s58 = sphi 0, %s60
    %s61 = sphi 0, %s58
    %s62 = sphi 0, %s61
    %s78 = sphi 0, %s62
    %s82 = sphi 0, %s82
    %s84 = sphi 0, %s82
    %s85 = sphi 0, %s84
    %s99 = sphi 0, %s85
    %s103 = sphi 0, %s103
    %s105 = sphi 0, %s103
    %s106 = sphi 0, %s105
    %s120 = sphi 0, %s106
    %s124 = sphi 0, %s124
    %s126 = sphi 0, %s124
    %s127 = sphi 0, %s126
    %s141 = sphi 0, %s127
    %s145 = sphi 0, %s145
    %s147 = sphi 0, %s145
    %s148 = sphi 0, %s147
    %s162 = sphi 0, %s148
    %s166 = sphi 0, %s166
    %s168 = sphi 0, %s166
    %s169 = sphi 0, %s168
    %s183 = sphi 0, %s169
    %s187 = sphi 0, %s187
    %s189 = sphi 0, %s187
    %s190 = sphi 0, %s189
    %s204 = sphi 0, %s190
    %s208 = sphi 0, %s208
    %s210 = sphi 0, %s208
    %s211 = sphi 0, %s210
    %s225 = sphi 0, %s211
    %s229 = sphi 0, %s229
    %s231 = sphi 0, %s229
    %s232 = sphi 0, %s231
    %s246 = sphi 0, %s232
    %s250 = sphi 0, %s250
    %s252 = sphi 0, %s250
    %s253 = sphi 0, %s252
    %s267 = sphi 0, %s253
    %s271 = sphi 0, %s271
    %s273 = sphi 0, %s271
    %s274 = sphi 0, %s273
    %s288 = sphi 0, %s274
    %s292 = sphi 0, %s292
    %s294 = sphi 0, %s292
    %s295 = sphi 0, %s294
    %s309 = sphi 0, %s295
    %s313 = sphi 0, %s313
    %s315 = sphi 0, %s313
    %s316 = sphi 0, %s315
    %s330 = sphi 0, %s316
    %s334 = sphi 0, %s334
    %s336 = sphi 0, %s334
    %s337 = sphi 0, %s336
    %s351 = sphi 0, %s337
    %s355 = sphi 0, %s355
    %s357 = sphi 0, %s355
    %s358 = sphi 0, %s357
    %s372 = sphi 0, %s358
    %s378 = sphi 0, %s380
    %s381 = sphi 0, %s378
    %s382 = sphi 0, %s381
    %s398 = sphi 0, %s382
  $region4: #{bert_forward.3} parent=0 // loop_header_branch
    %25 = sbr.rel (%p23) target = $region8
  $region5: #{bert_forward.3} parent=0 // loop_body
    %s27 = ssub.s32 %s22, 1
    %s28 = ssub.s32 %s22, 2
    %s29 = sadd.s32 %s22, 1
    %s30 = ssub.s32 %s22, %s29
    %p31 = scmp.eq.s32.totalorder %s30, 0
    %s33 = sadd.s32 %s32, 1
    %s34 = scalar_select %p31, %s32, %s33
    %p37 = pneg %p31
    %p38 = scmp.eq.s32.totalorder %s22, 1
    %p39 = por %p37, %p38
    %p40 = scmp.ne.s32.totalorder %s32, %s35
    %p41 = scmp.eq.s32.totalorder %s22, 0
    %p42 = por %p40, %p41
    %p43 = scmp.ne.s32.totalorder %s32, %s35
    %p44 = scmp.eq.s32.totalorder %s27, 1
    %p45 = por %p43, %p44
    %p46 = scmp.ne.s32.totalorder %s35, %s36
    %p47 = scmp.eq.s32.totalorder %s27, 0
    %p48 = por %p46, %p47
    %p49 = scmp.ne.s32.totalorder %s35, %s36
    %p50 = scmp.eq.s32.totalorder %s28, 1
    %p51 = por %p49, %p50
    %p53 = scmp.ne.s32.totalorder %s36, %s52
    %p54 = scmp.eq.s32.totalorder %s28, 0
    %p55 = por %p53, %p54
    %s56 = ssub.s32 %s22, %s29
    %p57 = scmp.eq.s32.totalorder %s56, 0
    %s59 = sadd.s32 %s58, 1
    %s60 = scalar_select %p57, %s58, %s59
    %p63 = pneg %p57
    %p64 = scmp.eq.s32.totalorder %s22, 1
    %p65 = por %p63, %p64
    %p66 = scmp.ne.s32.totalorder %s58, %s61
    %p67 = scmp.eq.s32.totalorder %s22, 0
    %p68 = por %p66, %p67
    %p69 = scmp.ne.s32.totalorder %s58, %s61
    %p70 = scmp.eq.s32.totalorder %s27, 1
    %p71 = por %p69, %p70
    %p72 = scmp.ne.s32.totalorder %s61, %s62
    %p73 = scmp.eq.s32.totalorder %s27, 0
    %p74 = por %p72, %p73
    %p75 = scmp.ne.s32.totalorder %s61, %s62
    %p76 = scmp.eq.s32.totalorder %s28, 1
    %p77 = por %p75, %p76
    %p79 = scmp.ne.s32.totalorder %s62, %s78
    %p80 = scmp.eq.s32.totalorder %s28, 0
    %p81 = por %p79, %p80
    %s83 = sadd.s32 %s82, 1
    %p86 = scmp.eq.s32.totalorder %s22, 1
    %p87 = scmp.ne.s32.totalorder %s82, %s84
    %p88 = scmp.eq.s32.totalorder %s22, 0
    %p89 = por %p87, %p88
    %p90 = scmp.ne.s32.totalorder %s82, %s84
    %p91 = scmp.eq.s32.totalorder %s27, 1
    %p92 = por %p90, %p91
    %p93 = scmp.ne.s32.totalorder %s84, %s85
    %p94 = scmp.eq.s32.totalorder %s27, 0
    %p95 = por %p93, %p94
    %p96 = scmp.ne.s32.totalorder %s84, %s85
    %p97 = scmp.eq.s32.totalorder %s28, 1
    %p98 = por %p96, %p97
    %p100 = scmp.ne.s32.totalorder %s85, %s99
    %p101 = scmp.eq.s32.totalorder %s28, 0
    %p102 = por %p100, %p101
    %s104 = sadd.s32 %s103, 1
    %p107 = scmp.eq.s32.totalorder %s22, 1
    %p108 = scmp.ne.s32.totalorder %s103, %s105
    %p109 = scmp.eq.s32.totalorder %s22, 0
    %p110 = por %p108, %p109
    %p111 = scmp.ne.s32.totalorder %s103, %s105
    %p112 = scmp.eq.s32.totalorder %s27, 1
    %p113 = por %p111, %p112
    %p114 = scmp.ne.s32.totalorder %s105, %s106
    %p115 = scmp.eq.s32.totalorder %s27, 0
    %p116 = por %p114, %p115
    %p117 = scmp.ne.s32.totalorder %s105, %s106
    %p118 = scmp.eq.s32.totalorder %s28, 1
    %p119 = por %p117, %p118
    %p121 = scmp.ne.s32.totalorder %s106, %s120
    %p122 = scmp.eq.s32.totalorder %s28, 0
    %p123 = por %p121, %p122
    %s125 = sadd.s32 %s124, 1
    %p128 = scmp.eq.s32.totalorder %s22, 1
    %p129 = scmp.ne.s32.totalorder %s124, %s126
    %p130 = scmp.eq.s32.totalorder %s22, 0
    %p131 = por %p129, %p130
    %p132 = scmp.ne.s32.totalorder %s124, %s126
    %p133 = scmp.eq.s32.totalorder %s27, 1
    %p134 = por %p132, %p133
    %p135 = scmp.ne.s32.totalorder %s126, %s127
    %p136 = scmp.eq.s32.totalorder %s27, 0
    %p137 = por %p135, %p136
    %p138 = scmp.ne.s32.totalorder %s126, %s127
    %p139 = scmp.eq.s32.totalorder %s28, 1
    %p140 = por %p138, %p139
    %p142 = scmp.ne.s32.totalorder %s127, %s141
    %p143 = scmp.eq.s32.totalorder %s28, 0
    %p144 = por %p142, %p143
    %s146 = sadd.s32 %s145, 1
    %p149 = scmp.eq.s32.totalorder %s22, 1
    %p150 = scmp.ne.s32.totalorder %s145, %s147
    %p151 = scmp.eq.s32.totalorder %s22, 0
    %p152 = por %p150, %p151
    %p153 = scmp.ne.s32.totalorder %s145, %s147
    %p154 = scmp.eq.s32.totalorder %s27, 1
    %p155 = por %p153, %p154
    %p156 = scmp.ne.s32.totalorder %s147, %s148
    %p157 = scmp.eq.s32.totalorder %s27, 0
    %p158 = por %p156, %p157
    %p159 = scmp.ne.s32.totalorder %s147, %s148
    %p160 = scmp.eq.s32.totalorder %s28, 1
    %p161 = por %p159, %p160
    %p163 = scmp.ne.s32.totalorder %s148, %s162
    %p164 = scmp.eq.s32.totalorder %s28, 0
    %p165 = por %p163, %p164
    %s167 = sadd.s32 %s166, 1
    %p170 = scmp.eq.s32.totalorder %s22, 1
    %p171 = scmp.ne.s32.totalorder %s166, %s168
    %p172 = scmp.eq.s32.totalorder %s22, 0
    %p173 = por %p171, %p172
    %p174 = scmp.ne.s32.totalorder %s166, %s168
    %p175 = scmp.eq.s32.totalorder %s27, 1
    %p176 = por %p174, %p175
    %p177 = scmp.ne.s32.totalorder %s168, %s169
    %p178 = scmp.eq.s32.totalorder %s27, 0
    %p179 = por %p177, %p178
    %p180 = scmp.ne.s32.totalorder %s168, %s169
    %p181 = scmp.eq.s32.totalorder %s28, 1
    %p182 = por %p180, %p181
    %p184 = scmp.ne.s32.totalorder %s169, %s183
    %p185 = scmp.eq.s32.totalorder %s28, 0
    %p186 = por %p184, %p185
    %s188 = sadd.s32 %s187, 1
    %p191 = scmp.eq.s32.totalorder %s22, 1
    %p192 = scmp.ne.s32.totalorder %s187, %s189
    %p193 = scmp.eq.s32.totalorder %s22, 0
    %p194 = por %p192, %p193
    %p195 = scmp.ne.s32.totalorder %s187, %s189
    %p196 = scmp.eq.s32.totalorder %s27, 1
    %p197 = por %p195, %p196
    %p198 = scmp.ne.s32.totalorder %s189, %s190
    %p199 = scmp.eq.s32.totalorder %s27, 0
    %p200 = por %p198, %p199
    %p201 = scmp.ne.s32.totalorder %s189, %s190
    %p202 = scmp.eq.s32.totalorder %s28, 1
    %p203 = por %p201, %p202
    %p205 = scmp.ne.s32.totalorder %s190, %s204
    %p206 = scmp.eq.s32.totalorder %s28, 0
    %p207 = por %p205, %p206
    %s209 = sadd.s32 %s208, 1
    %p212 = scmp.eq.s32.totalorder %s22, 1
    %p213 = scmp.ne.s32.totalorder %s208, %s210
    %p214 = scmp.eq.s32.totalorder %s22, 0
    %p215 = por %p213, %p214
    %p216 = scmp.ne.s32.totalorder %s208, %s210
    %p217 = scmp.eq.s32.totalorder %s27, 1
    %p218 = por %p216, %p217
    %p219 = scmp.ne.s32.totalorder %s210, %s211
    %p220 = scmp.eq.s32.totalorder %s27, 0
    %p221 = por %p219, %p220
    %p222 = scmp.ne.s32.totalorder %s210, %s211
    %p223 = scmp.eq.s32.totalorder %s28, 1
    %p224 = por %p222, %p223
    %p226 = scmp.ne.s32.totalorder %s211, %s225
    %p227 = scmp.eq.s32.totalorder %s28, 0
    %p228 = por %p226, %p227
    %s230 = sadd.s32 %s229, 1
    %p233 = scmp.eq.s32.totalorder %s22, 1
    %p234 = scmp.ne.s32.totalorder %s229, %s231
    %p235 = scmp.eq.s32.totalorder %s22, 0
    %p236 = por %p234, %p235
    %p237 = scmp.ne.s32.totalorder %s229, %s231
    %p238 = scmp.eq.s32.totalorder %s27, 1
    %p239 = por %p237, %p238
    %p240 = scmp.ne.s32.totalorder %s231, %s232
    %p241 = scmp.eq.s32.totalorder %s27, 0
    %p242 = por %p240, %p241
    %p243 = scmp.ne.s32.totalorder %s231, %s232
    %p244 = scmp.eq.s32.totalorder %s28, 1
    %p245 = por %p243, %p244
    %p247 = scmp.ne.s32.totalorder %s232, %s246
    %p248 = scmp.eq.s32.totalorder %s28, 0
    %p249 = por %p247, %p248
    %s251 = sadd.s32 %s250, 1
    %p254 = scmp.eq.s32.totalorder %s22, 1
    %p255 = scmp.ne.s32.totalorder %s250, %s252
    %p256 = scmp.eq.s32.totalorder %s22, 0
    %p257 = por %p255, %p256
    %p258 = scmp.ne.s32.totalorder %s250, %s252
    %p259 = scmp.eq.s32.totalorder %s27, 1
    %p260 = por %p258, %p259
    %p261 = scmp.ne.s32.totalorder %s252, %s253
    %p262 = scmp.eq.s32.totalorder %s27, 0
    %p263 = por %p261, %p262
    %p264 = scmp.ne.s32.totalorder %s252, %s253
    %p265 = scmp.eq.s32.totalorder %s28, 1
    %p266 = por %p264, %p265
    %p268 = scmp.ne.s32.totalorder %s253, %s267
    %p269 = scmp.eq.s32.totalorder %s28, 0
    %p270 = por %p268, %p269
    %s272 = sadd.s32 %s271, 1
    %p275 = scmp.eq.s32.totalorder %s22, 1
    %p276 = scmp.ne.s32.totalorder %s271, %s273
    %p277 = scmp.eq.s32.totalorder %s22, 0
    %p278 = por %p276, %p277
    %p279 = scmp.ne.s32.totalorder %s271, %s273
    %p280 = scmp.eq.s32.totalorder %s27, 1
    %p281 = por %p279, %p280
    %p282 = scmp.ne.s32.totalorder %s273, %s274
    %p283 = scmp.eq.s32.totalorder %s27, 0
    %p284 = por %p282, %p283
    %p285 = scmp.ne.s32.totalorder %s273, %s274
    %p286 = scmp.eq.s32.totalorder %s28, 1
    %p287 = por %p285, %p286
    %p289 = scmp.ne.s32.totalorder %s274, %s288
    %p290 = scmp.eq.s32.totalorder %s28, 0
    %p291 = por %p289, %p290
    %s293 = sadd.s32 %s292, 1
    %p296 = scmp.eq.s32.totalorder %s22, 1
    %p297 = scmp.ne.s32.totalorder %s292, %s294
    %p298 = scmp.eq.s32.totalorder %s22, 0
    %p299 = por %p297, %p298
    %p300 = scmp.ne.s32.totalorder %s292, %s294
    %p301 = scmp.eq.s32.totalorder %s27, 1
    %p302 = por %p300, %p301
    %p303 = scmp.ne.s32.totalorder %s294, %s295
    %p304 = scmp.eq.s32.totalorder %s27, 0
    %p305 = por %p303, %p304
    %p306 = scmp.ne.s32.totalorder %s294, %s295
    %p307 = scmp.eq.s32.totalorder %s28, 1
    %p308 = por %p306, %p307
    %p310 = scmp.ne.s32.totalorder %s295, %s309
    %p311 = scmp.eq.s32.totalorder %s28, 0
    %p312 = por %p310, %p311
    %s314 = sadd.s32 %s313, 1
    %p317 = scmp.eq.s32.totalorder %s22, 1
    %p318 = scmp.ne.s32.totalorder %s313, %s315
    %p319 = scmp.eq.s32.totalorder %s22, 0
    %p320 = por %p318, %p319
    %p321 = scmp.ne.s32.totalorder %s313, %s315
    %p322 = scmp.eq.s32.totalorder %s27, 1
    %p323 = por %p321, %p322
    %p324 = scmp.ne.s32.totalorder %s315, %s316
    %p325 = scmp.eq.s32.totalorder %s27, 0
    %p326 = por %p324, %p325
    %p327 = scmp.ne.s32.totalorder %s315, %s316
    %p328 = scmp.eq.s32.totalorder %s28, 1
    %p329 = por %p327, %p328
    %p331 = scmp.ne.s32.totalorder %s316, %s330
    %p332 = scmp.eq.s32.totalorder %s28, 0
    %p333 = por %p331, %p332
    %s335 = sadd.s32 %s334, 1
    %p338 = scmp.eq.s32.totalorder %s22, 1
    %p339 = scmp.ne.s32.totalorder %s334, %s336
    %p340 = scmp.eq.s32.totalorder %s22, 0
    %p341 = por %p339, %p340
    %p342 = scmp.ne.s32.totalorder %s334, %s336
    %p343 = scmp.eq.s32.totalorder %s27, 1
    %p344 = por %p342, %p343
    %p345 = scmp.ne.s32.totalorder %s336, %s337
    %p346 = scmp.eq.s32.totalorder %s27, 0
    %p347 = por %p345, %p346
    %p348 = scmp.ne.s32.totalorder %s336, %s337
    %p349 = scmp.eq.s32.totalorder %s28, 1
    %p350 = por %p348, %p349
    %p352 = scmp.ne.s32.totalorder %s337, %s351
    %p353 = scmp.eq.s32.totalorder %s28, 0
    %p354 = por %p352, %p353
    %s356 = sadd.s32 %s355, 1
    %p359 = scmp.eq.s32.totalorder %s22, 1
    %p360 = scmp.ne.s32.totalorder %s355, %s357
    %p361 = scmp.eq.s32.totalorder %s22, 0
    %p362 = por %p360, %p361
    %p363 = scmp.ne.s32.totalorder %s355, %s357
    %p364 = scmp.eq.s32.totalorder %s27, 1
    %p365 = por %p363, %p364
    %p366 = scmp.ne.s32.totalorder %s357, %s358
    %p367 = scmp.eq.s32.totalorder %s27, 0
    %p368 = por %p366, %p367
    %p369 = scmp.ne.s32.totalorder %s357, %s358
    %p370 = scmp.eq.s32.totalorder %s28, 1
    %p371 = por %p369, %p370
    %p373 = scmp.ne.s32.totalorder %s358, %s372
    %p374 = scmp.eq.s32.totalorder %s28, 0
    %p375 = por %p373, %p374
    %s376 = ssub.s32 %s22, %s29
    %p377 = scmp.eq.s32.totalorder %s376, 0
    %s379 = sadd.s32 %s378, 1
    %s380 = scalar_select %p377, %s378, %s379
    %p383 = pneg %p377
    %p384 = scmp.eq.s32.totalorder %s22, 1
    %p385 = por %p383, %p384
    %p386 = scmp.ne.s32.totalorder %s378, %s381
    %p387 = scmp.eq.s32.totalorder %s22, 0
    %p388 = por %p386, %p387
    %p389 = scmp.ne.s32.totalorder %s378, %s381
    %p390 = scmp.eq.s32.totalorder %s27, 1
    %p391 = por %p389, %p390
    %p392 = scmp.ne.s32.totalorder %s381, %s382
    %p393 = scmp.eq.s32.totalorder %s27, 0
    %p394 = por %p392, %p393
    %p395 = scmp.ne.s32.totalorder %s381, %s382
    %p396 = scmp.eq.s32.totalorder %s28, 1
    %p397 = por %p395, %p396
    %p399 = scmp.ne.s32.totalorder %s382, %s398
    %p400 = scmp.eq.s32.totalorder %s28, 0
    %p401 = por %p399, %p400
    %p402 = scmp.le.s32.totalorder 1, %s22
    %p403 = scmp.lt.s32.totalorder %s22, 3
    %p404 = pnand %p402, %p403
    %p405 = pneg %p404
    // Predicated region
    $region9: #{bert_forward.3} parent=5 // pred_check
      _
    $region10: #{bert_forward.3} parent=5 // pred_check_branch
      %407 = sbr.rel (%p404) target = $region12
    $region11: #{bert_forward.3} parent=5 // pred_region
      %s408 = ssub.s32 %s22, 1
      // Predicated region
      $region13: #{bert_forward.3} parent=11 // pred_check
        %p409 = pneg %p95
      $region14: #{bert_forward.3} parent=11 // pred_check_branch
        %411 = sbr.rel (%p409) target = $region16
      $region15: #{bert_forward.3} parent=11 // pred_region
        _
      $region16: #{bert_forward.3} parent=11 // pred_fallthru
        _
      // Predicated region
      $region17: #{bert_forward.3} parent=11 // pred_check
        %p412 = pneg %p116
      $region18: #{bert_forward.3} parent=11 // pred_check_branch
        %414 = sbr.rel (%p412) target = $region20
      $region19: #{bert_forward.3} parent=11 // pred_region
        _
      $region20: #{bert_forward.3} parent=11 // pred_fallthru
        _
      // Predicated region
      $region21: #{bert_forward.3} parent=11 // pred_check
        %p415 = pneg %p137
      $region22: #{bert_forward.3} parent=11 // pred_check_branch
        %417 = sbr.rel (%p415) target = $region24
      $region23: #{bert_forward.3} parent=11 // pred_region
        _
      $region24: #{bert_forward.3} parent=11 // pred_fallthru
        _
      // Predicated region
      $region25: #{bert_forward.3} parent=11 // pred_check
        %p418 = pneg %p158
      $region26: #{bert_forward.3} parent=11 // pred_check_branch
        %420 = sbr.rel (%p418) target = $region28
      $region27: #{bert_forward.3} parent=11 // pred_region
        _
      $region28: #{bert_forward.3} parent=11 // pred_fallthru
        _
      // Predicated region
      $region29: #{bert_forward.3} parent=11 // pred_check
        %p421 = pneg %p179
      $region30: #{bert_forward.3} parent=11 // pred_check_branch
        %423 = sbr.rel (%p421) target = $region32
      $region31: #{bert_forward.3} parent=11 // pred_region
        _
      $region32: #{bert_forward.3} parent=11 // pred_fallthru
        _
      // Predicated region
      $region33: #{bert_forward.3} parent=11 // pred_check
        %p424 = pneg %p200
      $region34: #{bert_forward.3} parent=11 // pred_check_branch
        %426 = sbr.rel (%p424) target = $region36
      $region35: #{bert_forward.3} parent=11 // pred_region
        _
      $region36: #{bert_forward.3} parent=11 // pred_fallthru
        _
      // Predicated region
      $region37: #{bert_forward.3} parent=11 // pred_check
        %p427 = pneg %p221
      $region38: #{bert_forward.3} parent=11 // pred_check_branch
        %429 = sbr.rel (%p427) target = $region40
      $region39: #{bert_forward.3} parent=11 // pred_region
        _
      $region40: #{bert_forward.3} parent=11 // pred_fallthru
        _
      // Predicated region
      $region41: #{bert_forward.3} parent=11 // pred_check
        %p430 = pneg %p242
      $region42: #{bert_forward.3} parent=11 // pred_check_branch
        %432 = sbr.rel (%p430) target = $region44
      $region43: #{bert_forward.3} parent=11 // pred_region
        _
      $region44: #{bert_forward.3} parent=11 // pred_fallthru
        _
      // Predicated region
      $region45: #{bert_forward.3} parent=11 // pred_check
        %p433 = pneg %p263
      $region46: #{bert_forward.3} parent=11 // pred_check_branch
        %435 = sbr.rel (%p433) target = $region48
      $region47: #{bert_forward.3} parent=11 // pred_region
        _
      $region48: #{bert_forward.3} parent=11 // pred_fallthru
        _
      // Predicated region
      $region49: #{bert_forward.3} parent=11 // pred_check
        %p436 = pneg %p284
      $region50: #{bert_forward.3} parent=11 // pred_check_branch
        %438 = sbr.rel (%p436) target = $region52
      $region51: #{bert_forward.3} parent=11 // pred_region
        _
      $region52: #{bert_forward.3} parent=11 // pred_fallthru
        _
      // Predicated region
      $region53: #{bert_forward.3} parent=11 // pred_check
        %p439 = pneg %p305
      $region54: #{bert_forward.3} parent=11 // pred_check_branch
        %441 = sbr.rel (%p439) target = $region56
      $region55: #{bert_forward.3} parent=11 // pred_region
        _
      $region56: #{bert_forward.3} parent=11 // pred_fallthru
        _
      // Predicated region
      $region57: #{bert_forward.3} parent=11 // pred_check
        %p442 = pneg %p326
      $region58: #{bert_forward.3} parent=11 // pred_check_branch
        %444 = sbr.rel (%p442) target = $region60
      $region59: #{bert_forward.3} parent=11 // pred_region
        _
      $region60: #{bert_forward.3} parent=11 // pred_fallthru
        _
      // Predicated region
      $region61: #{bert_forward.3} parent=11 // pred_check
        %p445 = pneg %p347
      $region62: #{bert_forward.3} parent=11 // pred_check_branch
        %447 = sbr.rel (%p445) target = $region64
      $region63: #{bert_forward.3} parent=11 // pred_region
        _
      $region64: #{bert_forward.3} parent=11 // pred_fallthru
        _
      // Predicated region
      $region65: #{bert_forward.3} parent=11 // pred_check
        %p448 = pneg %p368
      $region66: #{bert_forward.3} parent=11 // pred_check_branch
        %450 = sbr.rel (%p448) target = $region68
      $region67: #{bert_forward.3} parent=11 // pred_region
        _
      $region68: #{bert_forward.3} parent=11 // pred_fallthru
        _
    $region12: #{bert_forward.3} parent=5 // pred_fallthru
      _
    %p451 = scmp.lt.s32.totalorder %s22, 2
    // Predicated region
    $region69: #{bert_forward.3} parent=5 // pred_check
      %p452 = pneg %p451
    $region70: #{bert_forward.3} parent=5 // pred_check_branch
      %454 = sbr.rel (%p452) target = $region72
    $region71: #{bert_forward.3} parent=5 // pred_region
      // Predicated region
      $region73: #{bert_forward.3} parent=71 // pred_check
        %p455 = pneg %p42
      $region74: #{bert_forward.3} parent=71 // pred_check_branch
        %457 = sbr.rel (%p455) target = $region76
      $region75: #{bert_forward.3} parent=71 // pred_region
        %p458 = scmp.lt.s32.totalorder %s22, 1
        %s459 = scalar_select %p458, %s22, 1
        %s460 = smul.addr %s459, 4
        %s461 = scalar_lea.vmem %s0, %s460
      $region76: #{bert_forward.3} parent=71 // pred_fallthru
        _
      // Predicated region
      $region77: #{bert_forward.3} parent=71 // pred_check
        %p462 = pneg %p68
      $region78: #{bert_forward.3} parent=71 // pred_check_branch
        %464 = sbr.rel (%p462) target = $region80
      $region79: #{bert_forward.3} parent=71 // pred_region
        %p465 = scmp.lt.s32.totalorder %s22, 1
        %s466 = scalar_select %p465, %s22, 1
        %s467 = scalar_lea.vmem %s1, %s466
      $region80: #{bert_forward.3} parent=71 // pred_fallthru
        _
    $region72: #{bert_forward.3} parent=5 // pred_fallthru
      _
    %p468 = scmp.le.s32.totalorder 1, %s22
    %p469 = scmp.lt.s32.totalorder %s22, 3
    %p470 = pnand %p468, %p469
    %p471 = pneg %p470
    // Predicated region
    $region81: #{bert_forward.3} parent=5 // pred_check
      _
    $region82: #{bert_forward.3} parent=5 // pred_check_branch
      %473 = sbr.rel (%p470) target = $region84
    $region83: #{bert_forward.3} parent=5 // pred_region
      %s474 = ssub.s32 %s22, 1
      %p475 = scmp.lt.s32.totalorder %s27, 1
      %s476 = scalar_select %p475, %s27, 1
      %s477 = smul.addr %s476, 4
      %s478 = scalar_lea.vmem %s0, %s477
      %p479 = pneg %p48
      %p480 = pneg %p45
      %p481 = scmp.lt.s32.totalorder %s27, 1
      %s482 = scalar_select %p481, %s27, 1
      %s483 = scalar_lea.vmem %s1, %s482
      %p484 = pneg %p74
      %p485 = pneg %p71
      %p486 = pneg %p95
      %p487 = pneg %p92
      %p488 = pneg %p116
      %p489 = pneg %p113
      %p490 = pneg %p137
      %p491 = pneg %p134
      %p492 = pneg %p158
      %p493 = pneg %p155
      %p494 = pneg %p179
      %p495 = pneg %p176
      %p496 = pneg %p200
      %p497 = pneg %p197
      %p498 = pneg %p221
      %p499 = pneg %p218
      %p500 = pneg %p242
      %p501 = pneg %p239
      %p502 = pneg %p263
      %p503 = pneg %p260
      %p504 = pneg %p284
      %p505 = pneg %p281
      %p506 = pneg %p305
      %p507 = pneg %p302
      %p508 = pneg %p326
      %p509 = pneg %p323
      %p510 = pneg %p347
      %p511 = pneg %p344
      %p512 = pneg %p368
      %p513 = pneg %p365
      %p514 = pneg %p394
      %p515 = pneg %p391
      %p516 = scmp.lt.s32.totalorder %s27, 1
      %s517 = scalar_select %p516, %s27, 1
      %s518 = smul.addr %s517, 4
      %s519 = scalar_lea.vmem %s16, %s518
      %p520 = scmp.lt.s32.totalorder %s27, 1
      %s521 = scalar_select %p520, %s27, 1
      %s522 = smul.addr %s521, 4
      %s523 = scalar_lea.vmem %s0, %s522
      %p524 = scmp.lt.s32.totalorder %s27, 1
      %s525 = scalar_select %p524, %s27, 1
      %s526 = scalar_lea.vmem %s1, %s525
      %p527 = scmp.lt.s32.totalorder %s27, 1
      %s528 = scalar_select %p527, %s27, 1
      %s529 = smul.addr %s528, 4
      %s530 = scalar_lea.vmem %s16, %s529
      %v532 = vld [vmem:[%s523] sm:$0xf]
      %v533 = vunpack.c.l.bf16 %v532
      %v534 = vld [vmem:[%s2] sm:$0x1]
      %v535 = vld [vmem:[%s3] sm:$0x1]
      %vm536 = vcmask 261120
      %v537 = vsel %vm536, %v533, 0.0
      %538 = vadd.xlane.f32.xlu0 %v537
      %v539 = vpop.xlane.xlu0 %538
      %v540 = vrcp.pop 32.0
      %v541 = vmul.f32 %v539, %v540
      %v542 = vsub.f32 %v533, %v541
      %v543 = vmul.f32 %v542, %v542
      %v544 = vsel %vm536, %v543, 0.0
      %545 = vadd.xlane.f32.xlu0 %v544
      %v546 = vpop.xlane.xlu0 %545
      %v547 = vmul.f32 %v546, %v540
      %v548 = vadd.f32 %v547, 1e-12
      %v549 = vrsqrt.pop %v548
      %v550 = vmul.f32 %v542, %v549
      %v552 = vlaneseq
      %v553 = vshrl.u32 %v552, 7
      %v554 = vsub.s32 0, %v553
      %v555 = vrot.slane %v534, %v554
      %v557 = vmul.f32 %v550, %v555
      %v559 = vlaneseq
      %v560 = vshrl.u32 %v559, 7
      %v561 = vsub.s32 0, %v560
      %v562 = vrot.slane %v535, %v561
      %v564 = vadd.f32 %v557, %v562
      %v565 = vpack.c.bf16 %v564, %v564
      %v566 = vld [vmem:[%s4] sm:$0xf]
      %v567 = vld [vmem:[%s4 + $0x4] sm:$0xf]
      %v568 = vld [vmem:[%s4 + $0x8] sm:$0xf]
      %v569 = vld [vmem:[%s4 + $0xc] sm:$0xf]
      %v570 = vld [vmem:[%s5] sm:$0x1]
      %v572 = vlaneseq
      %v573 = vshrl.u32 %v572, 7
      %v574 = vsub.s32 0, %v573
      %v575 = vrot.slane %v570, %v574
      %v581 = vunpack.c.l.b16 %v566
      %v582 = vunpack.c.l.b16 %v567
      %v583 = vunpack.c.l.b16 %v568
      %v584 = vunpack.c.l.b16 %v569
      %v585 = vpack.c.b16 %v582, %v581
      %v586 = vpack.c.b16 %v584, %v583
      %v590 = vsel %vm536, %v565, 0
      %592 = vmatprep.subr.bf16.mxu0 0
      %593 = vmatpush1.bf16.msra.mxu0 %v585
      %594 = vmatprep.subr.bf16.mxu0 0
      %595 = vmatpush1.bf16.msra.mxu0 %v586
      %596 = vmatprep.subr.bf16.mxu0 0
      %597 = vmatpush1.bf16.msra.mxu0 0
      %598 = vmatprep.subr.bf16.mxu0 0
      %599 = vmatpush1.bf16.msra.mxu0 0
      %600 = vmatprep.subr.bf16.mxu0 0
      %601 = vmatpush1.bf16.msra.mxu0 0
      %602 = vmatprep.subr.bf16.mxu0 0
      %603 = vmatpush1.bf16.msra.mxu0 0
      %604 = vmatprep.subr.bf16.mxu0 0
      %605 = vmatpush1.bf16.msra.mxu0 0
      %606 = vmatprep.subr.bf16.mxu0 0
      %607 = vmatpush1.bf16.msra.mxu0 0
      %608 = vmatprep.subr.bf16.mxu0 0
      %609 = vmatpush1.bf16.msra.mxu0 0
      %610 = vmatprep.subr.bf16.mxu0 0
      %611 = vmatpush1.bf16.msra.mxu0 0
      %612 = vmatprep.subr.bf16.mxu0 0
      %613 = vmatpush1.bf16.msra.mxu0 0
      %614 = vmatprep.subr.bf16.mxu0 0
      %615 = vmatpush1.bf16.msra.mxu0 0
      %616 = vmatprep.subr.bf16.mxu0 0
      %617 = vmatpush1.bf16.msra.mxu0 0
      %618 = vmatprep.subr.bf16.mxu0 0
      %619 = vmatpush1.bf16.msra.mxu0 0
      %620 = vmatprep.subr.bf16.mxu0 0
      %621 = vmatpush1.bf16.msra.mxu0 0
      %622 = vmatprep.subr.bf16.mxu0 0
      %623 = vmatpush1.bf16.msra.mxu0 0
      %624 = vmatprep.mubr.bf16.mxu0 0
      %625 = vmatmul.mubr.bf16.gmra.mrb[0].mxu0 %v590
      %v626 = vpop.f32.mrb[0].mxu0
      %v627 = vadd.f32 %v575, %v626
      %v628 = vpop.f32.mrb[0].mxu0
      %v629 = vpop.f32.mrb[0].mxu0
      %v630 = vpop.f32.mrb[0].mxu0
      %631 = vdwg.mxu0
      %v632 = vpack.c.bf16 %v627, %v627
      %v633 = vld [vmem:[%s526] sm:$0x1]
      %v635 = vlaneseq
      %v636 = vshrl.u32 %v635, 7
      %v637 = vsub.s32 0, %v636
      %v638 = vrot.slane %v633, %v637
      %641 = vrot.lane.b32.xlu0 %v632, 96
      %v642 = vpop.permute.xlu0 %641
      %vm643 = vcmask 130048
      %v645 = vsel %vm643, %v632, 0
      %v648 = vsel %vm643, %v642, 0
      %650 = vmatprep.subr.bf16.mxu0 0
      %651 = vmatpush1.bf16.xpose.msra.mxu0 %v648
      %652 = vmatprep.subr.bf16.mxu0 0
      %653 = vmatpush1.bf16.xpose.msra.mxu0 0
      %654 = vmatprep.subr.bf16.mxu0 0
      %655 = vmatpush1.bf16.xpose.msra.mxu0 0
      %656 = vmatprep.subr.bf16.mxu0 0
      %657 = vmatpush1.bf16.xpose.msra.mxu0 0
      %658 = vmatprep.subr.bf16.mxu0 0
      %659 = vmatpush1.bf16.xpose.msra.mxu0 0
      %660 = vmatprep.subr.bf16.mxu0 0
      %661 = vmatpush1.bf16.xpose.msra.mxu0 0
      %662 = vmatprep.subr.bf16.mxu0 0
      %663 = vmatpush1.bf16.xpose.msra.mxu0 0
      %664 = vmatprep.subr.bf16.mxu0 0
      %665 = vmatpush1.bf16.xpose.msra.mxu0 0
      %666 = vmatprep.subr.bf16.mxu0 0
      %667 = vmatpush1.bf16.xpose.msra.mxu0 0
      %668 = vmatprep.subr.bf16.mxu0 0
      %669 = vmatpush1.bf16.xpose.msra.mxu0 0
      %670 = vmatprep.subr.bf16.mxu0 0
      %671 = vmatpush1.bf16.xpose.msra.mxu0 0
      %672 = vmatprep.subr.bf16.mxu0 0
      %673 = vmatpush1.bf16.xpose.msra.mxu0 0
      %674 = vmatprep.subr.bf16.mxu0 0
      %675 = vmatpush1.bf16.xpose.msra.mxu0 0
      %676 = vmatprep.subr.bf16.mxu0 0
      %677 = vmatpush1.bf16.xpose.msra.mxu0 0
      %678 = vmatprep.subr.bf16.mxu0 0
      %679 = vmatpush1.bf16.xpose.msra.mxu0 0
      %680 = vmatprep.subr.bf16.mxu0 0
      %681 = vmatpush1.bf16.xpose.msra.mxu0 0
      %682 = vmatprep.mubr.bf16.mxu0 0
      %683 = vmatmul.mubr.bf16.gmra.mrb[0].mxu0 %v645
      %v684 = vpop.f32.mrb[0].mxu0
      %v685 = vadd.f32 %v638, %v684
      %v686 = vpop.f32.mrb[0].mxu0
      %v687 = vpop.f32.mrb[0].mxu0
      %v688 = vpop.f32.mrb[0].mxu0
      %689 = vdwg.mxu0
      %vm690 = vcmask 64512
      %v691 = vsel %vm690, %v685, -inf
      %692 = vmax.xlane.f32.xlu0 %v691
      %v693 = vpop.xlane.xlu0 %692
      %v694 = vsub.f32 %v685, %v693
      %v695 = vmul.f32 %v694, 1.442695
      %v696 = vpow.pop %v695
      %v697 = vsel %vm690, %v696, 0.0
      %698 = vadd.xlane.f32.xlu0 %v697
      %v699 = vpop.xlane.xlu0 %698
      %v700 = vrcp.pop %v699
      %v701 = vmul.f32 %v696, %v700
      %v702 = vpack.c.bf16 %v701, %v701
      %703 = vrot.lane.b32.xlu0 %v632, 64
      %v704 = vpop.permute.xlu0 %703
      %v706 = vsel %vm690, %v702, 0
      %vm708 = vcmask 1043456
      %v710 = vsel %vm708, %v704, 0
      %712 = vmatprep.subr.bf16.mxu0 0
      %713 = vmatpush1.bf16.msra.mxu0 %v710
      %714 = vmatprep.subr.bf16.mxu0 0
      %715 = vmatpush1.bf16.msra.mxu0 0
      %716 = vmatprep.subr.bf16.mxu0 0
      %717 = vmatpush1.bf16.msra.mxu0 0
      %718 = vmatprep.subr.bf16.mxu0 0
      %719 = vmatpush1.bf16.msra.mxu0 0
      %720 = vmatprep.subr.bf16.mxu0 0
      %721 = vmatpush1.bf16.msra.mxu0 0
      %722 = vmatprep.subr.bf16.mxu0 0
      %723 = vmatpush1.bf16.msra.mxu0 0
      %724 = vmatprep.subr.bf16.mxu0 0
      %725 = vmatpush1.bf16.msra.mxu0 0
      %726 = vmatprep.subr.bf16.mxu0 0
      %727 = vmatpush1.bf16.msra.mxu0 0
      %728 = vmatprep.subr.bf16.mxu0 0
      %729 = vmatpush1.bf16.msra.mxu0 0
      %730 = vmatprep.subr.bf16.mxu0 0
      %731 = vmatpush1.bf16.msra.mxu0 0
      %732 = vmatprep.subr.bf16.mxu0 0
      %733 = vmatpush1.bf16.msra.mxu0 0
      %734 = vmatprep.subr.bf16.mxu0 0
      %735 = vmatpush1.bf16.msra.mxu0 0
      %736 = vmatprep.subr.bf16.mxu0 0
      %737 = vmatpush1.bf16.msra.mxu0 0
      %738 = vmatprep.subr.bf16.mxu0 0
      %739 = vmatpush1.bf16.msra.mxu0 0
      %740 = vmatprep.subr.bf16.mxu0 0
      %741 = vmatpush1.bf16.msra.mxu0 0
      %742 = vmatprep.subr.bf16.mxu0 0
      %743 = vmatpush1.bf16.msra.mxu0 0
      %744 = vmatprep.mubr.bf16.mxu0 0
      %745 = vmatmul.mubr.bf16.gmra.mrb[0].mxu0 %v706
      %v746 = vpop.f32.mrb[0].mxu0
      %v747 = vadd.f32 0.0, %v746
      %v748 = vpop.f32.mrb[0].mxu0
      %v749 = vpop.f32.mrb[0].mxu0
      %v750 = vpop.f32.mrb[0].mxu0
      %751 = vdwg.mxu0
      %752 = vrot.lane.b32.xlu0 %v632, 112
      %v753 = vpop.permute.xlu0 %752
      %754 = vrot.lane.b32.xlu0 %v632, 80
      %v755 = vpop.permute.xlu0 %754
      %v757 = vsel %vm643, %v753, 0
      %v760 = vsel %vm643, %v755, 0
      %762 = vmatprep.subr.bf16.mxu0 0
      %763 = vmatpush1.bf16.xpose.msra.mxu0 %v760
      %764 = vmatprep.subr.bf16.mxu0 0
      %765 = vmatpush1.bf16.xpose.msra.mxu0 0
      %766 = vmatprep.subr.bf16.mxu0 0
      %767 = vmatpush1.bf16.xpose.msra.mxu0 0
      %768 = vmatprep.subr.bf16.mxu0 0
      %769 = vmatpush1.bf16.xpose.msra.mxu0 0
      %770 = vmatprep.subr.bf16.mxu0 0
      %771 = vmatpush1.bf16.xpose.msra.mxu0 0
      %772 = vmatprep.subr.bf16.mxu0 0
      %773 = vmatpush1.bf16.xpose.msra.mxu0 0
      %774 = vmatprep.subr.bf16.mxu0 0
      %775 = vmatpush1.bf16.xpose.msra.mxu0 0
      %776 = vmatprep.subr.bf16.mxu0 0
      %777 = vmatpush1.bf16.xpose.msra.mxu0 0
      %778 = vmatprep.subr.bf16.mxu0 0
      %779 = vmatpush1.bf16.xpose.msra.mxu0 0
      %780 = vmatprep.subr.bf16.mxu0 0
      %781 = vmatpush1.bf16.xpose.msra.mxu0 0
      %782 = vmatprep.subr.bf16.mxu0 0
      %783 = vmatpush1.bf16.xpose.msra.mxu0 0
      %784 = vmatprep.subr.bf16.mxu0 0
      %785 = vmatpush1.bf16.xpose.msra.mxu0 0
      %786 = vmatprep.subr.bf16.mxu0 0
      %787 = vmatpush1.bf16.xpose.msra.mxu0 0
      %788 = vmatprep.subr.bf16.mxu0 0
      %789 = vmatpush1.bf16.xpose.msra.mxu0 0
      %790 = vmatprep.subr.bf16.mxu0 0
      %791 = vmatpush1.bf16.xpose.msra.mxu0 0
      %792 = vmatprep.subr.bf16.mxu0 0
      %793 = vmatpush1.bf16.xpose.msra.mxu0 0
      %794 = vmatprep.mubr.bf16.mxu0 0
      %795 = vmatmul.mubr.bf16.gmra.mrb[0].mxu0 %v757
      %v796 = vpop.f32.mrb[0].mxu0
      %v797 = vadd.f32 %v638, %v796
      %v798 = vpop.f32.mrb[0].mxu0
      %v799 = vpop.f32.mrb[0].mxu0
      %v800 = vpop.f32.mrb[0].mxu0
      %801 = vdwg.mxu0
      %v802 = vsel %vm690, %v797, -inf
      %803 = vmax.xlane.f32.xlu0 %v802
      %v804 = vpop.xlane.xlu0 %803
      %v805 = vsub.f32 %v797, %v804
      %v806 = vmul.f32 %v805, 1.442695
      %v807 = vpow.pop %v806
      %v808 = vsel %vm690, %v807, 0.0
      %809 = vadd.xlane.f32.xlu0 %v808
      %v810 = vpop.xlane.xlu0 %809
      %v811 = vrcp.pop %v810
      %v812 = vmul.f32 %v807, %v811
      %v813 = vpack.c.bf16 %v812, %v812
      %814 = vrot.lane.b32.xlu0 %v632, 48
      %v815 = vpop.permute.xlu0 %814
      %v817 = vsel %vm690, %v813, 0
      %v820 = vsel %vm708, %v815, 0
      %822 = vmatprep.subr.bf16.mxu0 0
      %823 = vmatpush1.bf16.msra.mxu0 %v820
      %824 = vmatprep.subr.bf16.mxu0 0
      %825 = vmatpush1.bf16.msra.mxu0 0
      %826 = vmatprep.subr.bf16.mxu0 0
      %827 = vmatpush1.bf16.msra.mxu0 0
      %828 = vmatprep.subr.bf16.mxu0 0
      %829 = vmatpush1.bf16.msra.mxu0 0
      %830 = vmatprep.subr.bf16.mxu0 0
      %831 = vmatpush1.bf16.msra.mxu0 0
      %832 = vmatprep.subr.bf16.mxu0 0
      %833 = vmatpush1.bf16.msra.mxu0 0
      %834 = vmatprep.subr.bf16.mxu0 0
      %835 = vmatpush1.bf16.msra.mxu0 0
      %836 = vmatprep.subr.bf16.mxu0 0
      %837 = vmatpush1.bf16.msra.mxu0 0
      %838 = vmatprep.subr.bf16.mxu0 0
      %839 = vmatpush1.bf16.msra.mxu0 0
      %840 = vmatprep.subr.bf16.mxu0 0
      %841 = vmatpush1.bf16.msra.mxu0 0
      %842 = vmatprep.subr.bf16.mxu0 0
      %843 = vmatpush1.bf16.msra.mxu0 0
      %844 = vmatprep.subr.bf16.mxu0 0
      %845 = vmatpush1.bf16.msra.mxu0 0
      %846 = vmatprep.subr.bf16.mxu0 0
      %847 = vmatpush1.bf16.msra.mxu0 0
      %848 = vmatprep.subr.bf16.mxu0 0
      %849 = vmatpush1.bf16.msra.mxu0 0
      %850 = vmatprep.subr.bf16.mxu0 0
      %851 = vmatpush1.bf16.msra.mxu0 0
      %852 = vmatprep.subr.bf16.mxu0 0
      %853 = vmatpush1.bf16.msra.mxu0 0
      %854 = vmatprep.mubr.bf16.mxu0 0
      %855 = vmatmul.mubr.bf16.gmra.mrb[0].mxu0 %v817
      %v856 = vpop.f32.mrb[0].mxu0
      %v857 = vadd.f32 0.0, %v856
      %v858 = vpop.f32.mrb[0].mxu0
      %v859 = vpop.f32.mrb[0].mxu0
      %v860 = vpop.f32.mrb[0].mxu0
      %861 = vdwg.mxu0
      %863 = vrot.lane.b32.xlu0 %v857, 16
      %v864 = vpop.permute.xlu0 %863
      %v866 = vsel %vm643, %v747, %v864
      %v867 = vpack.c.bf16 %v866, %v866
      %v868 = vld [vmem:[%s6] sm:$0xf]
      %v869 = vld [vmem:[%s6 + $0x4] sm:$0xf]
      %v870 = vld [vmem:[%s6 + $0x8] sm:$0xf]
      %v871 = vld [vmem:[%s6 + $0xc] sm:$0xf]
      %v872 = vld [vmem:[%s7] sm:$0x1]
      %v874 = vlaneseq
      %v875 = vshrl.u32 %v874, 7
      %v876 = vsub.s32 0, %v875
      %v877 = vrot.slane %v872, %v876
      %v883 = vunpack.c.l.b16 %v868
      %v884 = vunpack.c.l.b16 %v869
      %v885 = vunpack.c.l.b16 %v870
      %v886 = vunpack.c.l.b16 %v871
      %v887 = vpack.c.b16 %v884, %v883
      %v888 = vpack.c.b16 %v886, %v885
      %v892 = vsel %vm536, %v867, 0
      %894 = vmatprep.subr.bf16.mxu0 0
      %895 = vmatpush1.bf16.msra.mxu0 %v887
      %896 = vmatprep.subr.bf16.mxu0 0
      %897 = vmatpush1.bf16.msra.mxu0 %v888
      %898 = vmatprep.subr.bf16.mxu0 0
      %899 = vmatpush1.bf16.msra.mxu0 0
      %900 = vmatprep.subr.bf16.mxu0 0
      %901 = vmatpush1.bf16.msra.mxu0 0
      %902 = vmatprep.subr.bf16.mxu0 0
      %903 = vmatpush1.bf16.msra.mxu0 0
      %904 = vmatprep.subr.bf16.mxu0 0
      %905 = vmatpush1.bf16.msra.mxu0 0
      %906 = vmatprep.subr.bf16.mxu0 0
      %907 = vmatpush1.bf16.msra.mxu0 0
      %908 = vmatprep.subr.bf16.mxu0 0
      %909 = vmatpush1.bf16.msra.mxu0 0
      %910 = vmatprep.subr.bf16.mxu0 0
      %911 = vmatpush1.bf16.msra.mxu0 0
      %912 = vmatprep.subr.bf16.mxu0 0
      %913 = vmatpush1.bf16.msra.mxu0 0
      %914 = vmatprep.subr.bf16.mxu0 0
      %915 = vmatpush1.bf16.msra.mxu0 0
      %916 = vmatprep.subr.bf16.mxu0 0
      %917 = vmatpush1.bf16.msra.mxu0 0
      %918 = vmatprep.subr.bf16.mxu0 0
      %919 = vmatpush1.bf16.msra.mxu0 0
      %920 = vmatprep.subr.bf16.mxu0 0
      %921 = vmatpush1.bf16.msra.mxu0 0
      %922 = vmatprep.subr.bf16.mxu0 0
      %923 = vmatpush1.bf16.msra.mxu0 0
      %924 = vmatprep.subr.bf16.mxu0 0
      %925 = vmatpush1.bf16.msra.mxu0 0
      %926 = vmatprep.mubr.bf16.mxu0 0
      %927 = vmatmul.mubr.bf16.gmra.mrb[0].mxu0 %v892
      %v928 = vpop.f32.mrb[0].mxu0
      %v929 = vadd.f32 %v877, %v928
      %v930 = vpop.f32.mrb[0].mxu0
      %v931 = vpop.f32.mrb[0].mxu0
      %v932 = vpop.f32.mrb[0].mxu0
      %933 = vdwg.mxu0
      %v934 = vadd.f32 %v929, %v564
      %v935 = vld [vmem:[%s8] sm:$0x1]
      %v936 = vld [vmem:[%s9] sm:$0x1]
      %v937 = vsel %vm536, %v934, 0.0
      %938 = vadd.xlane.f32.xlu0 %v937
      %v939 = vpop.xlane.xlu0 %938
      %v940 = vmul.f32 %v939, %v540
      %v941 = vsub.f32 %v934, %v940
      %v942 = vmul.f32 %v941, %v941
      %v943 = vsel %vm536, %v942, 0.0
      %944 = vadd.xlane.f32.xlu0 %v943
      %v945 = vpop.xlane.xlu0 %944
      %v946 = vmul.f32 %v945, %v540
      %v947 = vadd.f32 %v946, 1e-12
      %v948 = vrsqrt.pop %v947
      %v949 = vmul.f32 %v941, %v948
      %v951 = vlaneseq
      %v952 = vshrl.u32 %v951, 7
      %v953 = vsub.s32 0, %v952
      %v954 = vrot.slane %v935, %v953
      %v956 = vmul.f32 %v949, %v954
      %v958 = vlaneseq
      %v959 = vshrl.u32 %v958, 7
      %v960 = vsub.s32 0, %v959
      %v961 = vrot.slane %v936, %v960
      %v963 = vadd.f32 %v956, %v961
      %v964 = vpack.c.bf16 %v963, %v963
      %v965 = vld [vmem:[%s10] sm:$0xf]
      %v966 = vld [vmem:[%s10 + $0x4] sm:$0xf]
      %v967 = vld [vmem:[%s10 + $0x8] sm:$0xf]
      %v968 = vld [vmem:[%s10 + $0xc] sm:$0xf]
      %v969 = vld [vmem:[%s11] sm:$0x1]
      %v971 = vlaneseq
      %v972 = vshrl.u32 %v971, 7
      %v973 = vsub.s32 0, %v972
      %v974 = vrot.slane %v969, %v973
      %v980 = vunpack.c.l.b16 %v965
      %v981 = vunpack.c.l.b16 %v966
      %v982 = vunpack.c.l.b16 %v967
      %v983 = vunpack.c.l.b16 %v968
      %v984 = vpack.c.b16 %v981, %v980
      %v985 = vpack.c.b16 %v983, %v982
      %v989 = vsel %vm536, %v964, 0
      %991 = vmatprep.subr.bf16.mxu0 0
      %992 = vmatpush1.bf16.msra.mxu0 %v984
      %993 = vmatprep.subr.bf16.mxu0 0
      %994 = vmatpush1.bf16.msra.mxu0 %v985
      %995 = vmatprep.subr.bf16.mxu0 0
      %996 = vmatpush1.bf16.msra.mxu0 0
      %997 = vmatprep.subr.bf16.mxu0 0
      %998 = vmatpush1.bf16.msra.mxu0 0
      %999 = vmatprep.subr.bf16.mxu0 0
      %1000 = vmatpush1.bf16.msra.mxu0 0
      %1001 = vmatprep.subr.bf16.mxu0 0
      %1002 = vmatpush1.bf16.msra.mxu0 0
      %1003 = vmatprep.subr.bf16.mxu0 0
      %1004 = vmatpush1.bf16.msra.mxu0 0
      %1005 = vmatprep.subr.bf16.mxu0 0
      %1006 = vmatpush1.bf16.msra.mxu0 0
      %1007 = vmatprep.subr.bf16.mxu0 0
      %1008 = vmatpush1.bf16.msra.mxu0 0
      %1009 = vmatprep.subr.bf16.mxu0 0
      %1010 = vmatpush1.bf16.msra.mxu0 0
      %1011 = vmatprep.subr.bf16.mxu0 0
      %1012 = vmatpush1.bf16.msra.mxu0 0
      %1013 = vmatprep.subr.bf16.mxu0 0
      %1014 = vmatpush1.bf16.msra.mxu0 0
      %1015 = vmatprep.subr.bf16.mxu0 0
      %1016 = vmatpush1.bf16.msra.mxu0 0
      %1017 = vmatprep.subr.bf16.mxu0 0
      %1018 = vmatpush1.bf16.msra.mxu0 0
      %1019 = vmatprep.subr.bf16.mxu0 0
      %1020 = vmatpush1.bf16.msra.mxu0 0
      %1021 = vmatprep.subr.bf16.mxu0 0
      %1022 = vmatpush1.bf16.msra.mxu0 0
      %1023 = vmatprep.mubr.bf16.mxu0 0
      %1024 = vmatmul.mubr.bf16.gmra.mrb[0].mxu0 %v989
      %v1025 = vpop.f32.mrb[0].mxu0
      %v1026 = vadd.f32 %v974, %v1025
      %v1027 = vpop.f32.mrb[0].mxu0
      %v1028 = vpop.f32.mrb[0].mxu0
      %v1029 = vpop.f32.mrb[0].mxu0
      %1030 = vdwg.mxu0
      %v1031 = vmul.f32 %v1026, 0.5
      %v1032 = vmul.f32 %v1026, 0.044715
      %v1033 = vmul.f32 %v1032, %v1026
      %v1034 = vmul.f32 %v1033, %v1026
      %v1035 = vadd.f32 %v1026, %v1034
      %v1036 = vmul.f32 %v1035, 0.7978846
      %v1037 = vtanh.pop %v1036
      %v1038 = vadd.f32 %v1037, 1.0
      %v1039 = vmul.f32 %v1031, %v1038
      %v1040 = vpack.c.bf16 %v1039, %v1039
      %v1041 = vld [vmem:[%s12] sm:$0xf]
      %v1042 = vld [vmem:[%s12 + $0x4] sm:$0xf]
      %v1043 = vld [vmem:[%s12 + $0x8] sm:$0xf]
      %v1044 = vld [vmem:[%s12 + $0xc] sm:$0xf]
      %v1045 = vld [vmem:[%s12 + $0x10] sm:$0xf]
      %v1046 = vld [vmem:[%s12 + $0x14] sm:$0xf]
      %v1047 = vld [vmem:[%s12 + $0x18] sm:$0xf]
      %v1048 = vld [vmem:[%s12 + $0x1c] sm:$0xf]
      %v1049 = vld [vmem:[%s13] sm:$0x1]
      %v1051 = vlaneseq
      %v1052 = vshrl.u32 %v1051, 7
      %v1053 = vsub.s32 0, %v1052
      %v1054 = vrot.slane %v1049, %v1053
      %v1064 = vunpack.c.l.b16 %v1041
      %v1065 = vunpack.c.l.b16 %v1042
      %v1066 = vunpack.c.l.b16 %v1043
      %v1067 = vunpack.c.l.b16 %v1044
      %v1068 = vunpack.c.l.b16 %v1045
      %v1069 = vunpack.c.l.b16 %v1046
      %v1070 = vunpack.c.l.b16 %v1047
      %v1071 = vunpack.c.l.b16 %v1048
      %v1072 = vpack.c.b16 %v1065, %v1064
      %v1073 = vpack.c.b16 %v1067, %v1066
      %v1074 = vpack.c.b16 %v1069, %v1068
      %v1075 = vpack.c.b16 %v1071, %v1070
      %vm1080 = vcmask 523264
      %v1082 = vsel %vm1080, %v1040, 0
      %1084 = vmatprep.subr.bf16.mxu0 0
      %1085 = vmatpush1.bf16.msra.mxu0 %v1072
      %1086 = vmatprep.subr.bf16.mxu0 0
      %1087 = vmatpush1.bf16.msra.mxu0 %v1073
      %1088 = vmatprep.subr.bf16.mxu0 0
      %1089 = vmatpush1.bf16.msra.mxu0 %v1074
      %1090 = vmatprep.subr.bf16.mxu0 0
      %1091 = vmatpush1.bf16.msra.mxu0 %v1075
      %1092 = vmatprep.subr.bf16.mxu0 0
      %1093 = vmatpush1.bf16.msra.mxu0 0
      %1094 = vmatprep.subr.bf16.mxu0 0
      %1095 = vmatpush1.bf16.msra.mxu0 0
      %1096 = vmatprep.subr.bf16.mxu0 0
      %1097 = vmatpush1.bf16.msra.mxu0 0
      %1098 = vmatprep.subr.bf16.mxu0 0
      %1099 = vmatpush1.bf16.msra.mxu0 0
      %1100 = vmatprep.subr.bf16.mxu0 0
      %1101 = vmatpush1.bf16.msra.mxu0 0
      %1102 = vmatprep.subr.bf16.mxu0 0
      %1103 = vmatpush1.bf16.msra.mxu0 0
      %1104 = vmatprep.subr.bf16.mxu0 0
      %1105 = vmatpush1.bf16.msra.mxu0 0
      %1106 = vmatprep.subr.bf16.mxu0 0
      %1107 = vmatpush1.bf16.msra.mxu0 0
      %1108 = vmatprep.subr.bf16.mxu0 0
      %1109 = vmatpush1.bf16.msra.mxu0 0
      %1110 = vmatprep.subr.bf16.mxu0 0
      %1111 = vmatpush1.bf16.msra.mxu0 0
      %1112 = vmatprep.subr.bf16.mxu0 0
      %1113 = vmatpush1.bf16.msra.mxu0 0
      %1114 = vmatprep.subr.bf16.mxu0 0
      %1115 = vmatpush1.bf16.msra.mxu0 0
      %1116 = vmatprep.mubr.bf16.mxu0 0
      %1117 = vmatmul.mubr.bf16.gmra.mrb[0].mxu0 %v1082
      %v1118 = vpop.f32.mrb[0].mxu0
      %v1119 = vadd.f32 %v1054, %v1118
      %v1120 = vpop.f32.mrb[0].mxu0
      %v1121 = vpop.f32.mrb[0].mxu0
      %v1122 = vpop.f32.mrb[0].mxu0
      %1123 = vdwg.mxu0
      %v1124 = vadd.f32 %v1119, %v963
      %v1125 = vld [vmem:[%s14] sm:$0x1]
      %v1126 = vld [vmem:[%s15] sm:$0x1]
      %v1127 = vsel %vm536, %v1124, 0.0
      %1128 = vadd.xlane.f32.xlu0 %v1127
      %v1129 = vpop.xlane.xlu0 %1128
      %v1130 = vmul.f32 %v1129, %v540
      %v1131 = vsub.f32 %v1124, %v1130
      %v1132 = vmul.f32 %v1131, %v1131
      %v1133 = vsel %vm536, %v1132, 0.0
      %1134 = vadd.xlane.f32.xlu0 %v1133
      %v1135 = vpop.xlane.xlu0 %1134
      %v1136 = vmul.f32 %v1135, %v540
      %v1137 = vadd.f32 %v1136, 1e-12
      %v1138 = vrsqrt.pop %v1137
      %v1139 = vmul.f32 %v1131, %v1138
      %v1141 = vlaneseq
      %v1142 = vshrl.u32 %v1141, 7
      %v1143 = vsub.s32 0, %v1142
      %v1144 = vrot.slane %v1125, %v1143
      %v1146 = vmul.f32 %v1139, %v1144
      %v1148 = vlaneseq
      %v1149 = vshrl.u32 %v1148, 7
      %v1150 = vsub.s32 0, %v1149
      %v1151 = vrot.slane %v1126, %v1150
      %v1153 = vadd.f32 %v1146, %v1151
      %v1154 = vpack.c.bf16 %v1153, %v1153
      %vm1155 = vcmask 257024
      %1156 = vst.msk [vmem:[%s530] sm:$0xf] %vm1155, %v1154
      %p1157 = scmp.lt.s32.totalorder %s27, 1
      %s1158 = scalar_select %p1157, %s27, 1
      %s1159 = smul.addr %s1158, 4
      %s1160 = scalar_lea.vmem %s16, %s1159
      // Predicated region
      $region85: #{bert_forward.3} parent=83 // pred_check
        %p1161 = pneg %p391
      $region86: #{bert_forward.3} parent=83 // pred_check_branch
        %1163 = sbr.rel (%p1161) target = $region88
      $region87: #{bert_forward.3} parent=83 // pred_region
        _
      $region88: #{bert_forward.3} parent=83 // pred_fallthru
        _
    $region84: #{bert_forward.3} parent=5 // pred_fallthru
      _
    %p1164 = scmp.le.s32.totalorder 2, %s22
    // Predicated region
    $region89: #{bert_forward.3} parent=5 // pred_check
      %p1165 = pneg %p1164
    $region90: #{bert_forward.3} parent=5 // pred_check_branch
      %1167 = sbr.rel (%p1165) target = $region92
    $region91: #{bert_forward.3} parent=5 // pred_region
      %s1168 = ssub.s32 %s22, 2
      // Predicated region
      $region93: #{bert_forward.3} parent=91 // pred_check
        %p1169 = pneg %p397
      $region94: #{bert_forward.3} parent=91 // pred_check_branch
        %1171 = sbr.rel (%p1169) target = $region96
      $region95: #{bert_forward.3} parent=91 // pred_region
        %p1172 = scmp.lt.s32.totalorder %s28, 1
        %s1173 = scalar_select %p1172, %s28, 1
        %s1174 = smul.addr %s1173, 4
        %s1175 = scalar_lea.vmem %s16, %s1174
      $region96: #{bert_forward.3} parent=91 // pred_fallthru
        _
    $region92: #{bert_forward.3} parent=5 // pred_fallthru
      _
  $region6: #{bert_forward.3} parent=0 // loop_footer
    %s26 = sadd.s32 1, %s22
  $region7: #{bert_forward.3} parent=0 // loop_footer_branch
    %21 = sbr.rel target = $region3
  $region8: #{bert_forward.3} parent=0 // loop_exit
    _

</llo_original>
